<compile_context>
chip_gen: v6e
topology: v6e:2x2x1
jax: 0.10.0
libtpu: 0.0.40
codegen_flags: <defaults>
</compile_context>

<pallas_src>
import functools

import jax
import jax.numpy as jnp
from jax.experimental import pallas as pl
from jax.experimental.pallas import tpu as pltpu

INPUT_DIM = 28 * 28   # 784
HIDDEN_DIM = 128
OUTPUT_DIM = 10

_LANE = 128


def _round_up(n, m):
    return (n + m - 1) // m * m


def _mlp_kernel(x_ref, w1_ref, b1_ref, w2_ref, b2_ref, o_ref):
    # fc1 on the MXU with f32 accumulation, bias + ReLU on the VPU in f32,
    # fc2 on the MXU; everything fused in VMEM (single pass over x).
    x = x_ref[...]
    h = jnp.dot(x, w1_ref[...], preferred_element_type=jnp.float32) + b1_ref[...]
    h = jnp.maximum(h, 0.0)                                   # ReLU (f32)
    y = jnp.dot(h.astype(w2_ref.dtype), w2_ref[...],
                preferred_element_type=jnp.float32) + b2_ref[...]
    o_ref[...] = y.astype(o_ref.dtype)


@functools.partial(jax.jit, static_argnames=("block_m", "compute_dtype"))
def mlp_forward(x, w1, b1, w2, b2, *, block_m=512, compute_dtype=jnp.bfloat16):
    """Fused MLP forward.

    x  : (B, 784)  f32   (PyTorch nn.Linear input layout)
    w1 : (784, 128) f32  (pre-transposed: (in, out))
    b1 : (1, 128)   f32
    w2 : (128, 10)  f32  (pre-transposed)
    b2 : (1, 10)    f32
    returns (B, 10) f32
    """
    B, D = x.shape
    H = w1.shape[1]
    O = w2.shape[1]

    # --- pad to lane/sublane-friendly shapes --------------------------------
    D_pad = _round_up(D, _LANE)              # 784 -> 896 (clean K loop)
    O_pad = _round_up(O, _LANE)              # 10  -> 128 (lane-dense stores)
    block_m = min(block_m, _round_up(B, 8))  # don't over-pad tiny batches
    B_pad = _round_up(B, block_m)            # cdiv-style grid: any B works

    cd = compute_dtype
    x_p = jnp.zeros((B_pad, D_pad), cd).at[:B, :D].set(x.astype(cd))
    w1_p = jnp.zeros((D_pad, H), cd).at[:D, :].set(w1.astype(cd))
    w2_p = jnp.zeros((H, O_pad), cd).at[:, :O].set(w2.astype(cd))
    b1_p = b1.astype(jnp.float32)
    b2_p = jnp.zeros((1, O_pad), jnp.float32).at[:, :O].set(b2.astype(jnp.float32))

    grid = (B_pad // block_m,)

    out_p = pl.pallas_call(
        _mlp_kernel,
        out_shape=jax.ShapeDtypeStruct((B_pad, O_pad), jnp.float32),
        grid_spec=pltpu.PrefetchScalarGridSpec(
            num_scalar_prefetch=0,
            grid=grid,
            in_specs=[
                # streamed operand: large row tiles of x
                # (if profiling shows exposed x DMA: pipeline_mode=pl.Buffered(3))
                pl.BlockSpec((block_m, D_pad), lambda i: (i, 0)),
                # loop-invariant weights / biases, resident in VMEM
                pl.BlockSpec((D_pad, H), lambda i: (0, 0)),
                pl.BlockSpec((1, H), lambda i: (0, 0)),
                pl.BlockSpec((H, O_pad), lambda i: (0, 0)),
                pl.BlockSpec((1, O_pad), lambda i: (0, 0)),
            ],
            out_specs=pl.BlockSpec((block_m, O_pad), lambda i: (i, 0)),
        ),
        compiler_params=pltpu.CompilerParams(
            dimension_semantics=("parallel",),   # shard tiles across TCs on v7x
            vmem_limit_bytes=48 * 1024 * 1024,   # safe on v5e/v6e/v7x
        ),
    )(x_p, w1_p, b1_p, w2_p, b2_p)

    return out_p[:B, :O]


def init_params(key, input_dim, hidden_dim, output_dim, dtype=jnp.float32):
    # Deterministic init mimicking nn.Linear default: U(-1/sqrt(fan_in), 1/sqrt(fan_in)).
    k1, k2, k3, k4 = jax.random.split(key, 4)
    bound1 = 1.0 / jnp.sqrt(float(input_dim))
    bound2 = 1.0 / jnp.sqrt(float(hidden_dim))
    # Stored transposed relative to PyTorch: (in, out).
    w1 = jax.random.uniform(k1, (input_dim, hidden_dim), dtype, -bound1, bound1)
    b1 = jax.random.uniform(k2, (1, hidden_dim), dtype, -bound1, bound1)
    w2 = jax.random.uniform(k3, (hidden_dim, output_dim), dtype, -bound2, bound2)
    b2 = jax.random.uniform(k4, (1, output_dim), dtype, -bound2, bound2)
    return w1, b1, w2, b2


if __name__ == "__main__":
    key = jax.random.PRNGKey(0)
    kx, kp = jax.random.split(key)

    # Batch deliberately NOT a multiple of block_m: exercises the cdiv/padding
    # path and gives a grid of length 2 (both TensorCores used on v7x).
    batch = 640
    x = jax.random.normal(kx, (batch, INPUT_DIM), jnp.float32)
    w1, b1, w2, b2 = init_params(kp, INPUT_DIM, HIDDEN_DIM, OUTPUT_DIM)

    out = mlp_forward(x, w1, b1, w2, b2, block_m=512)
    out = jax.block_until_ready(out)

    # Sanity check against plain-JAX f32 reference (tolerance loosened for the
    # bf16 input/weight cast; accumulation is still f32).
    ref = jnp.maximum(x @ w1 + b1, 0.0) @ w2 + b2
    assert out.shape == (batch, OUTPUT_DIM)
    assert jnp.allclose(out, ref, atol=3e-2, rtol=3e-2)

    print("KERNEL_OK")
</pallas_src>

<mosaic_0001>
module attributes {stable_mosaic.version = 11 : i64} {
  func.func @_mlp_kernel(%arg0: i32, %arg1: memref<512x896xbf16, #tpu.memory_space<vmem>>, %arg2: memref<896x128xbf16, #tpu.memory_space<vmem>>, %arg3: memref<1x128xf32, #tpu.memory_space<vmem>>, %arg4: memref<128x128xbf16, #tpu.memory_space<vmem>>, %arg5: memref<1x128xf32, #tpu.memory_space<vmem>>, %arg6: memref<512x128xf32, #tpu.memory_space<vmem>>) attributes {dimension_semantics = [#tpu.dimension_semantics<parallel>], iteration_bounds = array<i64: 2>, scalar_prefetch = 0 : i64, scratch_operands = 0 : i64, tpu.core_type = #tpu.core_type<tc>, window_params = [{transform_indices = @transform_0, window_bounds = array<i64: 512, 896>}, {pipeline_mode = #tpu.pipeline_mode<synchronous>, transform_indices = @transform_1, window_bounds = array<i64: 896, 128>}, {pipeline_mode = #tpu.pipeline_mode<synchronous>, transform_indices = @transform_2, window_bounds = array<i64: 1, 128>}, {pipeline_mode = #tpu.pipeline_mode<synchronous>, transform_indices = @transform_3, window_bounds = array<i64: 128, 128>}, {pipeline_mode = #tpu.pipeline_mode<synchronous>, transform_indices = @transform_4, window_bounds = array<i64: 1, 128>}, {transform_indices = @transform_5, window_bounds = array<i64: 512, 128>}]} {
    %c0 = arith.constant 0 : index
    %c0_0 = arith.constant 0 : index
    %0 = vector.load %arg1[%c0, %c0_0] : memref<512x896xbf16, #tpu.memory_space<vmem>>, vector<512x896xbf16>
    %c0_1 = arith.constant 0 : index
    %c0_2 = arith.constant 0 : index
    %1 = vector.load %arg2[%c0_1, %c0_2] : memref<896x128xbf16, #tpu.memory_space<vmem>>, vector<896x128xbf16>
    %cst = arith.constant dense<0.000000e+00> : vector<512x128xf32>
    %2 = tpu.matmul %0, %1, %cst {dimension_numbers = #tpu.dot_dimension_numbers<[1], [0], [0], [1], [0, 0, 1, 1], [], []>} : vector<512x896xbf16>, vector<896x128xbf16>, vector<512x128xf32> -> vector<512x128xf32>
    %c0_3 = arith.constant 0 : index
    %c0_4 = arith.constant 0 : index
    %3 = vector.load %arg3[%c0_3, %c0_4] : memref<1x128xf32, #tpu.memory_space<vmem>>, vector<1x128xf32>
    %4 = vector.broadcast %3 : vector<1x128xf32> to vector<512x128xf32>
    %5 = arith.addf %2, %4 : vector<512x128xf32>
    %cst_5 = arith.constant 0.000000e+00 : f32
    %6 = vector.broadcast %cst_5 : f32 to vector<512x128xf32>
    %7 = arith.maximumf %5, %6 : vector<512x128xf32>
    %8 = arith.truncf %7 : vector<512x128xf32> to vector<512x128xbf16>
    %c0_6 = arith.constant 0 : index
    %c0_7 = arith.constant 0 : index
    %9 = vector.load %arg4[%c0_6, %c0_7] : memref<128x128xbf16, #tpu.memory_space<vmem>>, vector<128x128xbf16>
    %cst_8 = arith.constant dense<0.000000e+00> : vector<512x128xf32>
    %10 = tpu.matmul %8, %9, %cst_8 {dimension_numbers = #tpu.dot_dimension_numbers<[1], [0], [0], [1], [0, 0, 1, 1], [], []>} : vector<512x128xbf16>, vector<128x128xbf16>, vector<512x128xf32> -> vector<512x128xf32>
    %c0_9 = arith.constant 0 : index
    %c0_10 = arith.constant 0 : index
    %11 = vector.load %arg5[%c0_9, %c0_10] : memref<1x128xf32, #tpu.memory_space<vmem>>, vector<1x128xf32>
    %12 = vector.broadcast %11 : vector<1x128xf32> to vector<512x128xf32>
    %13 = arith.addf %10, %12 : vector<512x128xf32>
    %c0_11 = arith.constant 0 : index
    %c0_12 = arith.constant 0 : index
    %14 = vector.load %arg6[%c0_11, %c0_12] : memref<512x128xf32, #tpu.memory_space<vmem>>, vector<512x128xf32>
    tpu.vector_store %arg6[%c0_11, %c0_12], %13 {strides = array<i32>} : memref<512x128xf32, #tpu.memory_space<vmem>>, vector<512x128xf32>,
    return
  }
  func.func @transform_0(%arg0: i32) -> (i32, i32) {
    %c0_i32 = arith.constant 0 : i32
    %c0_i32_0 = arith.constant 0 : i32
    return %arg0, %c0_i32 : i32, i32
  }
  func.func @transform_1(%arg0: i32) -> (i32, i32) {
    %c0_i32 = arith.constant 0 : i32
    %c0_i32_0 = arith.constant 0 : i32
    %c0_i32_1 = arith.constant 0 : i32
    return %c0_i32, %c0_i32_0 : i32, i32
  }
  func.func @transform_2(%arg0: i32) -> (i32, i32) {
    %c0_i32 = arith.constant 0 : i32
    %c0_i32_0 = arith.constant 0 : i32
    %c0_i32_1 = arith.constant 0 : i32
    return %c0_i32, %c0_i32_0 : i32, i32
  }
  func.func @transform_3(%arg0: i32) -> (i32, i32) {
    %c0_i32 = arith.constant 0 : i32
    %c0_i32_0 = arith.constant 0 : i32
    %c0_i32_1 = arith.constant 0 : i32
    return %c0_i32, %c0_i32_0 : i32, i32
  }
  func.func @transform_4(%arg0: i32) -> (i32, i32) {
    %c0_i32 = arith.constant 0 : i32
    %c0_i32_0 = arith.constant 0 : i32
    %c0_i32_1 = arith.constant 0 : i32
    return %c0_i32, %c0_i32_0 : i32, i32
  }
  func.func @transform_5(%arg0: i32) -> (i32, i32) {
    %c0_i32 = arith.constant 0 : i32
    %c0_i32_0 = arith.constant 0 : i32
    return %arg0, %c0_i32 : i32, i32
  }
}

</mosaic_0001>

<llo_original>
// kernel: mlp_forward.1
$region0: #{mlp_forward.1}
  #allocation0 [shape = 'u32[]', space=smem, size = 0x4, offset = 0x4, fixed_abs, tag = 'smem constant byte address 0x4 - core index']
  #allocation1 [shape = 'u32[144,128]{1,0:T(1,128)}', space=vmem, size = 0x12000, scoped, tag = 'internal scratch']
  %s0 = inlined_call_operand.vmem [shape: bf16[1024,896], index: 0, kind: input, shape index: {}]
  %s1 = inlined_call_operand.vmem [shape: bf16[896,128], index: 1, kind: input, shape index: {}]
  %s2 = inlined_call_operand.vmem [shape: f32[1,128], index: 2, kind: input, shape index: {}]
  %s3 = inlined_call_operand.vmem [shape: bf16[128,128], index: 3, kind: input, shape index: {}]
  %s4 = inlined_call_operand.vmem [shape: f32[1,128], index: 4, kind: input, shape index: {}]
  %s5 = inlined_call_operand.vmem [shape: f32[1024,128], index: 5, kind: output, shape index: {}]
  %s6 = sld [smem:[#allocation0]]
  $region53: #{mlp_forward.1} parent=0
    _
  %s8 = ssub.s32 1, %s6
  %s9 = scalar_select 0, %s8, %s6
  loop: start=0, step=1, limit=4
  $region2: #{mlp_forward.1} parent=0 // loop_pre_header
    _
  $region3: #{mlp_forward.1} parent=0 // loop_header
    %s11 = sphi 0, %s15
    %p12 = scmp.ge.s32.totalorder %s11, 4
    %s21 = sphi 0, %s23
    %s24 = sphi 0, %s21
    %s25 = sphi 0, %s24
    %s41 = sphi 0, %s25
    %s45 = sphi 0, %s45
    %s47 = sphi 0, %s45
    %s48 = sphi 0, %s47
    %s62 = sphi 0, %s48
    %s66 = sphi 0, %s66
    %s68 = sphi 0, %s66
    %s69 = sphi 0, %s68
    %s83 = sphi 0, %s69
    %s87 = sphi 0, %s87
    %s89 = sphi 0, %s87
    %s90 = sphi 0, %s89
    %s104 = sphi 0, %s90
    %s108 = sphi 0, %s108
    %s110 = sphi 0, %s108
    %s111 = sphi 0, %s110
    %s125 = sphi 0, %s111
    %s131 = sphi 0, %s133
    %s134 = sphi 0, %s131
    %s135 = sphi 0, %s134
    %s151 = sphi 0, %s135
  $region4: #{mlp_forward.1} parent=0 // loop_header_branch
    %14 = sbr.rel (%p12) target = $region8
  $region5: #{mlp_forward.1} parent=0 // loop_body
    %s16 = ssub.s32 %s11, 1
    %s17 = ssub.s32 %s11, 2
    %s18 = sadd.s32 %s11, 1
    %s19 = ssub.s32 %s11, %s18
    %p20 = scmp.eq.s32.totalorder %s19, 0
    %s22 = sadd.s32 %s21, 1
    %s23 = scalar_select %p20, %s21, %s22
    %p26 = pneg %p20
    %p27 = scmp.eq.s32.totalorder %s11, 1
    %p28 = por %p26, %p27
    %p29 = scmp.ne.s32.totalorder %s21, %s24
    %p30 = scmp.eq.s32.totalorder %s11, 0
    %p31 = por %p29, %p30
    %p32 = scmp.ne.s32.totalorder %s21, %s24
    %p33 = scmp.eq.s32.totalorder %s16, 1
    %p34 = por %p32, %p33
    %p35 = scmp.ne.s32.totalorder %s24, %s25
    %p36 = scmp.eq.s32.totalorder %s16, 0
    %p37 = por %p35, %p36
    %p38 = scmp.ne.s32.totalorder %s24, %s25
    %p39 = scmp.eq.s32.totalorder %s17, 1
    %p40 = por %p38, %p39
    %p42 = scmp.ne.s32.totalorder %s25, %s41
    %p43 = scmp.eq.s32.totalorder %s17, 0
    %p44 = por %p42, %p43
    %s46 = sadd.s32 %s45, 1
    %p49 = scmp.eq.s32.totalorder %s11, 1
    %p50 = scmp.ne.s32.totalorder %s45, %s47
    %p51 = scmp.eq.s32.totalorder %s11, 0
    %p52 = por %p50, %p51
    %p53 = scmp.ne.s32.totalorder %s45, %s47
    %p54 = scmp.eq.s32.totalorder %s16, 1
    %p55 = por %p53, %p54
    %p56 = scmp.ne.s32.totalorder %s47, %s48
    %p57 = scmp.eq.s32.totalorder %s16, 0
    %p58 = por %p56, %p57
    %p59 = scmp.ne.s32.totalorder %s47, %s48
    %p60 = scmp.eq.s32.totalorder %s17, 1
    %p61 = por %p59, %p60
    %p63 = scmp.ne.s32.totalorder %s48, %s62
    %p64 = scmp.eq.s32.totalorder %s17, 0
    %p65 = por %p63, %p64
    %s67 = sadd.s32 %s66, 1
    %p70 = scmp.eq.s32.totalorder %s11, 1
    %p71 = scmp.ne.s32.totalorder %s66, %s68
    %p72 = scmp.eq.s32.totalorder %s11, 0
    %p73 = por %p71, %p72
    %p74 = scmp.ne.s32.totalorder %s66, %s68
    %p75 = scmp.eq.s32.totalorder %s16, 1
    %p76 = por %p74, %p75
    %p77 = scmp.ne.s32.totalorder %s68, %s69
    %p78 = scmp.eq.s32.totalorder %s16, 0
    %p79 = por %p77, %p78
    %p80 = scmp.ne.s32.totalorder %s68, %s69
    %p81 = scmp.eq.s32.totalorder %s17, 1
    %p82 = por %p80, %p81
    %p84 = scmp.ne.s32.totalorder %s69, %s83
    %p85 = scmp.eq.s32.totalorder %s17, 0
    %p86 = por %p84, %p85
    %s88 = sadd.s32 %s87, 1
    %p91 = scmp.eq.s32.totalorder %s11, 1
    %p92 = scmp.ne.s32.totalorder %s87, %s89
    %p93 = scmp.eq.s32.totalorder %s11, 0
    %p94 = por %p92, %p93
    %p95 = scmp.ne.s32.totalorder %s87, %s89
    %p96 = scmp.eq.s32.totalorder %s16, 1
    %p97 = por %p95, %p96
    %p98 = scmp.ne.s32.totalorder %s89, %s90
    %p99 = scmp.eq.s32.totalorder %s16, 0
    %p100 = por %p98, %p99
    %p101 = scmp.ne.s32.totalorder %s89, %s90
    %p102 = scmp.eq.s32.totalorder %s17, 1
    %p103 = por %p101, %p102
    %p105 = scmp.ne.s32.totalorder %s90, %s104
    %p106 = scmp.eq.s32.totalorder %s17, 0
    %p107 = por %p105, %p106
    %s109 = sadd.s32 %s108, 1
    %p112 = scmp.eq.s32.totalorder %s11, 1
    %p113 = scmp.ne.s32.totalorder %s108, %s110
    %p114 = scmp.eq.s32.totalorder %s11, 0
    %p115 = por %p113, %p114
    %p116 = scmp.ne.s32.totalorder %s108, %s110
    %p117 = scmp.eq.s32.totalorder %s16, 1
    %p118 = por %p116, %p117
    %p119 = scmp.ne.s32.totalorder %s110, %s111
    %p120 = scmp.eq.s32.totalorder %s16, 0
    %p121 = por %p119, %p120
    %p122 = scmp.ne.s32.totalorder %s110, %s111
    %p123 = scmp.eq.s32.totalorder %s17, 1
    %p124 = por %p122, %p123
    %p126 = scmp.ne.s32.totalorder %s111, %s125
    %p127 = scmp.eq.s32.totalorder %s17, 0
    %p128 = por %p126, %p127
    %s129 = ssub.s32 %s11, %s18
    %p130 = scmp.eq.s32.totalorder %s129, 0
    %s132 = sadd.s32 %s131, 1
    %s133 = scalar_select %p130, %s131, %s132
    %p136 = pneg %p130
    %p137 = scmp.eq.s32.totalorder %s11, 1
    %p138 = por %p136, %p137
    %p139 = scmp.ne.s32.totalorder %s131, %s134
    %p140 = scmp.eq.s32.totalorder %s11, 0
    %p141 = por %p139, %p140
    %p142 = scmp.ne.s32.totalorder %s131, %s134
    %p143 = scmp.eq.s32.totalorder %s16, 1
    %p144 = por %p142, %p143
    %p145 = scmp.ne.s32.totalorder %s134, %s135
    %p146 = scmp.eq.s32.totalorder %s16, 0
    %p147 = por %p145, %p146
    %p148 = scmp.ne.s32.totalorder %s134, %s135
    %p149 = scmp.eq.s32.totalorder %s17, 1
    %p150 = por %p148, %p149
    %p152 = scmp.ne.s32.totalorder %s135, %s151
    %p153 = scmp.eq.s32.totalorder %s17, 0
    %p154 = por %p152, %p153
    %p155 = scmp.le.s32.totalorder 1, %s11
    %p156 = scmp.lt.s32.totalorder %s11, 3
    %p157 = pnand %p155, %p156
    %p158 = pneg %p157
    // Predicated region
    $region9: #{mlp_forward.1} parent=5 // pred_check
      _
    $region10: #{mlp_forward.1} parent=5 // pred_check_branch
      %160 = sbr.rel (%p157) target = $region12
    $region11: #{mlp_forward.1} parent=5 // pred_region
      %s161 = ssub.s32 %s11, 1
      // Predicated region
      $region13: #{mlp_forward.1} parent=11 // pred_check
        %p162 = pneg %p58
      $region14: #{mlp_forward.1} parent=11 // pred_check_branch
        %164 = sbr.rel (%p162) target = $region16
      $region15: #{mlp_forward.1} parent=11 // pred_region
        _
      $region16: #{mlp_forward.1} parent=11 // pred_fallthru
        _
      // Predicated region
      $region17: #{mlp_forward.1} parent=11 // pred_check
        %p165 = pneg %p79
      $region18: #{mlp_forward.1} parent=11 // pred_check_branch
        %167 = sbr.rel (%p165) target = $region20
      $region19: #{mlp_forward.1} parent=11 // pred_region
        _
      $region20: #{mlp_forward.1} parent=11 // pred_fallthru
        _
      // Predicated region
      $region21: #{mlp_forward.1} parent=11 // pred_check
        %p168 = pneg %p100
      $region22: #{mlp_forward.1} parent=11 // pred_check_branch
        %170 = sbr.rel (%p168) target = $region24
      $region23: #{mlp_forward.1} parent=11 // pred_region
        _
      $region24: #{mlp_forward.1} parent=11 // pred_fallthru
        _
      // Predicated region
      $region25: #{mlp_forward.1} parent=11 // pred_check
        %p171 = pneg %p121
      $region26: #{mlp_forward.1} parent=11 // pred_check_branch
        %173 = sbr.rel (%p171) target = $region28
      $region27: #{mlp_forward.1} parent=11 // pred_region
        _
      $region28: #{mlp_forward.1} parent=11 // pred_fallthru
        _
    $region12: #{mlp_forward.1} parent=5 // pred_fallthru
      _
    %p174 = scmp.lt.s32.totalorder %s11, 2
    // Predicated region
    $region29: #{mlp_forward.1} parent=5 // pred_check
      %p175 = pneg %p174
    $region30: #{mlp_forward.1} parent=5 // pred_check_branch
      %177 = sbr.rel (%p175) target = $region32
    $region31: #{mlp_forward.1} parent=5 // pred_region
      // Predicated region
      $region33: #{mlp_forward.1} parent=31 // pred_check
        %p178 = pneg %p31
      $region34: #{mlp_forward.1} parent=31 // pred_check_branch
        %180 = sbr.rel (%p178) target = $region36
      $region35: #{mlp_forward.1} parent=31 // pred_region
        %s181 = smul.u32 64, %s11
        %p182 = scmp.lt.s32.totalorder %s181, 127
        %s183 = scalar_select %p182, %s181, 127
        %s184 = smul.addr %s183, 7
        %s185 = smul.addr %s184, 4
        %s186 = scalar_lea.vmem %s0, %s185
        %s187 = smul.u32 64, %s11
      $region36: #{mlp_forward.1} parent=31 // pred_fallthru
        _
    $region32: #{mlp_forward.1} parent=5 // pred_fallthru
      _
    %p188 = scmp.le.s32.totalorder 1, %s11
    %p189 = scmp.lt.s32.totalorder %s11, 3
    %p190 = pnand %p188, %p189
    %p191 = pneg %p190
    // Predicated region
    $region37: #{mlp_forward.1} parent=5 // pred_check
      _
    $region38: #{mlp_forward.1} parent=5 // pred_check_branch
      %193 = sbr.rel (%p190) target = $region40
    $region39: #{mlp_forward.1} parent=5 // pred_region
      %s194 = ssub.s32 %s11, 1
      %s195 = smul.u32 64, %s16
      %p196 = scmp.lt.s32.totalorder %s195, 127
      %s197 = scalar_select %p196, %s195, 127
      %s198 = smul.addr %s197, 7
      %s199 = smul.addr %s198, 4
      %s200 = scalar_lea.vmem %s0, %s199
      %p201 = pneg %p37
      %p202 = pneg %p34
      %p203 = pneg %p58
      %p204 = pneg %p55
      %p205 = pneg %p79
      %p206 = pneg %p76
      %p207 = pneg %p100
      %p208 = pneg %p97
      %p209 = pneg %p121
      %p210 = pneg %p118
      %p211 = pneg %p147
      %p212 = pneg %p144
      %s213 = smul.u32 64, %s16
      %p214 = scmp.lt.s32.totalorder %s213, 127
      %s215 = scalar_select %p214, %s213, 127
      %s216 = smul.addr %s215, 8
      %s217 = scalar_lea.vmem %s5, %s216
      %s218 = smul.u32 64, %s16
      %p219 = scmp.lt.s32.totalorder %s218, 127
      %s220 = scalar_select %p219, %s218, 127
      %s221 = smul.addr %s220, 7
      %s222 = smul.addr %s221, 4
      %s223 = scalar_lea.vmem %s0, %s222
      %s224 = smul.u32 64, %s16
      %s225 = smul.u32 64, %s16
      %p226 = scmp.lt.s32.totalorder %s225, 127
      %s227 = scalar_select %p226, %s225, 127
      %s228 = smul.addr %s227, 8
      %s229 = scalar_lea.vmem %s5, %s228
      %s230 = smul.u32 64, %s16
      %v232 = vld [vmem:[%s223] sm:$0xff]
      %v233 = vld [vmem:[%s223 + $0x8] sm:$0xff]
      %v234 = vld [vmem:[%s223 + $0x10] sm:$0xff]
      %v235 = vld [vmem:[%s223 + $0x18] sm:$0xf]
      %v236 = vld [vmem:[%s223 + $0x1c] sm:$0xff]
      %v237 = vld [vmem:[%s223 + $0x24] sm:$0xff]
      %v238 = vld [vmem:[%s223 + $0x2c] sm:$0xff]
      %v239 = vld [vmem:[%s223 + $0x34] sm:$0xf]
      %v240 = vld [vmem:[%s223 + $0x38] sm:$0xff]
      %v241 = vld [vmem:[%s223 + $0x40] sm:$0xff]
      %v242 = vld [vmem:[%s223 + $0x48] sm:$0xff]
      %v243 = vld [vmem:[%s223 + $0x50] sm:$0xf]
      %v244 = vld [vmem:[%s223 + $0x54] sm:$0xff]
      %v245 = vld [vmem:[%s223 + $0x5c] sm:$0xff]
      %v246 = vld [vmem:[%s223 + $0x64] sm:$0xff]
      %v247 = vld [vmem:[%s223 + $0x6c] sm:$0xf]
      %v248 = vld [vmem:[%s223 + $0x70] sm:$0xff]
      %v249 = vld [vmem:[%s223 + $0x78] sm:$0xff]
      %v250 = vld [vmem:[%s223 + $0x80] sm:$0xff]
      %v251 = vld [vmem:[%s223 + $0x88] sm:$0xf]
      %v252 = vld [vmem:[%s223 + $0x8c] sm:$0xff]
      %v253 = vld [vmem:[%s223 + $0x94] sm:$0xff]
      %v254 = vld [vmem:[%s223 + $0x9c] sm:$0xff]
      %v255 = vld [vmem:[%s223 + $0xa4] sm:$0xf]
      %v256 = vld [vmem:[%s223 + $0xa8] sm:$0xff]
      %v257 = vld [vmem:[%s223 + $0xb0] sm:$0xff]
      %v258 = vld [vmem:[%s223 + $0xb8] sm:$0xff]
      %v259 = vld [vmem:[%s223 + $0xc0] sm:$0xf]
      %v260 = vld [vmem:[%s223 + $0xc4] sm:$0xff]
      %v261 = vld [vmem:[%s223 + $0xcc] sm:$0xff]
      %v262 = vld [vmem:[%s223 + $0xd4] sm:$0xff]
      %v263 = vld [vmem:[%s223 + $0xdc] sm:$0xf]
      %v264 = vld [vmem:[%s223 + $0xe0] sm:$0xff]
      %v265 = vld [vmem:[%s223 + $0xe8] sm:$0xff]
      %v266 = vld [vmem:[%s223 + $0xf0] sm:$0xff]
      %v267 = vld [vmem:[%s223 + $0xf8] sm:$0xf]
      %v268 = vld [vmem:[%s223 + $0xfc] sm:$0xff]
      %v269 = vld [vmem:[%s223 + $0x104] sm:$0xff]
      %v270 = vld [vmem:[%s223 + $0x10c] sm:$0xff]
      %v271 = vld [vmem:[%s223 + $0x114] sm:$0xf]
      %v272 = vld [vmem:[%s223 + $0x118] sm:$0xff]
      %v273 = vld [vmem:[%s223 + $0x120] sm:$0xff]
      %v274 = vld [vmem:[%s223 + $0x128] sm:$0xff]
      %v275 = vld [vmem:[%s223 + $0x130] sm:$0xf]
      %v276 = vld [vmem:[%s223 + $0x134] sm:$0xff]
      %v277 = vld [vmem:[%s223 + $0x13c] sm:$0xff]
      %v278 = vld [vmem:[%s223 + $0x144] sm:$0xff]
      %v279 = vld [vmem:[%s223 + $0x14c] sm:$0xf]
      %v280 = vld [vmem:[%s223 + $0x150] sm:$0xff]
      %v281 = vld [vmem:[%s223 + $0x158] sm:$0xff]
      %v282 = vld [vmem:[%s223 + $0x160] sm:$0xff]
      %v283 = vld [vmem:[%s223 + $0x168] sm:$0xf]
      %v284 = vld [vmem:[%s223 + $0x16c] sm:$0xff]
      %v285 = vld [vmem:[%s223 + $0x174] sm:$0xff]
      %v286 = vld [vmem:[%s223 + $0x17c] sm:$0xff]
      %v287 = vld [vmem:[%s223 + $0x184] sm:$0xf]
      %v288 = vld [vmem:[%s223 + $0x188] sm:$0xff]
      %v289 = vld [vmem:[%s223 + $0x190] sm:$0xff]
      %v290 = vld [vmem:[%s223 + $0x198] sm:$0xff]
      %v291 = vld [vmem:[%s223 + $0x1a0] sm:$0xf]
      %v292 = vld [vmem:[%s223 + $0x1a4] sm:$0xff]
      %v293 = vld [vmem:[%s223 + $0x1ac] sm:$0xff]
      %v294 = vld [vmem:[%s223 + $0x1b4] sm:$0xff]
      %v295 = vld [vmem:[%s223 + $0x1bc] sm:$0xf]
      %v296 = vld [vmem:[%s223 + $0x1c0] sm:$0xff]
      %v297 = vld [vmem:[%s223 + $0x1c8] sm:$0xff]
      %v298 = vld [vmem:[%s223 + $0x1d0] sm:$0xff]
      %v299 = vld [vmem:[%s223 + $0x1d8] sm:$0xf]
      %v300 = vld [vmem:[%s223 + $0x1dc] sm:$0xff]
      %v301 = vld [vmem:[%s223 + $0x1e4] sm:$0xff]
      %v302 = vld [vmem:[%s223 + $0x1ec] sm:$0xff]
      %v303 = vld [vmem:[%s223 + $0x1f4] sm:$0xf]
      %v304 = vld [vmem:[%s223 + $0x1f8] sm:$0xff]
      %v305 = vld [vmem:[%s223 + $0x200] sm:$0xff]
      %v306 = vld [vmem:[%s223 + $0x208] sm:$0xff]
      %v307 = vld [vmem:[%s223 + $0x210] sm:$0xf]
      %v308 = vld [vmem:[%s223 + $0x214] sm:$0xff]
      %v309 = vld [vmem:[%s223 + $0x21c] sm:$0xff]
      %v310 = vld [vmem:[%s223 + $0x224] sm:$0xff]
      %v311 = vld [vmem:[%s223 + $0x22c] sm:$0xf]
      %v312 = vld [vmem:[%s223 + $0x230] sm:$0xff]
      %v313 = vld [vmem:[%s223 + $0x238] sm:$0xff]
      %v314 = vld [vmem:[%s223 + $0x240] sm:$0xff]
      %v315 = vld [vmem:[%s223 + $0x248] sm:$0xf]
      %v316 = vld [vmem:[%s223 + $0x24c] sm:$0xff]
      %v317 = vld [vmem:[%s223 + $0x254] sm:$0xff]
      %v318 = vld [vmem:[%s223 + $0x25c] sm:$0xff]
      %v319 = vld [vmem:[%s223 + $0x264] sm:$0xf]
      %v320 = vld [vmem:[%s223 + $0x268] sm:$0xff]
      %v321 = vld [vmem:[%s223 + $0x270] sm:$0xff]
      %v322 = vld [vmem:[%s223 + $0x278] sm:$0xff]
      %v323 = vld [vmem:[%s223 + $0x280] sm:$0xf]
      %v324 = vld [vmem:[%s223 + $0x284] sm:$0xff]
      %v325 = vld [vmem:[%s223 + $0x28c] sm:$0xff]
      %v326 = vld [vmem:[%s223 + $0x294] sm:$0xff]
      %v327 = vld [vmem:[%s223 + $0x29c] sm:$0xf]
      %v328 = vld [vmem:[%s223 + $0x2a0] sm:$0xff]
      %v329 = vld [vmem:[%s223 + $0x2a8] sm:$0xff]
      %v330 = vld [vmem:[%s223 + $0x2b0] sm:$0xff]
      %v331 = vld [vmem:[%s223 + $0x2b8] sm:$0xf]
      %v332 = vld [vmem:[%s223 + $0x2bc] sm:$0xff]
      %v333 = vld [vmem:[%s223 + $0x2c4] sm:$0xff]
      %v334 = vld [vmem:[%s223 + $0x2cc] sm:$0xff]
      %v335 = vld [vmem:[%s223 + $0x2d4] sm:$0xf]
      %v336 = vld [vmem:[%s223 + $0x2d8] sm:$0xff]
      %v337 = vld [vmem:[%s223 + $0x2e0] sm:$0xff]
      %v338 = vld [vmem:[%s223 + $0x2e8] sm:$0xff]
      %v339 = vld [vmem:[%s223 + $0x2f0] sm:$0xf]
      %v340 = vld [vmem:[%s223 + $0x2f4] sm:$0xff]
      %v341 = vld [vmem:[%s223 + $0x2fc] sm:$0xff]
      %v342 = vld [vmem:[%s223 + $0x304] sm:$0xff]
      %v343 = vld [vmem:[%s223 + $0x30c] sm:$0xf]
      %v344 = vld [vmem:[%s223 + $0x310] sm:$0xff]
      %v345 = vld [vmem:[%s223 + $0x318] sm:$0xff]
      %v346 = vld [vmem:[%s223 + $0x320] sm:$0xff]
      %v347 = vld [vmem:[%s223 + $0x328] sm:$0xf]
      %v348 = vld [vmem:[%s223 + $0x32c] sm:$0xff]
      %v349 = vld [vmem:[%s223 + $0x334] sm:$0xff]
      %v350 = vld [vmem:[%s223 + $0x33c] sm:$0xff]
      %v351 = vld [vmem:[%s223 + $0x344] sm:$0xf]
      %v352 = vld [vmem:[%s223 + $0x348] sm:$0xff]
      %v353 = vld [vmem:[%s223 + $0x350] sm:$0xff]
      %v354 = vld [vmem:[%s223 + $0x358] sm:$0xff]
      %v355 = vld [vmem:[%s223 + $0x360] sm:$0xf]
      %v356 = vld [vmem:[%s223 + $0x364] sm:$0xff]
      %v357 = vld [vmem:[%s223 + $0x36c] sm:$0xff]
      %v358 = vld [vmem:[%s223 + $0x374] sm:$0xff]
      %v359 = vld [vmem:[%s223 + $0x37c] sm:$0xf]
      %v360 = vld [vmem:[%s223 + $0x380] sm:$0xff]
      %v361 = vld [vmem:[%s223 + $0x388] sm:$0xff]
      %v362 = vld [vmem:[%s223 + $0x390] sm:$0xff]
      %v363 = vld [vmem:[%s223 + $0x398] sm:$0xf]
      %v364 = vld [vmem:[%s223 + $0x39c] sm:$0xff]
      %v365 = vld [vmem:[%s223 + $0x3a4] sm:$0xff]
      %v366 = vld [vmem:[%s223 + $0x3ac] sm:$0xff]
      %v367 = vld [vmem:[%s223 + $0x3b4] sm:$0xf]
      %v368 = vld [vmem:[%s223 + $0x3b8] sm:$0xff]
      %v369 = vld [vmem:[%s223 + $0x3c0] sm:$0xff]
      %v370 = vld [vmem:[%s223 + $0x3c8] sm:$0xff]
      %v371 = vld [vmem:[%s223 + $0x3d0] sm:$0xf]
      %v372 = vld [vmem:[%s223 + $0x3d4] sm:$0xff]
      %v373 = vld [vmem:[%s223 + $0x3dc] sm:$0xff]
      %v374 = vld [vmem:[%s223 + $0x3e4] sm:$0xff]
      %v375 = vld [vmem:[%s223 + $0x3ec] sm:$0xf]
      %v376 = vld [vmem:[%s223 + $0x3f0] sm:$0xff]
      %v377 = vld [vmem:[%s223 + $0x3f8] sm:$0xff]
      %v378 = vld [vmem:[%s223 + $0x400] sm:$0xff]
      %v379 = vld [vmem:[%s223 + $0x408] sm:$0xf]
      %v380 = vld [vmem:[%s223 + $0x40c] sm:$0xff]
      %v381 = vld [vmem:[%s223 + $0x414] sm:$0xff]
      %v382 = vld [vmem:[%s223 + $0x41c] sm:$0xff]
      %v383 = vld [vmem:[%s223 + $0x424] sm:$0xf]
      %v384 = vld [vmem:[%s223 + $0x428] sm:$0xff]
      %v385 = vld [vmem:[%s223 + $0x430] sm:$0xff]
      %v386 = vld [vmem:[%s223 + $0x438] sm:$0xff]
      %v387 = vld [vmem:[%s223 + $0x440] sm:$0xf]
      %v388 = vld [vmem:[%s223 + $0x444] sm:$0xff]
      %v389 = vld [vmem:[%s223 + $0x44c] sm:$0xff]
      %v390 = vld [vmem:[%s223 + $0x454] sm:$0xff]
      %v391 = vld [vmem:[%s223 + $0x45c] sm:$0xf]
      %v392 = vld [vmem:[%s223 + $0x460] sm:$0xff]
      %v393 = vld [vmem:[%s223 + $0x468] sm:$0xff]
      %v394 = vld [vmem:[%s223 + $0x470] sm:$0xff]
      %v395 = vld [vmem:[%s223 + $0x478] sm:$0xf]
      %v396 = vld [vmem:[%s223 + $0x47c] sm:$0xff]
      %v397 = vld [vmem:[%s223 + $0x484] sm:$0xff]
      %v398 = vld [vmem:[%s223 + $0x48c] sm:$0xff]
      %v399 = vld [vmem:[%s223 + $0x494] sm:$0xf]
      %v400 = vld [vmem:[%s223 + $0x498] sm:$0xff]
      %v401 = vld [vmem:[%s223 + $0x4a0] sm:$0xff]
      %v402 = vld [vmem:[%s223 + $0x4a8] sm:$0xff]
      %v403 = vld [vmem:[%s223 + $0x4b0] sm:$0xf]
      %v404 = vld [vmem:[%s223 + $0x4b4] sm:$0xff]
      %v405 = vld [vmem:[%s223 + $0x4bc] sm:$0xff]
      %v406 = vld [vmem:[%s223 + $0x4c4] sm:$0xff]
      %v407 = vld [vmem:[%s223 + $0x4cc] sm:$0xf]
      %v408 = vld [vmem:[%s223 + $0x4d0] sm:$0xff]
      %v409 = vld [vmem:[%s223 + $0x4d8] sm:$0xff]
      %v410 = vld [vmem:[%s223 + $0x4e0] sm:$0xff]
      %v411 = vld [vmem:[%s223 + $0x4e8] sm:$0xf]
      %v412 = vld [vmem:[%s223 + $0x4ec] sm:$0xff]
      %v413 = vld [vmem:[%s223 + $0x4f4] sm:$0xff]
      %v414 = vld [vmem:[%s223 + $0x4fc] sm:$0xff]
      %v415 = vld [vmem:[%s223 + $0x504] sm:$0xf]
      %v416 = vld [vmem:[%s223 + $0x508] sm:$0xff]
      %v417 = vld [vmem:[%s223 + $0x510] sm:$0xff]
      %v418 = vld [vmem:[%s223 + $0x518] sm:$0xff]
      %v419 = vld [vmem:[%s223 + $0x520] sm:$0xf]
      %v420 = vld [vmem:[%s223 + $0x524] sm:$0xff]
      %v421 = vld [vmem:[%s223 + $0x52c] sm:$0xff]
      %v422 = vld [vmem:[%s223 + $0x534] sm:$0xff]
      %v423 = vld [vmem:[%s223 + $0x53c] sm:$0xf]
      %v424 = vld [vmem:[%s223 + $0x540] sm:$0xff]
      %v425 = vld [vmem:[%s223 + $0x548] sm:$0xff]
      %v426 = vld [vmem:[%s223 + $0x550] sm:$0xff]
      %v427 = vld [vmem:[%s223 + $0x558] sm:$0xf]
      %v428 = vld [vmem:[%s223 + $0x55c] sm:$0xff]
      %v429 = vld [vmem:[%s223 + $0x564] sm:$0xff]
      %v430 = vld [vmem:[%s223 + $0x56c] sm:$0xff]
      %v431 = vld [vmem:[%s223 + $0x574] sm:$0xf]
      %v432 = vld [vmem:[%s223 + $0x578] sm:$0xff]
      %v433 = vld [vmem:[%s223 + $0x580] sm:$0xff]
      %v434 = vld [vmem:[%s223 + $0x588] sm:$0xff]
      %v435 = vld [vmem:[%s223 + $0x590] sm:$0xf]
      %v436 = vld [vmem:[%s223 + $0x594] sm:$0xff]
      %v437 = vld [vmem:[%s223 + $0x59c] sm:$0xff]
      %v438 = vld [vmem:[%s223 + $0x5a4] sm:$0xff]
      %v439 = vld [vmem:[%s223 + $0x5ac] sm:$0xf]
      %v440 = vld [vmem:[%s223 + $0x5b0] sm:$0xff]
      %v441 = vld [vmem:[%s223 + $0x5b8] sm:$0xff]
      %v442 = vld [vmem:[%s223 + $0x5c0] sm:$0xff]
      %v443 = vld [vmem:[%s223 + $0x5c8] sm:$0xf]
      %v444 = vld [vmem:[%s223 + $0x5cc] sm:$0xff]
      %v445 = vld [vmem:[%s223 + $0x5d4] sm:$0xff]
      %v446 = vld [vmem:[%s223 + $0x5dc] sm:$0xff]
      %v447 = vld [vmem:[%s223 + $0x5e4] sm:$0xf]
      %v448 = vld [vmem:[%s223 + $0x5e8] sm:$0xff]
      %v449 = vld [vmem:[%s223 + $0x5f0] sm:$0xff]
      %v450 = vld [vmem:[%s223 + $0x5f8] sm:$0xff]
      %v451 = vld [vmem:[%s223 + $0x600] sm:$0xf]
      %v452 = vld [vmem:[%s223 + $0x604] sm:$0xff]
      %v453 = vld [vmem:[%s223 + $0x60c] sm:$0xff]
      %v454 = vld [vmem:[%s223 + $0x614] sm:$0xff]
      %v455 = vld [vmem:[%s223 + $0x61c] sm:$0xf]
      %v456 = vld [vmem:[%s223 + $0x620] sm:$0xff]
      %v457 = vld [vmem:[%s223 + $0x628] sm:$0xff]
      %v458 = vld [vmem:[%s223 + $0x630] sm:$0xff]
      %v459 = vld [vmem:[%s223 + $0x638] sm:$0xf]
      %v460 = vld [vmem:[%s223 + $0x63c] sm:$0xff]
      %v461 = vld [vmem:[%s223 + $0x644] sm:$0xff]
      %v462 = vld [vmem:[%s223 + $0x64c] sm:$0xff]
      %v463 = vld [vmem:[%s223 + $0x654] sm:$0xf]
      %v464 = vld [vmem:[%s223 + $0x658] sm:$0xff]
      %v465 = vld [vmem:[%s223 + $0x660] sm:$0xff]
      %v466 = vld [vmem:[%s223 + $0x668] sm:$0xff]
      %v467 = vld [vmem:[%s223 + $0x670] sm:$0xf]
      %v468 = vld [vmem:[%s223 + $0x674] sm:$0xff]
      %v469 = vld [vmem:[%s223 + $0x67c] sm:$0xff]
      %v470 = vld [vmem:[%s223 + $0x684] sm:$0xff]
      %v471 = vld [vmem:[%s223 + $0x68c] sm:$0xf]
      %v472 = vld [vmem:[%s223 + $0x690] sm:$0xff]
      %v473 = vld [vmem:[%s223 + $0x698] sm:$0xff]
      %v474 = vld [vmem:[%s223 + $0x6a0] sm:$0xff]
      %v475 = vld [vmem:[%s223 + $0x6a8] sm:$0xf]
      %v476 = vld [vmem:[%s223 + $0x6ac] sm:$0xff]
      %v477 = vld [vmem:[%s223 + $0x6b4] sm:$0xff]
      %v478 = vld [vmem:[%s223 + $0x6bc] sm:$0xff]
      %v479 = vld [vmem:[%s223 + $0x6c4] sm:$0xf]
      %v480 = vld [vmem:[%s223 + $0x6c8] sm:$0xff]
      %v481 = vld [vmem:[%s223 + $0x6d0] sm:$0xff]
      %v482 = vld [vmem:[%s223 + $0x6d8] sm:$0xff]
      %v483 = vld [vmem:[%s223 + $0x6e0] sm:$0xf]
      %v484 = vld [vmem:[%s223 + $0x6e4] sm:$0xff]
      %v485 = vld [vmem:[%s223 + $0x6ec] sm:$0xff]
      %v486 = vld [vmem:[%s223 + $0x6f4] sm:$0xff]
      %v487 = vld [vmem:[%s223 + $0x6fc] sm:$0xf]
      %v488 = vld [vmem:[%s1] sm:$0xf]
      %v489 = vld [vmem:[%s1 + $0x4] sm:$0xf]
      %v490 = vld [vmem:[%s1 + $0x8] sm:$0xf]
      %v491 = vld [vmem:[%s1 + $0xc] sm:$0xf]
      %v492 = vld [vmem:[%s1 + $0x10] sm:$0xf]
      %v493 = vld [vmem:[%s1 + $0x14] sm:$0xf]
      %v494 = vld [vmem:[%s1 + $0x18] sm:$0xf]
      %v495 = vld [vmem:[%s1 + $0x1c] sm:$0xf]
      %v496 = vld [vmem:[%s1 + $0x20] sm:$0xf]
      %v497 = vld [vmem:[%s1 + $0x24] sm:$0xf]
      %v498 = vld [vmem:[%s1 + $0x28] sm:$0xf]
      %v499 = vld [vmem:[%s1 + $0x2c] sm:$0xf]
      %v500 = vld [vmem:[%s1 + $0x30] sm:$0xf]
      %v501 = vld [vmem:[%s1 + $0x34] sm:$0xf]
      %v502 = vld [vmem:[%s1 + $0x38] sm:$0xf]
      %v503 = vld [vmem:[%s1 + $0x3c] sm:$0xf]
      %v504 = vld [vmem:[%s1 + $0x40] sm:$0xf]
      %v505 = vld [vmem:[%s1 + $0x44] sm:$0xf]
      %v506 = vld [vmem:[%s1 + $0x48] sm:$0xf]
      %v507 = vld [vmem:[%s1 + $0x4c] sm:$0xf]
      %v508 = vld [vmem:[%s1 + $0x50] sm:$0xf]
      %v509 = vld [vmem:[%s1 + $0x54] sm:$0xf]
      %v510 = vld [vmem:[%s1 + $0x58] sm:$0xf]
      %v511 = vld [vmem:[%s1 + $0x5c] sm:$0xf]
      %v512 = vld [vmem:[%s1 + $0x60] sm:$0xf]
      %v513 = vld [vmem:[%s1 + $0x64] sm:$0xf]
      %v514 = vld [vmem:[%s1 + $0x68] sm:$0xf]
      %v515 = vld [vmem:[%s1 + $0x6c] sm:$0xf]
      %v516 = vld [vmem:[%s1 + $0x70] sm:$0xf]
      %v517 = vld [vmem:[%s1 + $0x74] sm:$0xf]
      %v518 = vld [vmem:[%s1 + $0x78] sm:$0xf]
      %v519 = vld [vmem:[%s1 + $0x7c] sm:$0xf]
      %v520 = vld [vmem:[%s1 + $0x80] sm:$0xf]
      %v521 = vld [vmem:[%s1 + $0x84] sm:$0xf]
      %v522 = vld [vmem:[%s1 + $0x88] sm:$0xf]
      %v523 = vld [vmem:[%s1 + $0x8c] sm:$0xf]
      %v524 = vld [vmem:[%s1 + $0x90] sm:$0xf]
      %v525 = vld [vmem:[%s1 + $0x94] sm:$0xf]
      %v526 = vld [vmem:[%s1 + $0x98] sm:$0xf]
      %v527 = vld [vmem:[%s1 + $0x9c] sm:$0xf]
      %v528 = vld [vmem:[%s1 + $0xa0] sm:$0xf]
      %v529 = vld [vmem:[%s1 + $0xa4] sm:$0xf]
      %v530 = vld [vmem:[%s1 + $0xa8] sm:$0xf]
      %v531 = vld [vmem:[%s1 + $0xac] sm:$0xf]
      %v532 = vld [vmem:[%s1 + $0xb0] sm:$0xf]
      %v533 = vld [vmem:[%s1 + $0xb4] sm:$0xf]
      %v534 = vld [vmem:[%s1 + $0xb8] sm:$0xf]
      %v535 = vld [vmem:[%s1 + $0xbc] sm:$0xf]
      %v536 = vld [vmem:[%s1 + $0xc0] sm:$0xf]
      %v537 = vld [vmem:[%s1 + $0xc4] sm:$0xf]
      %v538 = vld [vmem:[%s1 + $0xc8] sm:$0xf]
      %v539 = vld [vmem:[%s1 + $0xcc] sm:$0xf]
      %v540 = vld [vmem:[%s1 + $0xd0] sm:$0xf]
      %v541 = vld [vmem:[%s1 + $0xd4] sm:$0xf]
      %v542 = vld [vmem:[%s1 + $0xd8] sm:$0xf]
      %v543 = vld [vmem:[%s1 + $0xdc] sm:$0xf]
      %v544 = vld [vmem:[%s1 + $0xe0] sm:$0xf]
      %v545 = vld [vmem:[%s1 + $0xe4] sm:$0xf]
      %v546 = vld [vmem:[%s1 + $0xe8] sm:$0xf]
      %v547 = vld [vmem:[%s1 + $0xec] sm:$0xf]
      %v548 = vld [vmem:[%s1 + $0xf0] sm:$0xf]
      %v549 = vld [vmem:[%s1 + $0xf4] sm:$0xf]
      %v550 = vld [vmem:[%s1 + $0xf8] sm:$0xf]
      %v551 = vld [vmem:[%s1 + $0xfc] sm:$0xf]
      %v552 = vld [vmem:[%s1 + $0x100] sm:$0xf]
      %v553 = vld [vmem:[%s1 + $0x104] sm:$0xf]
      %v554 = vld [vmem:[%s1 + $0x108] sm:$0xf]
      %v555 = vld [vmem:[%s1 + $0x10c] sm:$0xf]
      %v556 = vld [vmem:[%s1 + $0x110] sm:$0xf]
      %v557 = vld [vmem:[%s1 + $0x114] sm:$0xf]
      %v558 = vld [vmem:[%s1 + $0x118] sm:$0xf]
      %v559 = vld [vmem:[%s1 + $0x11c] sm:$0xf]
      %v560 = vld [vmem:[%s1 + $0x120] sm:$0xf]
      %v561 = vld [vmem:[%s1 + $0x124] sm:$0xf]
      %v562 = vld [vmem:[%s1 + $0x128] sm:$0xf]
      %v563 = vld [vmem:[%s1 + $0x12c] sm:$0xf]
      %v564 = vld [vmem:[%s1 + $0x130] sm:$0xf]
      %v565 = vld [vmem:[%s1 + $0x134] sm:$0xf]
      %v566 = vld [vmem:[%s1 + $0x138] sm:$0xf]
      %v567 = vld [vmem:[%s1 + $0x13c] sm:$0xf]
      %v568 = vld [vmem:[%s1 + $0x140] sm:$0xf]
      %v569 = vld [vmem:[%s1 + $0x144] sm:$0xf]
      %v570 = vld [vmem:[%s1 + $0x148] sm:$0xf]
      %v571 = vld [vmem:[%s1 + $0x14c] sm:$0xf]
      %v572 = vld [vmem:[%s1 + $0x150] sm:$0xf]
      %v573 = vld [vmem:[%s1 + $0x154] sm:$0xf]
      %v574 = vld [vmem:[%s1 + $0x158] sm:$0xf]
      %v575 = vld [vmem:[%s1 + $0x15c] sm:$0xf]
      %v576 = vld [vmem:[%s1 + $0x160] sm:$0xf]
      %v577 = vld [vmem:[%s1 + $0x164] sm:$0xf]
      %v578 = vld [vmem:[%s1 + $0x168] sm:$0xf]
      %v579 = vld [vmem:[%s1 + $0x16c] sm:$0xf]
      %v580 = vld [vmem:[%s1 + $0x170] sm:$0xf]
      %v581 = vld [vmem:[%s1 + $0x174] sm:$0xf]
      %v582 = vld [vmem:[%s1 + $0x178] sm:$0xf]
      %v583 = vld [vmem:[%s1 + $0x17c] sm:$0xf]
      %v584 = vld [vmem:[%s1 + $0x180] sm:$0xf]
      %v585 = vld [vmem:[%s1 + $0x184] sm:$0xf]
      %v586 = vld [vmem:[%s1 + $0x188] sm:$0xf]
      %v587 = vld [vmem:[%s1 + $0x18c] sm:$0xf]
      %v588 = vld [vmem:[%s1 + $0x190] sm:$0xf]
      %v589 = vld [vmem:[%s1 + $0x194] sm:$0xf]
      %v590 = vld [vmem:[%s1 + $0x198] sm:$0xf]
      %v591 = vld [vmem:[%s1 + $0x19c] sm:$0xf]
      %v592 = vld [vmem:[%s1 + $0x1a0] sm:$0xf]
      %v593 = vld [vmem:[%s1 + $0x1a4] sm:$0xf]
      %v594 = vld [vmem:[%s1 + $0x1a8] sm:$0xf]
      %v595 = vld [vmem:[%s1 + $0x1ac] sm:$0xf]
      %v596 = vld [vmem:[%s1 + $0x1b0] sm:$0xf]
      %v597 = vld [vmem:[%s1 + $0x1b4] sm:$0xf]
      %v598 = vld [vmem:[%s1 + $0x1b8] sm:$0xf]
      %v599 = vld [vmem:[%s1 + $0x1bc] sm:$0xf]
      %v600 = vld [vmem:[%s2] sm:$0x1]
      %v602 = vlaneseq
      %v603 = vshrl.u32 %v602, 7
      %v604 = vsub.s32 0, %v603
      %v605 = vrot.slane %v600, %v604
      %v863 = vunpack.c.l.b16 %v232
      %v864 = vunpack.c.h.b16 %v232
      %v865 = vunpack.c.l.b16 %v233
      %v866 = vunpack.c.h.b16 %v233
      %v867 = vunpack.c.l.b16 %v234
      %v868 = vunpack.c.h.b16 %v234
      %v869 = vunpack.c.l.b16 %v235
      %v870 = vunpack.c.l.b16 %v236
      %v871 = vunpack.c.h.b16 %v236
      %v872 = vunpack.c.l.b16 %v237
      %v873 = vunpack.c.h.b16 %v237
      %v874 = vunpack.c.l.b16 %v238
      %v875 = vunpack.c.h.b16 %v238
      %v876 = vunpack.c.l.b16 %v239
      %v877 = vunpack.c.l.b16 %v240
      %v878 = vunpack.c.h.b16 %v240
      %v879 = vunpack.c.l.b16 %v241
      %v880 = vunpack.c.h.b16 %v241
      %v881 = vunpack.c.l.b16 %v242
      %v882 = vunpack.c.h.b16 %v242
      %v883 = vunpack.c.l.b16 %v243
      %v884 = vunpack.c.l.b16 %v244
      %v885 = vunpack.c.h.b16 %v244
      %v886 = vunpack.c.l.b16 %v245
      %v887 = vunpack.c.h.b16 %v245
      %v888 = vunpack.c.l.b16 %v246
      %v889 = vunpack.c.h.b16 %v246
      %v890 = vunpack.c.l.b16 %v247
      %v891 = vunpack.c.l.b16 %v248
      %v892 = vunpack.c.h.b16 %v248
      %v893 = vunpack.c.l.b16 %v249
      %v894 = vunpack.c.h.b16 %v249
      %v895 = vunpack.c.l.b16 %v250
      %v896 = vunpack.c.h.b16 %v250
      %v897 = vunpack.c.l.b16 %v251
      %v898 = vunpack.c.l.b16 %v252
      %v899 = vunpack.c.h.b16 %v252
      %v900 = vunpack.c.l.b16 %v253
      %v901 = vunpack.c.h.b16 %v253
      %v902 = vunpack.c.l.b16 %v254
      %v903 = vunpack.c.h.b16 %v254
      %v904 = vunpack.c.l.b16 %v255
      %v905 = vunpack.c.l.b16 %v256
      %v906 = vunpack.c.h.b16 %v256
      %v907 = vunpack.c.l.b16 %v257
      %v908 = vunpack.c.h.b16 %v257
      %v909 = vunpack.c.l.b16 %v258
      %v910 = vunpack.c.h.b16 %v258
      %v911 = vunpack.c.l.b16 %v259
      %v912 = vunpack.c.l.b16 %v260
      %v913 = vunpack.c.h.b16 %v260
      %v914 = vunpack.c.l.b16 %v261
      %v915 = vunpack.c.h.b16 %v261
      %v916 = vunpack.c.l.b16 %v262
      %v917 = vunpack.c.h.b16 %v262
      %v918 = vunpack.c.l.b16 %v263
      %v919 = vunpack.c.l.b16 %v264
      %v920 = vunpack.c.h.b16 %v264
      %v921 = vunpack.c.l.b16 %v265
      %v922 = vunpack.c.h.b16 %v265
      %v923 = vunpack.c.l.b16 %v266
      %v924 = vunpack.c.h.b16 %v266
      %v925 = vunpack.c.l.b16 %v267
      %v926 = vunpack.c.l.b16 %v268
      %v927 = vunpack.c.h.b16 %v268
      %v928 = vunpack.c.l.b16 %v269
      %v929 = vunpack.c.h.b16 %v269
      %v930 = vunpack.c.l.b16 %v270
      %v931 = vunpack.c.h.b16 %v270
      %v932 = vunpack.c.l.b16 %v271
      %v933 = vunpack.c.l.b16 %v272
      %v934 = vunpack.c.h.b16 %v272
      %v935 = vunpack.c.l.b16 %v273
      %v936 = vunpack.c.h.b16 %v273
      %v937 = vunpack.c.l.b16 %v274
      %v938 = vunpack.c.h.b16 %v274
      %v939 = vunpack.c.l.b16 %v275
      %v940 = vunpack.c.l.b16 %v276
      %v941 = vunpack.c.h.b16 %v276
      %v942 = vunpack.c.l.b16 %v277
      %v943 = vunpack.c.h.b16 %v277
      %v944 = vunpack.c.l.b16 %v278
      %v945 = vunpack.c.h.b16 %v278
      %v946 = vunpack.c.l.b16 %v279
      %v947 = vunpack.c.l.b16 %v280
      %v948 = vunpack.c.h.b16 %v280
      %v949 = vunpack.c.l.b16 %v281
      %v950 = vunpack.c.h.b16 %v281
      %v951 = vunpack.c.l.b16 %v282
      %v952 = vunpack.c.h.b16 %v282
      %v953 = vunpack.c.l.b16 %v283
      %v954 = vunpack.c.l.b16 %v284
      %v955 = vunpack.c.h.b16 %v284
      %v956 = vunpack.c.l.b16 %v285
      %v957 = vunpack.c.h.b16 %v285
      %v958 = vunpack.c.l.b16 %v286
      %v959 = vunpack.c.h.b16 %v286
      %v960 = vunpack.c.l.b16 %v287
      %v961 = vunpack.c.l.b16 %v288
      %v962 = vunpack.c.h.b16 %v288
      %v963 = vunpack.c.l.b16 %v289
      %v964 = vunpack.c.h.b16 %v289
      %v965 = vunpack.c.l.b16 %v290
      %v966 = vunpack.c.h.b16 %v290
      %v967 = vunpack.c.l.b16 %v291
      %v968 = vunpack.c.l.b16 %v292
      %v969 = vunpack.c.h.b16 %v292
      %v970 = vunpack.c.l.b16 %v293
      %v971 = vunpack.c.h.b16 %v293
      %v972 = vunpack.c.l.b16 %v294
      %v973 = vunpack.c.h.b16 %v294
      %v974 = vunpack.c.l.b16 %v295
      %v975 = vunpack.c.l.b16 %v296
      %v976 = vunpack.c.h.b16 %v296
      %v977 = vunpack.c.l.b16 %v297
      %v978 = vunpack.c.h.b16 %v297
      %v979 = vunpack.c.l.b16 %v298
      %v980 = vunpack.c.h.b16 %v298
      %v981 = vunpack.c.l.b16 %v299
      %v982 = vunpack.c.l.b16 %v300
      %v983 = vunpack.c.h.b16 %v300
      %v984 = vunpack.c.l.b16 %v301
      %v985 = vunpack.c.h.b16 %v301
      %v986 = vunpack.c.l.b16 %v302
      %v987 = vunpack.c.h.b16 %v302
      %v988 = vunpack.c.l.b16 %v303
      %v989 = vunpack.c.l.b16 %v304
      %v990 = vunpack.c.h.b16 %v304
      %v991 = vunpack.c.l.b16 %v305
      %v992 = vunpack.c.h.b16 %v305
      %v993 = vunpack.c.l.b16 %v306
      %v994 = vunpack.c.h.b16 %v306
      %v995 = vunpack.c.l.b16 %v307
      %v996 = vunpack.c.l.b16 %v308
      %v997 = vunpack.c.h.b16 %v308
      %v998 = vunpack.c.l.b16 %v309
      %v999 = vunpack.c.h.b16 %v309
      %v1000 = vunpack.c.l.b16 %v310
      %v1001 = vunpack.c.h.b16 %v310
      %v1002 = vunpack.c.l.b16 %v311
      %v1003 = vunpack.c.l.b16 %v312
      %v1004 = vunpack.c.h.b16 %v312
      %v1005 = vunpack.c.l.b16 %v313
      %v1006 = vunpack.c.h.b16 %v313
      %v1007 = vunpack.c.l.b16 %v314
      %v1008 = vunpack.c.h.b16 %v314
      %v1009 = vunpack.c.l.b16 %v315
      %v1010 = vunpack.c.l.b16 %v316
      %v1011 = vunpack.c.h.b16 %v316
      %v1012 = vunpack.c.l.b16 %v317
      %v1013 = vunpack.c.h.b16 %v317
      %v1014 = vunpack.c.l.b16 %v318
      %v1015 = vunpack.c.h.b16 %v318
      %v1016 = vunpack.c.l.b16 %v319
      %v1017 = vunpack.c.l.b16 %v320
      %v1018 = vunpack.c.h.b16 %v320
      %v1019 = vunpack.c.l.b16 %v321
      %v1020 = vunpack.c.h.b16 %v321
      %v1021 = vunpack.c.l.b16 %v322
      %v1022 = vunpack.c.h.b16 %v322
      %v1023 = vunpack.c.l.b16 %v323
      %v1024 = vunpack.c.l.b16 %v324
      %v1025 = vunpack.c.h.b16 %v324
      %v1026 = vunpack.c.l.b16 %v325
      %v1027 = vunpack.c.h.b16 %v325
      %v1028 = vunpack.c.l.b16 %v326
      %v1029 = vunpack.c.h.b16 %v326
      %v1030 = vunpack.c.l.b16 %v327
      %v1031 = vunpack.c.l.b16 %v328
      %v1032 = vunpack.c.h.b16 %v328
      %v1033 = vunpack.c.l.b16 %v329
      %v1034 = vunpack.c.h.b16 %v329
      %v1035 = vunpack.c.l.b16 %v330
      %v1036 = vunpack.c.h.b16 %v330
      %v1037 = vunpack.c.l.b16 %v331
      %v1038 = vunpack.c.l.b16 %v332
      %v1039 = vunpack.c.h.b16 %v332
      %v1040 = vunpack.c.l.b16 %v333
      %v1041 = vunpack.c.h.b16 %v333
      %v1042 = vunpack.c.l.b16 %v334
      %v1043 = vunpack.c.h.b16 %v334
      %v1044 = vunpack.c.l.b16 %v335
      %v1045 = vunpack.c.l.b16 %v336
      %v1046 = vunpack.c.h.b16 %v336
      %v1047 = vunpack.c.l.b16 %v337
      %v1048 = vunpack.c.h.b16 %v337
      %v1049 = vunpack.c.l.b16 %v338
      %v1050 = vunpack.c.h.b16 %v338
      %v1051 = vunpack.c.l.b16 %v339
      %v1052 = vunpack.c.l.b16 %v340
      %v1053 = vunpack.c.h.b16 %v340
      %v1054 = vunpack.c.l.b16 %v341
      %v1055 = vunpack.c.h.b16 %v341
      %v1056 = vunpack.c.l.b16 %v342
      %v1057 = vunpack.c.h.b16 %v342
      %v1058 = vunpack.c.l.b16 %v343
      %v1059 = vunpack.c.l.b16 %v344
      %v1060 = vunpack.c.h.b16 %v344
      %v1061 = vunpack.c.l.b16 %v345
      %v1062 = vunpack.c.h.b16 %v345
      %v1063 = vunpack.c.l.b16 %v346
      %v1064 = vunpack.c.h.b16 %v346
      %v1065 = vunpack.c.l.b16 %v347
      %v1066 = vunpack.c.l.b16 %v348
      %v1067 = vunpack.c.h.b16 %v348
      %v1068 = vunpack.c.l.b16 %v349
      %v1069 = vunpack.c.h.b16 %v349
      %v1070 = vunpack.c.l.b16 %v350
      %v1071 = vunpack.c.h.b16 %v350
      %v1072 = vunpack.c.l.b16 %v351
      %v1073 = vunpack.c.l.b16 %v352
      %v1074 = vunpack.c.h.b16 %v352
      %v1075 = vunpack.c.l.b16 %v353
      %v1076 = vunpack.c.h.b16 %v353
      %v1077 = vunpack.c.l.b16 %v354
      %v1078 = vunpack.c.h.b16 %v354
      %v1079 = vunpack.c.l.b16 %v355
      %v1080 = vunpack.c.l.b16 %v356
      %v1081 = vunpack.c.h.b16 %v356
      %v1082 = vunpack.c.l.b16 %v357
      %v1083 = vunpack.c.h.b16 %v357
      %v1084 = vunpack.c.l.b16 %v358
      %v1085 = vunpack.c.h.b16 %v358
      %v1086 = vunpack.c.l.b16 %v359
      %v1087 = vunpack.c.l.b16 %v360
      %v1088 = vunpack.c.h.b16 %v360
      %v1089 = vunpack.c.l.b16 %v361
      %v1090 = vunpack.c.h.b16 %v361
      %v1091 = vunpack.c.l.b16 %v362
      %v1092 = vunpack.c.h.b16 %v362
      %v1093 = vunpack.c.l.b16 %v363
      %v1094 = vunpack.c.l.b16 %v364
      %v1095 = vunpack.c.h.b16 %v364
      %v1096 = vunpack.c.l.b16 %v365
      %v1097 = vunpack.c.h.b16 %v365
      %v1098 = vunpack.c.l.b16 %v366
      %v1099 = vunpack.c.h.b16 %v366
      %v1100 = vunpack.c.l.b16 %v367
      %v1101 = vunpack.c.l.b16 %v368
      %v1102 = vunpack.c.h.b16 %v368
      %v1103 = vunpack.c.l.b16 %v369
      %v1104 = vunpack.c.h.b16 %v369
      %v1105 = vunpack.c.l.b16 %v370
      %v1106 = vunpack.c.h.b16 %v370
      %v1107 = vunpack.c.l.b16 %v371
      %v1108 = vunpack.c.l.b16 %v372
      %v1109 = vunpack.c.h.b16 %v372
      %v1110 = vunpack.c.l.b16 %v373
      %v1111 = vunpack.c.h.b16 %v373
      %v1112 = vunpack.c.l.b16 %v374
      %v1113 = vunpack.c.h.b16 %v374
      %v1114 = vunpack.c.l.b16 %v375
      %v1115 = vunpack.c.l.b16 %v376
      %v1116 = vunpack.c.h.b16 %v376
      %v1117 = vunpack.c.l.b16 %v377
      %v1118 = vunpack.c.h.b16 %v377
      %v1119 = vunpack.c.l.b16 %v378
      %v1120 = vunpack.c.h.b16 %v378
      %v1121 = vunpack.c.l.b16 %v379
      %v1122 = vunpack.c.l.b16 %v380
      %v1123 = vunpack.c.h.b16 %v380
      %v1124 = vunpack.c.l.b16 %v381
      %v1125 = vunpack.c.h.b16 %v381
      %v1126 = vunpack.c.l.b16 %v382
      %v1127 = vunpack.c.h.b16 %v382
      %v1128 = vunpack.c.l.b16 %v383
      %v1129 = vunpack.c.l.b16 %v384
      %v1130 = vunpack.c.h.b16 %v384
      %v1131 = vunpack.c.l.b16 %v385
      %v1132 = vunpack.c.h.b16 %v385
      %v1133 = vunpack.c.l.b16 %v386
      %v1134 = vunpack.c.h.b16 %v386
      %v1135 = vunpack.c.l.b16 %v387
      %v1136 = vunpack.c.l.b16 %v388
      %v1137 = vunpack.c.h.b16 %v388
      %v1138 = vunpack.c.l.b16 %v389
      %v1139 = vunpack.c.h.b16 %v389
      %v1140 = vunpack.c.l.b16 %v390
      %v1141 = vunpack.c.h.b16 %v390
      %v1142 = vunpack.c.l.b16 %v391
      %v1143 = vunpack.c.l.b16 %v392
      %v1144 = vunpack.c.h.b16 %v392
      %v1145 = vunpack.c.l.b16 %v393
      %v1146 = vunpack.c.h.b16 %v393
      %v1147 = vunpack.c.l.b16 %v394
      %v1148 = vunpack.c.h.b16 %v394
      %v1149 = vunpack.c.l.b16 %v395
      %v1150 = vunpack.c.l.b16 %v396
      %v1151 = vunpack.c.h.b16 %v396
      %v1152 = vunpack.c.l.b16 %v397
      %v1153 = vunpack.c.h.b16 %v397
      %v1154 = vunpack.c.l.b16 %v398
      %v1155 = vunpack.c.h.b16 %v398
      %v1156 = vunpack.c.l.b16 %v399
      %v1157 = vunpack.c.l.b16 %v400
      %v1158 = vunpack.c.h.b16 %v400
      %v1159 = vunpack.c.l.b16 %v401
      %v1160 = vunpack.c.h.b16 %v401
      %v1161 = vunpack.c.l.b16 %v402
      %v1162 = vunpack.c.h.b16 %v402
      %v1163 = vunpack.c.l.b16 %v403
      %v1164 = vunpack.c.l.b16 %v404
      %v1165 = vunpack.c.h.b16 %v404
      %v1166 = vunpack.c.l.b16 %v405
      %v1167 = vunpack.c.h.b16 %v405
      %v1168 = vunpack.c.l.b16 %v406
      %v1169 = vunpack.c.h.b16 %v406
      %v1170 = vunpack.c.l.b16 %v407
      %v1171 = vunpack.c.l.b16 %v408
      %v1172 = vunpack.c.h.b16 %v408
      %v1173 = vunpack.c.l.b16 %v409
      %v1174 = vunpack.c.h.b16 %v409
      %v1175 = vunpack.c.l.b16 %v410
      %v1176 = vunpack.c.h.b16 %v410
      %v1177 = vunpack.c.l.b16 %v411
      %v1178 = vunpack.c.l.b16 %v412
      %v1179 = vunpack.c.h.b16 %v412
      %v1180 = vunpack.c.l.b16 %v413
      %v1181 = vunpack.c.h.b16 %v413
      %v1182 = vunpack.c.l.b16 %v414
      %v1183 = vunpack.c.h.b16 %v414
      %v1184 = vunpack.c.l.b16 %v415
      %v1185 = vunpack.c.l.b16 %v416
      %v1186 = vunpack.c.h.b16 %v416
      %v1187 = vunpack.c.l.b16 %v417
      %v1188 = vunpack.c.h.b16 %v417
      %v1189 = vunpack.c.l.b16 %v418
      %v1190 = vunpack.c.h.b16 %v418
      %v1191 = vunpack.c.l.b16 %v419
      %v1192 = vunpack.c.l.b16 %v420
      %v1193 = vunpack.c.h.b16 %v420
      %v1194 = vunpack.c.l.b16 %v421
      %v1195 = vunpack.c.h.b16 %v421
      %v1196 = vunpack.c.l.b16 %v422
      %v1197 = vunpack.c.h.b16 %v422
      %v1198 = vunpack.c.l.b16 %v423
      %v1199 = vunpack.c.l.b16 %v424
      %v1200 = vunpack.c.h.b16 %v424
      %v1201 = vunpack.c.l.b16 %v425
      %v1202 = vunpack.c.h.b16 %v425
      %v1203 = vunpack.c.l.b16 %v426
      %v1204 = vunpack.c.h.b16 %v426
      %v1205 = vunpack.c.l.b16 %v427
      %v1206 = vunpack.c.l.b16 %v428
      %v1207 = vunpack.c.h.b16 %v428
      %v1208 = vunpack.c.l.b16 %v429
      %v1209 = vunpack.c.h.b16 %v429
      %v1210 = vunpack.c.l.b16 %v430
      %v1211 = vunpack.c.h.b16 %v430
      %v1212 = vunpack.c.l.b16 %v431
      %v1213 = vunpack.c.l.b16 %v432
      %v1214 = vunpack.c.h.b16 %v432
      %v1215 = vunpack.c.l.b16 %v433
      %v1216 = vunpack.c.h.b16 %v433
      %v1217 = vunpack.c.l.b16 %v434
      %v1218 = vunpack.c.h.b16 %v434
      %v1219 = vunpack.c.l.b16 %v435
      %v1220 = vunpack.c.l.b16 %v436
      %v1221 = vunpack.c.h.b16 %v436
      %v1222 = vunpack.c.l.b16 %v437
      %v1223 = vunpack.c.h.b16 %v437
      %v1224 = vunpack.c.l.b16 %v438
      %v1225 = vunpack.c.h.b16 %v438
      %v1226 = vunpack.c.l.b16 %v439
      %v1227 = vunpack.c.l.b16 %v440
      %v1228 = vunpack.c.h.b16 %v440
      %v1229 = vunpack.c.l.b16 %v441
      %v1230 = vunpack.c.h.b16 %v441
      %v1231 = vunpack.c.l.b16 %v442
      %v1232 = vunpack.c.h.b16 %v442
      %v1233 = vunpack.c.l.b16 %v443
      %v1234 = vunpack.c.l.b16 %v444
      %v1235 = vunpack.c.h.b16 %v444
      %v1236 = vunpack.c.l.b16 %v445
      %v1237 = vunpack.c.h.b16 %v445
      %v1238 = vunpack.c.l.b16 %v446
      %v1239 = vunpack.c.h.b16 %v446
      %v1240 = vunpack.c.l.b16 %v447
      %v1241 = vunpack.c.l.b16 %v448
      %v1242 = vunpack.c.h.b16 %v448
      %v1243 = vunpack.c.l.b16 %v449
      %v1244 = vunpack.c.h.b16 %v449
      %v1245 = vunpack.c.l.b16 %v450
      %v1246 = vunpack.c.h.b16 %v450
      %v1247 = vunpack.c.l.b16 %v451
      %v1248 = vunpack.c.l.b16 %v452
      %v1249 = vunpack.c.h.b16 %v452
      %v1250 = vunpack.c.l.b16 %v453
      %v1251 = vunpack.c.h.b16 %v453
      %v1252 = vunpack.c.l.b16 %v454
      %v1253 = vunpack.c.h.b16 %v454
      %v1254 = vunpack.c.l.b16 %v455
      %v1255 = vunpack.c.l.b16 %v456
      %v1256 = vunpack.c.h.b16 %v456
      %v1257 = vunpack.c.l.b16 %v457
      %v1258 = vunpack.c.h.b16 %v457
      %v1259 = vunpack.c.l.b16 %v458
      %v1260 = vunpack.c.h.b16 %v458
      %v1261 = vunpack.c.l.b16 %v459
      %v1262 = vunpack.c.l.b16 %v460
      %v1263 = vunpack.c.h.b16 %v460
      %v1264 = vunpack.c.l.b16 %v461
      %v1265 = vunpack.c.h.b16 %v461
      %v1266 = vunpack.c.l.b16 %v462
      %v1267 = vunpack.c.h.b16 %v462
      %v1268 = vunpack.c.l.b16 %v463
      %v1269 = vunpack.c.l.b16 %v464
      %v1270 = vunpack.c.h.b16 %v464
      %v1271 = vunpack.c.l.b16 %v465
      %v1272 = vunpack.c.h.b16 %v465
      %v1273 = vunpack.c.l.b16 %v466
      %v1274 = vunpack.c.h.b16 %v466
      %v1275 = vunpack.c.l.b16 %v467
      %v1276 = vunpack.c.l.b16 %v468
      %v1277 = vunpack.c.h.b16 %v468
      %v1278 = vunpack.c.l.b16 %v469
      %v1279 = vunpack.c.h.b16 %v469
      %v1280 = vunpack.c.l.b16 %v470
      %v1281 = vunpack.c.h.b16 %v470
      %v1282 = vunpack.c.l.b16 %v471
      %v1283 = vunpack.c.l.b16 %v472
      %v1284 = vunpack.c.h.b16 %v472
      %v1285 = vunpack.c.l.b16 %v473
      %v1286 = vunpack.c.h.b16 %v473
      %v1287 = vunpack.c.l.b16 %v474
      %v1288 = vunpack.c.h.b16 %v474
      %v1289 = vunpack.c.l.b16 %v475
      %v1290 = vunpack.c.l.b16 %v476
      %v1291 = vunpack.c.h.b16 %v476
      %v1292 = vunpack.c.l.b16 %v477
      %v1293 = vunpack.c.h.b16 %v477
      %v1294 = vunpack.c.l.b16 %v478
      %v1295 = vunpack.c.h.b16 %v478
      %v1296 = vunpack.c.l.b16 %v479
      %v1297 = vunpack.c.l.b16 %v480
      %v1298 = vunpack.c.h.b16 %v480
      %v1299 = vunpack.c.l.b16 %v481
      %v1300 = vunpack.c.h.b16 %v481
      %v1301 = vunpack.c.l.b16 %v482
      %v1302 = vunpack.c.h.b16 %v482
      %v1303 = vunpack.c.l.b16 %v483
      %v1304 = vunpack.c.l.b16 %v484
      %v1305 = vunpack.c.h.b16 %v484
      %v1306 = vunpack.c.l.b16 %v485
      %v1307 = vunpack.c.h.b16 %v485
      %v1308 = vunpack.c.l.b16 %v486
      %v1309 = vunpack.c.h.b16 %v486
      %v1310 = vunpack.c.l.b16 %v487
      %v1311 = vpack.c.b16 %v870, %v863
      %v1312 = vpack.c.b16 %v871, %v864
      %v1313 = vpack.c.b16 %v872, %v865
      %v1314 = vpack.c.b16 %v873, %v866
      %v1315 = vpack.c.b16 %v874, %v867
      %v1316 = vpack.c.b16 %v875, %v868
      %v1317 = vpack.c.b16 %v876, %v869
      %v1318 = vpack.c.b16 %v884, %v877
      %v1319 = vpack.c.b16 %v885, %v878
      %v1320 = vpack.c.b16 %v886, %v879
      %v1321 = vpack.c.b16 %v887, %v880
      %v1322 = vpack.c.b16 %v888, %v881
      %v1323 = vpack.c.b16 %v889, %v882
      %v1324 = vpack.c.b16 %v890, %v883
      %v1325 = vpack.c.b16 %v898, %v891
      %v1326 = vpack.c.b16 %v899, %v892
      %v1327 = vpack.c.b16 %v900, %v893
      %v1328 = vpack.c.b16 %v901, %v894
      %v1329 = vpack.c.b16 %v902, %v895
      %v1330 = vpack.c.b16 %v903, %v896
      %v1331 = vpack.c.b16 %v904, %v897
      %v1332 = vpack.c.b16 %v912, %v905
      %v1333 = vpack.c.b16 %v913, %v906
      %v1334 = vpack.c.b16 %v914, %v907
      %v1335 = vpack.c.b16 %v915, %v908
      %v1336 = vpack.c.b16 %v916, %v909
      %v1337 = vpack.c.b16 %v917, %v910
      %v1338 = vpack.c.b16 %v918, %v911
      %v1339 = vpack.c.b16 %v926, %v919
      %v1340 = vpack.c.b16 %v927, %v920
      %v1341 = vpack.c.b16 %v928, %v921
      %v1342 = vpack.c.b16 %v929, %v922
      %v1343 = vpack.c.b16 %v930, %v923
      %v1344 = vpack.c.b16 %v931, %v924
      %v1345 = vpack.c.b16 %v932, %v925
      %v1346 = vpack.c.b16 %v940, %v933
      %v1347 = vpack.c.b16 %v941, %v934
      %v1348 = vpack.c.b16 %v942, %v935
      %v1349 = vpack.c.b16 %v943, %v936
      %v1350 = vpack.c.b16 %v944, %v937
      %v1351 = vpack.c.b16 %v945, %v938
      %v1352 = vpack.c.b16 %v946, %v939
      %v1353 = vpack.c.b16 %v954, %v947
      %v1354 = vpack.c.b16 %v955, %v948
      %v1355 = vpack.c.b16 %v956, %v949
      %v1356 = vpack.c.b16 %v957, %v950
      %v1357 = vpack.c.b16 %v958, %v951
      %v1358 = vpack.c.b16 %v959, %v952
      %v1359 = vpack.c.b16 %v960, %v953
      %v1360 = vpack.c.b16 %v968, %v961
      %v1361 = vpack.c.b16 %v969, %v962
      %v1362 = vpack.c.b16 %v970, %v963
      %v1363 = vpack.c.b16 %v971, %v964
      %v1364 = vpack.c.b16 %v972, %v965
      %v1365 = vpack.c.b16 %v973, %v966
      %v1366 = vpack.c.b16 %v974, %v967
      %v1367 = vpack.c.b16 %v982, %v975
      %v1368 = vpack.c.b16 %v983, %v976
      %v1369 = vpack.c.b16 %v984, %v977
      %v1370 = vpack.c.b16 %v985, %v978
      %v1371 = vpack.c.b16 %v986, %v979
      %v1372 = vpack.c.b16 %v987, %v980
      %v1373 = vpack.c.b16 %v988, %v981
      %v1374 = vpack.c.b16 %v996, %v989
      %v1375 = vpack.c.b16 %v997, %v990
      %v1376 = vpack.c.b16 %v998, %v991
      %v1377 = vpack.c.b16 %v999, %v992
      %v1378 = vpack.c.b16 %v1000, %v993
      %v1379 = vpack.c.b16 %v1001, %v994
      %v1380 = vpack.c.b16 %v1002, %v995
      %v1381 = vpack.c.b16 %v1010, %v1003
      %v1382 = vpack.c.b16 %v1011, %v1004
      %v1383 = vpack.c.b16 %v1012, %v1005
      %v1384 = vpack.c.b16 %v1013, %v1006
      %v1385 = vpack.c.b16 %v1014, %v1007
      %v1386 = vpack.c.b16 %v1015, %v1008
      %v1387 = vpack.c.b16 %v1016, %v1009
      %v1388 = vpack.c.b16 %v1024, %v1017
      %v1389 = vpack.c.b16 %v1025, %v1018
      %v1390 = vpack.c.b16 %v1026, %v1019
      %v1391 = vpack.c.b16 %v1027, %v1020
      %v1392 = vpack.c.b16 %v1028, %v1021
      %v1393 = vpack.c.b16 %v1029, %v1022
      %v1394 = vpack.c.b16 %v1030, %v1023
      %v1395 = vpack.c.b16 %v1038, %v1031
      %v1396 = vpack.c.b16 %v1039, %v1032
      %v1397 = vpack.c.b16 %v1040, %v1033
      %v1398 = vpack.c.b16 %v1041, %v1034
      %v1399 = vpack.c.b16 %v1042, %v1035
      %v1400 = vpack.c.b16 %v1043, %v1036
      %v1401 = vpack.c.b16 %v1044, %v1037
      %v1402 = vpack.c.b16 %v1052, %v1045
      %v1403 = vpack.c.b16 %v1053, %v1046
      %v1404 = vpack.c.b16 %v1054, %v1047
      %v1405 = vpack.c.b16 %v1055, %v1048
      %v1406 = vpack.c.b16 %v1056, %v1049
      %v1407 = vpack.c.b16 %v1057, %v1050
      %v1408 = vpack.c.b16 %v1058, %v1051
      %v1409 = vpack.c.b16 %v1066, %v1059
      %v1410 = vpack.c.b16 %v1067, %v1060
      %v1411 = vpack.c.b16 %v1068, %v1061
      %v1412 = vpack.c.b16 %v1069, %v1062
      %v1413 = vpack.c.b16 %v1070, %v1063
      %v1414 = vpack.c.b16 %v1071, %v1064
      %v1415 = vpack.c.b16 %v1072, %v1065
      %v1416 = vpack.c.b16 %v1080, %v1073
      %v1417 = vpack.c.b16 %v1081, %v1074
      %v1418 = vpack.c.b16 %v1082, %v1075
      %v1419 = vpack.c.b16 %v1083, %v1076
      %v1420 = vpack.c.b16 %v1084, %v1077
      %v1421 = vpack.c.b16 %v1085, %v1078
      %v1422 = vpack.c.b16 %v1086, %v1079
      %v1423 = vpack.c.b16 %v1094, %v1087
      %v1424 = vpack.c.b16 %v1095, %v1088
      %v1425 = vpack.c.b16 %v1096, %v1089
      %v1426 = vpack.c.b16 %v1097, %v1090
      %v1427 = vpack.c.b16 %v1098, %v1091
      %v1428 = vpack.c.b16 %v1099, %v1092
      %v1429 = vpack.c.b16 %v1100, %v1093
      %v1430 = vpack.c.b16 %v1108, %v1101
      %v1431 = vpack.c.b16 %v1109, %v1102
      %v1432 = vpack.c.b16 %v1110, %v1103
      %v1433 = vpack.c.b16 %v1111, %v1104
      %v1434 = vpack.c.b16 %v1112, %v1105
      %v1435 = vpack.c.b16 %v1113, %v1106
      %v1436 = vpack.c.b16 %v1114, %v1107
      %v1437 = vpack.c.b16 %v1122, %v1115
      %v1438 = vpack.c.b16 %v1123, %v1116
      %v1439 = vpack.c.b16 %v1124, %v1117
      %v1440 = vpack.c.b16 %v1125, %v1118
      %v1441 = vpack.c.b16 %v1126, %v1119
      %v1442 = vpack.c.b16 %v1127, %v1120
      %v1443 = vpack.c.b16 %v1128, %v1121
      %v1444 = vpack.c.b16 %v1136, %v1129
      %v1445 = vpack.c.b16 %v1137, %v1130
      %v1446 = vpack.c.b16 %v1138, %v1131
      %v1447 = vpack.c.b16 %v1139, %v1132
      %v1448 = vpack.c.b16 %v1140, %v1133
      %v1449 = vpack.c.b16 %v1141, %v1134
      %v1450 = vpack.c.b16 %v1142, %v1135
      %v1451 = vpack.c.b16 %v1150, %v1143
      %v1452 = vpack.c.b16 %v1151, %v1144
      %v1453 = vpack.c.b16 %v1152, %v1145
      %v1454 = vpack.c.b16 %v1153, %v1146
      %v1455 = vpack.c.b16 %v1154, %v1147
      %v1456 = vpack.c.b16 %v1155, %v1148
      %v1457 = vpack.c.b16 %v1156, %v1149
      %v1458 = vpack.c.b16 %v1164, %v1157
      %v1459 = vpack.c.b16 %v1165, %v1158
      %v1460 = vpack.c.b16 %v1166, %v1159
      %v1461 = vpack.c.b16 %v1167, %v1160
      %v1462 = vpack.c.b16 %v1168, %v1161
      %v1463 = vpack.c.b16 %v1169, %v1162
      %v1464 = vpack.c.b16 %v1170, %v1163
      %v1465 = vpack.c.b16 %v1178, %v1171
      %v1466 = vpack.c.b16 %v1179, %v1172
      %v1467 = vpack.c.b16 %v1180, %v1173
      %v1468 = vpack.c.b16 %v1181, %v1174
      %v1469 = vpack.c.b16 %v1182, %v1175
      %v1470 = vpack.c.b16 %v1183, %v1176
      %v1471 = vpack.c.b16 %v1184, %v1177
      %v1472 = vpack.c.b16 %v1192, %v1185
      %v1473 = vpack.c.b16 %v1193, %v1186
      %v1474 = vpack.c.b16 %v1194, %v1187
      %v1475 = vpack.c.b16 %v1195, %v1188
      %v1476 = vpack.c.b16 %v1196, %v1189
      %v1477 = vpack.c.b16 %v1197, %v1190
      %v1478 = vpack.c.b16 %v1198, %v1191
      %v1479 = vpack.c.b16 %v1206, %v1199
      %v1480 = vpack.c.b16 %v1207, %v1200
      %v1481 = vpack.c.b16 %v1208, %v1201
      %v1482 = vpack.c.b16 %v1209, %v1202
      %v1483 = vpack.c.b16 %v1210, %v1203
      %v1484 = vpack.c.b16 %v1211, %v1204
      %v1485 = vpack.c.b16 %v1212, %v1205
      %v1486 = vpack.c.b16 %v1220, %v1213
      %v1487 = vpack.c.b16 %v1221, %v1214
      %v1488 = vpack.c.b16 %v1222, %v1215
      %v1489 = vpack.c.b16 %v1223, %v1216
      %v1490 = vpack.c.b16 %v1224, %v1217
      %v1491 = vpack.c.b16 %v1225, %v1218
      %v1492 = vpack.c.b16 %v1226, %v1219
      %v1493 = vpack.c.b16 %v1234, %v1227
      %v1494 = vpack.c.b16 %v1235, %v1228
      %v1495 = vpack.c.b16 %v1236, %v1229
      %v1496 = vpack.c.b16 %v1237, %v1230
      %v1497 = vpack.c.b16 %v1238, %v1231
      %v1498 = vpack.c.b16 %v1239, %v1232
      %v1499 = vpack.c.b16 %v1240, %v1233
      %v1500 = vpack.c.b16 %v1248, %v1241
      %v1501 = vpack.c.b16 %v1249, %v1242
      %v1502 = vpack.c.b16 %v1250, %v1243
      %v1503 = vpack.c.b16 %v1251, %v1244
      %v1504 = vpack.c.b16 %v1252, %v1245
      %v1505 = vpack.c.b16 %v1253, %v1246
      %v1506 = vpack.c.b16 %v1254, %v1247
      %v1507 = vpack.c.b16 %v1262, %v1255
      %v1508 = vpack.c.b16 %v1263, %v1256
      %v1509 = vpack.c.b16 %v1264, %v1257
      %v1510 = vpack.c.b16 %v1265, %v1258
      %v1511 = vpack.c.b16 %v1266, %v1259
      %v1512 = vpack.c.b16 %v1267, %v1260
      %v1513 = vpack.c.b16 %v1268, %v1261
      %v1514 = vpack.c.b16 %v1276, %v1269
      %v1515 = vpack.c.b16 %v1277, %v1270
      %v1516 = vpack.c.b16 %v1278, %v1271
      %v1517 = vpack.c.b16 %v1279, %v1272
      %v1518 = vpack.c.b16 %v1280, %v1273
      %v1519 = vpack.c.b16 %v1281, %v1274
      %v1520 = vpack.c.b16 %v1282, %v1275
      %v1521 = vpack.c.b16 %v1290, %v1283
      %v1522 = vpack.c.b16 %v1291, %v1284
      %v1523 = vpack.c.b16 %v1292, %v1285
      %v1524 = vpack.c.b16 %v1293, %v1286
      %v1525 = vpack.c.b16 %v1294, %v1287
      %v1526 = vpack.c.b16 %v1295, %v1288
      %v1527 = vpack.c.b16 %v1296, %v1289
      %v1528 = vpack.c.b16 %v1304, %v1297
      %v1529 = vpack.c.b16 %v1305, %v1298
      %v1530 = vpack.c.b16 %v1306, %v1299
      %v1531 = vpack.c.b16 %v1307, %v1300
      %v1532 = vpack.c.b16 %v1308, %v1301
      %v1533 = vpack.c.b16 %v1309, %v1302
      %v1534 = vpack.c.b16 %v1310, %v1303
      %v1871 = vunpack.c.l.b16 %v488
      %v1872 = vunpack.c.l.b16 %v489
      %v1873 = vunpack.c.l.b16 %v490
      %v1874 = vunpack.c.l.b16 %v491
      %v1875 = vunpack.c.l.b16 %v492
      %v1876 = vunpack.c.l.b16 %v493
      %v1877 = vunpack.c.l.b16 %v494
      %v1878 = vunpack.c.l.b16 %v495
      %v1879 = vunpack.c.l.b16 %v496
      %v1880 = vunpack.c.l.b16 %v497
      %v1881 = vunpack.c.l.b16 %v498
      %v1882 = vunpack.c.l.b16 %v499
      %v1883 = vunpack.c.l.b16 %v500
      %v1884 = vunpack.c.l.b16 %v501
      %v1885 = vunpack.c.l.b16 %v502
      %v1886 = vunpack.c.l.b16 %v503
      %v1887 = vunpack.c.l.b16 %v504
      %v1888 = vunpack.c.l.b16 %v505
      %v1889 = vunpack.c.l.b16 %v506
      %v1890 = vunpack.c.l.b16 %v507
      %v1891 = vunpack.c.l.b16 %v508
      %v1892 = vunpack.c.l.b16 %v509
      %v1893 = vunpack.c.l.b16 %v510
      %v1894 = vunpack.c.l.b16 %v511
      %v1895 = vunpack.c.l.b16 %v512
      %v1896 = vunpack.c.l.b16 %v513
      %v1897 = vunpack.c.l.b16 %v514
      %v1898 = vunpack.c.l.b16 %v515
      %v1899 = vunpack.c.l.b16 %v516
      %v1900 = vunpack.c.l.b16 %v517
      %v1901 = vunpack.c.l.b16 %v518
      %v1902 = vunpack.c.l.b16 %v519
      %v1903 = vunpack.c.l.b16 %v520
      %v1904 = vunpack.c.l.b16 %v521
      %v1905 = vunpack.c.l.b16 %v522
      %v1906 = vunpack.c.l.b16 %v523
      %v1907 = vunpack.c.l.b16 %v524
      %v1908 = vunpack.c.l.b16 %v525
      %v1909 = vunpack.c.l.b16 %v526
      %v1910 = vunpack.c.l.b16 %v527
      %v1911 = vunpack.c.l.b16 %v528
      %v1912 = vunpack.c.l.b16 %v529
      %v1913 = vunpack.c.l.b16 %v530
      %v1914 = vunpack.c.l.b16 %v531
      %v1915 = vunpack.c.l.b16 %v532
      %v1916 = vunpack.c.l.b16 %v533
      %v1917 = vunpack.c.l.b16 %v534
      %v1918 = vunpack.c.l.b16 %v535
      %v1919 = vunpack.c.l.b16 %v536
      %v1920 = vunpack.c.l.b16 %v537
      %v1921 = vunpack.c.l.b16 %v538
      %v1922 = vunpack.c.l.b16 %v539
      %v1923 = vunpack.c.l.b16 %v540
      %v1924 = vunpack.c.l.b16 %v541
      %v1925 = vunpack.c.l.b16 %v542
      %v1926 = vunpack.c.l.b16 %v543
      %v1927 = vunpack.c.l.b16 %v544
      %v1928 = vunpack.c.l.b16 %v545
      %v1929 = vunpack.c.l.b16 %v546
      %v1930 = vunpack.c.l.b16 %v547
      %v1931 = vunpack.c.l.b16 %v548
      %v1932 = vunpack.c.l.b16 %v549
      %v1933 = vunpack.c.l.b16 %v550
      %v1934 = vunpack.c.l.b16 %v551
      %v1935 = vunpack.c.l.b16 %v552
      %v1936 = vunpack.c.l.b16 %v553
      %v1937 = vunpack.c.l.b16 %v554
      %v1938 = vunpack.c.l.b16 %v555
      %v1939 = vunpack.c.l.b16 %v556
      %v1940 = vunpack.c.l.b16 %v557
      %v1941 = vunpack.c.l.b16 %v558
      %v1942 = vunpack.c.l.b16 %v559
      %v1943 = vunpack.c.l.b16 %v560
      %v1944 = vunpack.c.l.b16 %v561
      %v1945 = vunpack.c.l.b16 %v562
      %v1946 = vunpack.c.l.b16 %v563
      %v1947 = vunpack.c.l.b16 %v564
      %v1948 = vunpack.c.l.b16 %v565
      %v1949 = vunpack.c.l.b16 %v566
      %v1950 = vunpack.c.l.b16 %v567
      %v1951 = vunpack.c.l.b16 %v568
      %v1952 = vunpack.c.l.b16 %v569
      %v1953 = vunpack.c.l.b16 %v570
      %v1954 = vunpack.c.l.b16 %v571
      %v1955 = vunpack.c.l.b16 %v572
      %v1956 = vunpack.c.l.b16 %v573
      %v1957 = vunpack.c.l.b16 %v574
      %v1958 = vunpack.c.l.b16 %v575
      %v1959 = vunpack.c.l.b16 %v576
      %v1960 = vunpack.c.l.b16 %v577
      %v1961 = vunpack.c.l.b16 %v578
      %v1962 = vunpack.c.l.b16 %v579
      %v1963 = vunpack.c.l.b16 %v580
      %v1964 = vunpack.c.l.b16 %v581
      %v1965 = vunpack.c.l.b16 %v582
      %v1966 = vunpack.c.l.b16 %v583
      %v1967 = vunpack.c.l.b16 %v584
      %v1968 = vunpack.c.l.b16 %v585
      %v1969 = vunpack.c.l.b16 %v586
      %v1970 = vunpack.c.l.b16 %v587
      %v1971 = vunpack.c.l.b16 %v588
      %v1972 = vunpack.c.l.b16 %v589
      %v1973 = vunpack.c.l.b16 %v590
      %v1974 = vunpack.c.l.b16 %v591
      %v1975 = vunpack.c.l.b16 %v592
      %v1976 = vunpack.c.l.b16 %v593
      %v1977 = vunpack.c.l.b16 %v594
      %v1978 = vunpack.c.l.b16 %v595
      %v1979 = vunpack.c.l.b16 %v596
      %v1980 = vunpack.c.l.b16 %v597
      %v1981 = vunpack.c.l.b16 %v598
      %v1982 = vunpack.c.l.b16 %v599
      %v1983 = vpack.c.b16 %v1872, %v1871
      %v1984 = vpack.c.b16 %v1874, %v1873
      %v1985 = vpack.c.b16 %v1876, %v1875
      %v1986 = vpack.c.b16 %v1878, %v1877
      %v1987 = vpack.c.b16 %v1880, %v1879
      %v1988 = vpack.c.b16 %v1882, %v1881
      %v1989 = vpack.c.b16 %v1884, %v1883
      %v1990 = vpack.c.b16 %v1886, %v1885
      %v1991 = vpack.c.b16 %v1888, %v1887
      %v1992 = vpack.c.b16 %v1890, %v1889
      %v1993 = vpack.c.b16 %v1892, %v1891
      %v1994 = vpack.c.b16 %v1894, %v1893
      %v1995 = vpack.c.b16 %v1896, %v1895
      %v1996 = vpack.c.b16 %v1898, %v1897
      %v1997 = vpack.c.b16 %v1900, %v1899
      %v1998 = vpack.c.b16 %v1902, %v1901
      %v1999 = vpack.c.b16 %v1904, %v1903
      %v2000 = vpack.c.b16 %v1906, %v1905
      %v2001 = vpack.c.b16 %v1908, %v1907
      %v2002 = vpack.c.b16 %v1910, %v1909
      %v2003 = vpack.c.b16 %v1912, %v1911
      %v2004 = vpack.c.b16 %v1914, %v1913
      %v2005 = vpack.c.b16 %v1916, %v1915
      %v2006 = vpack.c.b16 %v1918, %v1917
      %v2007 = vpack.c.b16 %v1920, %v1919
      %v2008 = vpack.c.b16 %v1922, %v1921
      %v2009 = vpack.c.b16 %v1924, %v1923
      %v2010 = vpack.c.b16 %v1926, %v1925
      %v2011 = vpack.c.b16 %v1928, %v1927
      %v2012 = vpack.c.b16 %v1930, %v1929
      %v2013 = vpack.c.b16 %v1932, %v1931
      %v2014 = vpack.c.b16 %v1934, %v1933
      %v2015 = vpack.c.b16 %v1936, %v1935
      %v2016 = vpack.c.b16 %v1938, %v1937
      %v2017 = vpack.c.b16 %v1940, %v1939
      %v2018 = vpack.c.b16 %v1942, %v1941
      %v2019 = vpack.c.b16 %v1944, %v1943
      %v2020 = vpack.c.b16 %v1946, %v1945
      %v2021 = vpack.c.b16 %v1948, %v1947
      %v2022 = vpack.c.b16 %v1950, %v1949
      %v2023 = vpack.c.b16 %v1952, %v1951
      %v2024 = vpack.c.b16 %v1954, %v1953
      %v2025 = vpack.c.b16 %v1956, %v1955
      %v2026 = vpack.c.b16 %v1958, %v1957
      %v2027 = vpack.c.b16 %v1960, %v1959
      %v2028 = vpack.c.b16 %v1962, %v1961
      %v2029 = vpack.c.b16 %v1964, %v1963
      %v2030 = vpack.c.b16 %v1966, %v1965
      %v2031 = vpack.c.b16 %v1968, %v1967
      %v2032 = vpack.c.b16 %v1970, %v1969
      %v2033 = vpack.c.b16 %v1972, %v1971
      %v2034 = vpack.c.b16 %v1974, %v1973
      %v2035 = vpack.c.b16 %v1976, %v1975
      %v2036 = vpack.c.b16 %v1978, %v1977
      %v2037 = vpack.c.b16 %v1980, %v1979
      %v2038 = vpack.c.b16 %v1982, %v1981
      %2095 = vmatprep.subr.bf16.mxu0 0
      %2096 = vmatpush1.bf16.msra.mxu0 %v1990
      %2097 = vmatprep.subr.bf16.mxu0 0
      %2098 = vmatpush1.bf16.msra.mxu0 %v1989
      %2099 = vmatprep.subr.bf16.mxu0 0
      %2100 = vmatpush1.bf16.msra.mxu0 %v1988
      %2101 = vmatprep.subr.bf16.mxu0 0
      %2102 = vmatpush1.bf16.msra.mxu0 %v1987
      %2103 = vmatprep.subr.bf16.mxu0 0
      %2104 = vmatpush1.bf16.msra.mxu0 %v1986
      %2105 = vmatprep.subr.bf16.mxu0 0
      %2106 = vmatpush1.bf16.msra.mxu0 %v1985
      %2107 = vmatprep.subr.bf16.mxu0 0
      %2108 = vmatpush1.bf16.msra.mxu0 %v1984
      %2109 = vmatprep.subr.bf16.mxu0 0
      %2110 = vmatpush1.bf16.msra.mxu0 %v1983
      %2111 = vmatprep.subr.bf16.mxu0 0
      %2112 = vmatpush2.bf16.msra.mxu0 %v1998
      %2113 = vmatprep.subr.bf16.mxu0 0
      %2114 = vmatpush2.bf16.msra.mxu0 %v1997
      %2115 = vmatprep.subr.bf16.mxu0 0
      %2116 = vmatpush2.bf16.msra.mxu0 %v1996
      %2117 = vmatprep.subr.bf16.mxu0 0
      %2118 = vmatpush2.bf16.msra.mxu0 %v1995
      %2119 = vmatprep.subr.bf16.mxu0 0
      %2120 = vmatpush2.bf16.msra.mxu0 %v1994
      %2121 = vmatprep.subr.bf16.mxu0 0
      %2122 = vmatpush2.bf16.msra.mxu0 %v1993
      %2123 = vmatprep.subr.bf16.mxu0 0
      %2124 = vmatpush2.bf16.msra.mxu0 %v1992
      %2125 = vmatprep.subr.bf16.mxu0 0
      %2126 = vmatpush2.bf16.msra.mxu0 %v1991
      %2127 = vmatprep.mubr.bf16.mxu0 %v1312
      %2128 = vmatmul.mubr.bf16.gmra.mxu0 %v1311
      %v2129 = vpop.f32.mrf.mxu0
      %v2130 = vadd.f32 %v605, %v2129
      %v2131 = vpop.f32.mrf.mxu0
      %v2132 = vpop.f32.mrf.mxu0
      %v2133 = vadd.f32 %v605, %v2132
      %v2134 = vpop.f32.mrf.mxu0
      %2135 = vmatprep.mubr.bf16.mxu0 %v1319
      %2136 = vmatmul.mubr.bf16.gmra.mxu0 %v1318
      %v2137 = vpop.f32.mrf.mxu0
      %v2138 = vadd.f32 %v605, %v2137
      %v2139 = vpop.f32.mrf.mxu0
      %v2140 = vpop.f32.mrf.mxu0
      %v2141 = vadd.f32 %v605, %v2140
      %v2142 = vpop.f32.mrf.mxu0
      %2143 = vmatprep.mubr.bf16.mxu0 %v1326
      %2144 = vmatmul.mubr.bf16.gmra.mxu0 %v1325
      %v2145 = vpop.f32.mrf.mxu0
      %v2146 = vadd.f32 %v605, %v2145
      %v2147 = vpop.f32.mrf.mxu0
      %v2148 = vpop.f32.mrf.mxu0
      %v2149 = vadd.f32 %v605, %v2148
      %v2150 = vpop.f32.mrf.mxu0
      %2151 = vmatprep.mubr.bf16.mxu0 %v1333
      %2152 = vmatmul.mubr.bf16.gmra.mxu0 %v1332
      %v2153 = vpop.f32.mrf.mxu0
      %v2154 = vadd.f32 %v605, %v2153
      %v2155 = vpop.f32.mrf.mxu0
      %v2156 = vpop.f32.mrf.mxu0
      %v2157 = vadd.f32 %v605, %v2156
      %v2158 = vpop.f32.mrf.mxu0
      %2159 = vmatprep.mubr.bf16.mxu0 %v1340
      %2160 = vmatmul.mubr.bf16.gmra.mxu0 %v1339
      %v2161 = vpop.f32.mrf.mxu0
      %v2162 = vadd.f32 %v605, %v2161
      %v2163 = vpop.f32.mrf.mxu0
      %v2164 = vpop.f32.mrf.mxu0
      %v2165 = vadd.f32 %v605, %v2164
      %v2166 = vpop.f32.mrf.mxu0
      %2167 = vmatprep.mubr.bf16.mxu0 %v1347
      %2168 = vmatmul.mubr.bf16.gmra.mxu0 %v1346
      %v2169 = vpop.f32.mrf.mxu0
      %v2170 = vadd.f32 %v605, %v2169
      %v2171 = vpop.f32.mrf.mxu0
      %v2172 = vpop.f32.mrf.mxu0
      %v2173 = vadd.f32 %v605, %v2172
      %v2174 = vpop.f32.mrf.mxu0
      %2175 = vmatprep.mubr.bf16.mxu0 %v1354
      %2176 = vmatmul.mubr.bf16.gmra.mxu0 %v1353
      %v2177 = vpop.f32.mrf.mxu0
      %v2178 = vadd.f32 %v605, %v2177
      %v2179 = vpop.f32.mrf.mxu0
      %v2180 = vpop.f32.mrf.mxu0
      %v2181 = vadd.f32 %v605, %v2180
      %v2182 = vpop.f32.mrf.mxu0
      %2183 = vmatprep.mubr.bf16.mxu0 %v1361
      %2184 = vmatmul.mubr.bf16.gmra.mxu0 %v1360
      %v2185 = vpop.f32.mrf.mxu0
      %v2186 = vadd.f32 %v605, %v2185
      %v2187 = vpop.f32.mrf.mxu0
      %v2188 = vpop.f32.mrf.mxu0
      %v2189 = vadd.f32 %v605, %v2188
      %v2190 = vpop.f32.mrf.mxu0
      %2191 = vmatprep.mubr.bf16.mxu0 %v1368
      %2192 = vmatmul.mubr.bf16.gmra.mxu0 %v1367
      %v2193 = vpop.f32.mrf.mxu0
      %v2194 = vadd.f32 %v605, %v2193
      %v2195 = vpop.f32.mrf.mxu0
      %v2196 = vpop.f32.mrf.mxu0
      %v2197 = vadd.f32 %v605, %v2196
      %v2198 = vpop.f32.mrf.mxu0
      %2199 = vmatprep.mubr.bf16.mxu0 %v1375
      %2200 = vmatmul.mubr.bf16.gmra.mxu0 %v1374
      %v2201 = vpop.f32.mrf.mxu0
      %v2202 = vadd.f32 %v605, %v2201
      %v2203 = vpop.f32.mrf.mxu0
      %v2204 = vpop.f32.mrf.mxu0
      %v2205 = vadd.f32 %v605, %v2204
      %v2206 = vpop.f32.mrf.mxu0
      %2207 = vmatprep.mubr.bf16.mxu0 %v1382
      %2208 = vmatmul.mubr.bf16.gmra.mxu0 %v1381
      %v2209 = vpop.f32.mrf.mxu0
      %v2210 = vadd.f32 %v605, %v2209
      %v2211 = vpop.f32.mrf.mxu0
      %v2212 = vpop.f32.mrf.mxu0
      %v2213 = vadd.f32 %v605, %v2212
      %v2214 = vpop.f32.mrf.mxu0
      %2215 = vmatprep.mubr.bf16.mxu0 %v1389
      %2216 = vmatmul.mubr.bf16.gmra.mxu0 %v1388
      %v2217 = vpop.f32.mrf.mxu0
      %v2218 = vadd.f32 %v605, %v2217
      %v2219 = vpop.f32.mrf.mxu0
      %v2220 = vpop.f32.mrf.mxu0
      %v2221 = vadd.f32 %v605, %v2220
      %v2222 = vpop.f32.mrf.mxu0
      %2223 = vmatprep.mubr.bf16.mxu0 %v1396
      %2224 = vmatmul.mubr.bf16.gmra.mxu0 %v1395
      %v2225 = vpop.f32.mrf.mxu0
      %v2226 = vadd.f32 %v605, %v2225
      %v2227 = vpop.f32.mrf.mxu0
      %v2228 = vpop.f32.mrf.mxu0
      %v2229 = vadd.f32 %v605, %v2228
      %v2230 = vpop.f32.mrf.mxu0
      %2231 = vmatprep.mubr.bf16.mxu0 %v1403
      %2232 = vmatmul.mubr.bf16.gmra.mxu0 %v1402
      %v2233 = vpop.f32.mrf.mxu0
      %v2234 = vadd.f32 %v605, %v2233
      %v2235 = vpop.f32.mrf.mxu0
      %v2236 = vpop.f32.mrf.mxu0
      %v2237 = vadd.f32 %v605, %v2236
      %v2238 = vpop.f32.mrf.mxu0
      %2239 = vmatprep.mubr.bf16.mxu0 %v1410
      %2240 = vmatmul.mubr.bf16.gmra.mxu0 %v1409
      %v2241 = vpop.f32.mrf.mxu0
      %v2242 = vadd.f32 %v605, %v2241
      %v2243 = vpop.f32.mrf.mxu0
      %v2244 = vpop.f32.mrf.mxu0
      %v2245 = vadd.f32 %v605, %v2244
      %v2246 = vpop.f32.mrf.mxu0
      %2247 = vmatprep.mubr.bf16.mxu0 %v1417
      %2248 = vmatmul.mubr.bf16.gmra.mxu0 %v1416
      %v2249 = vpop.f32.mrf.mxu0
      %v2250 = vadd.f32 %v605, %v2249
      %v2251 = vpop.f32.mrf.mxu0
      %v2252 = vpop.f32.mrf.mxu0
      %v2253 = vadd.f32 %v605, %v2252
      %v2254 = vpop.f32.mrf.mxu0
      %2255 = vmatprep.mubr.bf16.mxu0 %v1424
      %2256 = vmatmul.mubr.bf16.gmra.mxu0 %v1423
      %v2257 = vpop.f32.mrf.mxu0
      %v2258 = vadd.f32 %v605, %v2257
      %v2259 = vpop.f32.mrf.mxu0
      %v2260 = vpop.f32.mrf.mxu0
      %v2261 = vadd.f32 %v605, %v2260
      %v2262 = vpop.f32.mrf.mxu0
      %2263 = vmatprep.mubr.bf16.mxu0 %v1431
      %2264 = vmatmul.mubr.bf16.gmra.mxu0 %v1430
      %v2265 = vpop.f32.mrf.mxu0
      %v2266 = vadd.f32 %v605, %v2265
      %v2267 = vpop.f32.mrf.mxu0
      %v2268 = vpop.f32.mrf.mxu0
      %v2269 = vadd.f32 %v605, %v2268
      %v2270 = vpop.f32.mrf.mxu0
      %2271 = vmatprep.mubr.bf16.mxu0 %v1438
      %2272 = vmatmul.mubr.bf16.gmra.mxu0 %v1437
      %v2273 = vpop.f32.mrf.mxu0
      %v2274 = vadd.f32 %v605, %v2273
      %v2275 = vpop.f32.mrf.mxu0
      %v2276 = vpop.f32.mrf.mxu0
      %v2277 = vadd.f32 %v605, %v2276
      %v2278 = vpop.f32.mrf.mxu0
      %2279 = vmatprep.mubr.bf16.mxu0 %v1445
      %2280 = vmatmul.mubr.bf16.gmra.mxu0 %v1444
      %v2281 = vpop.f32.mrf.mxu0
      %v2282 = vadd.f32 %v605, %v2281
      %v2283 = vpop.f32.mrf.mxu0
      %v2284 = vpop.f32.mrf.mxu0
      %v2285 = vadd.f32 %v605, %v2284
      %v2286 = vpop.f32.mrf.mxu0
      %2287 = vmatprep.mubr.bf16.mxu0 %v1452
      %2288 = vmatmul.mubr.bf16.gmra.mxu0 %v1451
      %v2289 = vpop.f32.mrf.mxu0
      %v2290 = vadd.f32 %v605, %v2289
      %v2291 = vpop.f32.mrf.mxu0
      %v2292 = vpop.f32.mrf.mxu0
      %v2293 = vadd.f32 %v605, %v2292
      %v2294 = vpop.f32.mrf.mxu0
      %2295 = vmatprep.mubr.bf16.mxu0 %v1459
      %2296 = vmatmul.mubr.bf16.gmra.mxu0 %v1458
      %v2297 = vpop.f32.mrf.mxu0
      %v2298 = vadd.f32 %v605, %v2297
      %v2299 = vpop.f32.mrf.mxu0
      %v2300 = vpop.f32.mrf.mxu0
      %v2301 = vadd.f32 %v605, %v2300
      %v2302 = vpop.f32.mrf.mxu0
      %2303 = vmatprep.mubr.bf16.mxu0 %v1466
      %2304 = vmatmul.mubr.bf16.gmra.mxu0 %v1465
      %v2305 = vpop.f32.mrf.mxu0
      %v2306 = vadd.f32 %v605, %v2305
      %v2307 = vpop.f32.mrf.mxu0
      %v2308 = vpop.f32.mrf.mxu0
      %v2309 = vadd.f32 %v605, %v2308
      %v2310 = vpop.f32.mrf.mxu0
      %2311 = vmatprep.mubr.bf16.mxu0 %v1473
      %2312 = vmatmul.mubr.bf16.gmra.mxu0 %v1472
      %v2313 = vpop.f32.mrf.mxu0
      %v2314 = vadd.f32 %v605, %v2313
      %v2315 = vpop.f32.mrf.mxu0
      %v2316 = vpop.f32.mrf.mxu0
      %v2317 = vadd.f32 %v605, %v2316
      %v2318 = vpop.f32.mrf.mxu0
      %2319 = vmatprep.mubr.bf16.mxu0 %v1480
      %2320 = vmatmul.mubr.bf16.gmra.mxu0 %v1479
      %v2321 = vpop.f32.mrf.mxu0
      %v2322 = vadd.f32 %v605, %v2321
      %v2323 = vpop.f32.mrf.mxu0
      %v2324 = vpop.f32.mrf.mxu0
      %v2325 = vadd.f32 %v605, %v2324
      %v2326 = vpop.f32.mrf.mxu0
      %2327 = vmatprep.mubr.bf16.mxu0 %v1487
      %2328 = vmatmul.mubr.bf16.gmra.mxu0 %v1486
      %v2329 = vpop.f32.mrf.mxu0
      %v2330 = vadd.f32 %v605, %v2329
      %v2331 = vpop.f32.mrf.mxu0
      %v2332 = vpop.f32.mrf.mxu0
      %v2333 = vadd.f32 %v605, %v2332
      %v2334 = vpop.f32.mrf.mxu0
      %2335 = vmatprep.mubr.bf16.mxu0 %v1494
      %2336 = vmatmul.mubr.bf16.gmra.mxu0 %v1493
      %v2337 = vpop.f32.mrf.mxu0
      %v2338 = vadd.f32 %v605, %v2337
      %v2339 = vpop.f32.mrf.mxu0
      %v2340 = vpop.f32.mrf.mxu0
      %v2341 = vadd.f32 %v605, %v2340
      %v2342 = vpop.f32.mrf.mxu0
      %2343 = vmatprep.mubr.bf16.mxu0 %v1501
      %2344 = vmatmul.mubr.bf16.gmra.mxu0 %v1500
      %v2345 = vpop.f32.mrf.mxu0
      %v2346 = vadd.f32 %v605, %v2345
      %v2347 = vpop.f32.mrf.mxu0
      %v2348 = vpop.f32.mrf.mxu0
      %v2349 = vadd.f32 %v605, %v2348
      %v2350 = vpop.f32.mrf.mxu0
      %2351 = vmatprep.mubr.bf16.mxu0 %v1508
      %2352 = vmatmul.mubr.bf16.gmra.mxu0 %v1507
      %v2353 = vpop.f32.mrf.mxu0
      %v2354 = vadd.f32 %v605, %v2353
      %v2355 = vpop.f32.mrf.mxu0
      %v2356 = vpop.f32.mrf.mxu0
      %v2357 = vadd.f32 %v605, %v2356
      %v2358 = vpop.f32.mrf.mxu0
      %2359 = vmatprep.mubr.bf16.mxu0 %v1515
      %2360 = vmatmul.mubr.bf16.gmra.mxu0 %v1514
      %v2361 = vpop.f32.mrf.mxu0
      %v2362 = vadd.f32 %v605, %v2361
      %v2363 = vpop.f32.mrf.mxu0
      %v2364 = vpop.f32.mrf.mxu0
      %v2365 = vadd.f32 %v605, %v2364
      %v2366 = vpop.f32.mrf.mxu0
      %2367 = vmatprep.mubr.bf16.mxu0 %v1522
      %2368 = vmatmul.mubr.bf16.gmra.mxu0 %v1521
      %v2369 = vpop.f32.mrf.mxu0
      %v2370 = vadd.f32 %v605, %v2369
      %v2371 = vpop.f32.mrf.mxu0
      %v2372 = vpop.f32.mrf.mxu0
      %v2373 = vadd.f32 %v605, %v2372
      %v2374 = vpop.f32.mrf.mxu0
      %2375 = vmatprep.mubr.bf16.mxu0 %v1529
      %2376 = vmatmul.mubr.bf16.gmra.mxu0 %v1528
      %v2377 = vpop.f32.mrf.mxu0
      %v2378 = vadd.f32 %v605, %v2377
      %v2379 = vpop.f32.mrf.mxu0
      %v2380 = vpop.f32.mrf.mxu0
      %v2381 = vadd.f32 %v605, %v2380
      %v2382 = vpop.f32.mrf.mxu0
      %2383 = vdwg.mxu0
      %2384 = vmatprep.subr.bf16.mxu0 0
      %2385 = vmatpush1.bf16.msra.mxu0 %v2006
      %2386 = vmatprep.subr.bf16.mxu0 0
      %2387 = vmatpush1.bf16.msra.mxu0 %v2005
      %2388 = vmatprep.subr.bf16.mxu0 0
      %2389 = vmatpush1.bf16.msra.mxu0 %v2004
      %2390 = vmatprep.subr.bf16.mxu0 0
      %2391 = vmatpush1.bf16.msra.mxu0 %v2003
      %2392 = vmatprep.subr.bf16.mxu0 0
      %2393 = vmatpush1.bf16.msra.mxu0 %v2002
      %2394 = vmatprep.subr.bf16.mxu0 0
      %2395 = vmatpush1.bf16.msra.mxu0 %v2001
      %2396 = vmatprep.subr.bf16.mxu0 0
      %2397 = vmatpush1.bf16.msra.mxu0 %v2000
      %2398 = vmatprep.subr.bf16.mxu0 0
      %2399 = vmatpush1.bf16.msra.mxu0 %v1999
      %2400 = vmatprep.subr.bf16.mxu0 0
      %2401 = vmatpush2.bf16.msra.mxu0 %v2014
      %2402 = vmatprep.subr.bf16.mxu0 0
      %2403 = vmatpush2.bf16.msra.mxu0 %v2013
      %2404 = vmatprep.subr.bf16.mxu0 0
      %2405 = vmatpush2.bf16.msra.mxu0 %v2012
      %2406 = vmatprep.subr.bf16.mxu0 0
      %2407 = vmatpush2.bf16.msra.mxu0 %v2011
      %2408 = vmatprep.subr.bf16.mxu0 0
      %2409 = vmatpush2.bf16.msra.mxu0 %v2010
      %2410 = vmatprep.subr.bf16.mxu0 0
      %2411 = vmatpush2.bf16.msra.mxu0 %v2009
      %2412 = vmatprep.subr.bf16.mxu0 0
      %2413 = vmatpush2.bf16.msra.mxu0 %v2008
      %2414 = vmatprep.subr.bf16.mxu0 0
      %2415 = vmatpush2.bf16.msra.mxu0 %v2007
      %2416 = vmatprep.mubr.bf16.mxu0 %v1314
      %2417 = vmatmul.mubr.bf16.gmra.mxu0 %v1313
      %v2418 = vpop.f32.mrf.mxu0
      %v2419 = vadd.f32 %v2130, %v2418
      %v2420 = vpop.f32.mrf.mxu0
      %v2421 = vpop.f32.mrf.mxu0
      %v2422 = vadd.f32 %v2133, %v2421
      %v2423 = vpop.f32.mrf.mxu0
      %2424 = vmatprep.mubr.bf16.mxu0 %v1321
      %2425 = vmatmul.mubr.bf16.gmra.mxu0 %v1320
      %v2426 = vpop.f32.mrf.mxu0
      %v2427 = vadd.f32 %v2138, %v2426
      %v2428 = vpop.f32.mrf.mxu0
      %v2429 = vpop.f32.mrf.mxu0
      %v2430 = vadd.f32 %v2141, %v2429
      %v2431 = vpop.f32.mrf.mxu0
      %2432 = vmatprep.mubr.bf16.mxu0 %v1328
      %2433 = vmatmul.mubr.bf16.gmra.mxu0 %v1327
      %v2434 = vpop.f32.mrf.mxu0
      %v2435 = vadd.f32 %v2146, %v2434
      %v2436 = vpop.f32.mrf.mxu0
      %v2437 = vpop.f32.mrf.mxu0
      %v2438 = vadd.f32 %v2149, %v2437
      %v2439 = vpop.f32.mrf.mxu0
      %2440 = vmatprep.mubr.bf16.mxu0 %v1335
      %2441 = vmatmul.mubr.bf16.gmra.mxu0 %v1334
      %v2442 = vpop.f32.mrf.mxu0
      %v2443 = vadd.f32 %v2154, %v2442
      %v2444 = vpop.f32.mrf.mxu0
      %v2445 = vpop.f32.mrf.mxu0
      %v2446 = vadd.f32 %v2157, %v2445
      %v2447 = vpop.f32.mrf.mxu0
      %2448 = vmatprep.mubr.bf16.mxu0 %v1342
      %2449 = vmatmul.mubr.bf16.gmra.mxu0 %v1341
      %v2450 = vpop.f32.mrf.mxu0
      %v2451 = vadd.f32 %v2162, %v2450
      %v2452 = vpop.f32.mrf.mxu0
      %v2453 = vpop.f32.mrf.mxu0
      %v2454 = vadd.f32 %v2165, %v2453
      %v2455 = vpop.f32.mrf.mxu0
      %2456 = vmatprep.mubr.bf16.mxu0 %v1349
      %2457 = vmatmul.mubr.bf16.gmra.mxu0 %v1348
      %v2458 = vpop.f32.mrf.mxu0
      %v2459 = vadd.f32 %v2170, %v2458
      %v2460 = vpop.f32.mrf.mxu0
      %v2461 = vpop.f32.mrf.mxu0
      %v2462 = vadd.f32 %v2173, %v2461
      %v2463 = vpop.f32.mrf.mxu0
      %2464 = vmatprep.mubr.bf16.mxu0 %v1356
      %2465 = vmatmul.mubr.bf16.gmra.mxu0 %v1355
      %v2466 = vpop.f32.mrf.mxu0
      %v2467 = vadd.f32 %v2178, %v2466
      %v2468 = vpop.f32.mrf.mxu0
      %v2469 = vpop.f32.mrf.mxu0
      %v2470 = vadd.f32 %v2181, %v2469
      %v2471 = vpop.f32.mrf.mxu0
      %2472 = vmatprep.mubr.bf16.mxu0 %v1363
      %2473 = vmatmul.mubr.bf16.gmra.mxu0 %v1362
      %v2474 = vpop.f32.mrf.mxu0
      %v2475 = vadd.f32 %v2186, %v2474
      %v2476 = vpop.f32.mrf.mxu0
      %v2477 = vpop.f32.mrf.mxu0
      %v2478 = vadd.f32 %v2189, %v2477
      %v2479 = vpop.f32.mrf.mxu0
      %2480 = vmatprep.mubr.bf16.mxu0 %v1370
      %2481 = vmatmul.mubr.bf16.gmra.mxu0 %v1369
      %v2482 = vpop.f32.mrf.mxu0
      %v2483 = vadd.f32 %v2194, %v2482
      %v2484 = vpop.f32.mrf.mxu0
      %v2485 = vpop.f32.mrf.mxu0
      %v2486 = vadd.f32 %v2197, %v2485
      %v2487 = vpop.f32.mrf.mxu0
      %2488 = vmatprep.mubr.bf16.mxu0 %v1377
      %2489 = vmatmul.mubr.bf16.gmra.mxu0 %v1376
      %v2490 = vpop.f32.mrf.mxu0
      %v2491 = vadd.f32 %v2202, %v2490
      %v2492 = vpop.f32.mrf.mxu0
      %v2493 = vpop.f32.mrf.mxu0
      %v2494 = vadd.f32 %v2205, %v2493
      %v2495 = vpop.f32.mrf.mxu0
      %2496 = vmatprep.mubr.bf16.mxu0 %v1384
      %2497 = vmatmul.mubr.bf16.gmra.mxu0 %v1383
      %v2498 = vpop.f32.mrf.mxu0
      %v2499 = vadd.f32 %v2210, %v2498
      %v2500 = vpop.f32.mrf.mxu0
      %v2501 = vpop.f32.mrf.mxu0
      %v2502 = vadd.f32 %v2213, %v2501
      %v2503 = vpop.f32.mrf.mxu0
      %2504 = vmatprep.mubr.bf16.mxu0 %v1391
      %2505 = vmatmul.mubr.bf16.gmra.mxu0 %v1390
      %v2506 = vpop.f32.mrf.mxu0
      %v2507 = vadd.f32 %v2218, %v2506
      %v2508 = vpop.f32.mrf.mxu0
      %v2509 = vpop.f32.mrf.mxu0
      %v2510 = vadd.f32 %v2221, %v2509
      %v2511 = vpop.f32.mrf.mxu0
      %2512 = vmatprep.mubr.bf16.mxu0 %v1398
      %2513 = vmatmul.mubr.bf16.gmra.mxu0 %v1397
      %v2514 = vpop.f32.mrf.mxu0
      %v2515 = vadd.f32 %v2226, %v2514
      %v2516 = vpop.f32.mrf.mxu0
      %v2517 = vpop.f32.mrf.mxu0
      %v2518 = vadd.f32 %v2229, %v2517
      %v2519 = vpop.f32.mrf.mxu0
      %2520 = vmatprep.mubr.bf16.mxu0 %v1405
      %2521 = vmatmul.mubr.bf16.gmra.mxu0 %v1404
      %v2522 = vpop.f32.mrf.mxu0
      %v2523 = vadd.f32 %v2234, %v2522
      %v2524 = vpop.f32.mrf.mxu0
      %v2525 = vpop.f32.mrf.mxu0
      %v2526 = vadd.f32 %v2237, %v2525
      %v2527 = vpop.f32.mrf.mxu0
      %2528 = vmatprep.mubr.bf16.mxu0 %v1412
      %2529 = vmatmul.mubr.bf16.gmra.mxu0 %v1411
      %v2530 = vpop.f32.mrf.mxu0
      %v2531 = vadd.f32 %v2242, %v2530
      %v2532 = vpop.f32.mrf.mxu0
      %v2533 = vpop.f32.mrf.mxu0
      %v2534 = vadd.f32 %v2245, %v2533
      %v2535 = vpop.f32.mrf.mxu0
      %2536 = vmatprep.mubr.bf16.mxu0 %v1419
      %2537 = vmatmul.mubr.bf16.gmra.mxu0 %v1418
      %v2538 = vpop.f32.mrf.mxu0
      %v2539 = vadd.f32 %v2250, %v2538
      %v2540 = vpop.f32.mrf.mxu0
      %v2541 = vpop.f32.mrf.mxu0
      %v2542 = vadd.f32 %v2253, %v2541
      %v2543 = vpop.f32.mrf.mxu0
      %2544 = vmatprep.mubr.bf16.mxu0 %v1426
      %2545 = vmatmul.mubr.bf16.gmra.mxu0 %v1425
      %v2546 = vpop.f32.mrf.mxu0
      %v2547 = vadd.f32 %v2258, %v2546
      %v2548 = vpop.f32.mrf.mxu0
      %v2549 = vpop.f32.mrf.mxu0
      %v2550 = vadd.f32 %v2261, %v2549
      %v2551 = vpop.f32.mrf.mxu0
      %2552 = vmatprep.mubr.bf16.mxu0 %v1433
      %2553 = vmatmul.mubr.bf16.gmra.mxu0 %v1432
      %v2554 = vpop.f32.mrf.mxu0
      %v2555 = vadd.f32 %v2266, %v2554
      %v2556 = vpop.f32.mrf.mxu0
      %v2557 = vpop.f32.mrf.mxu0
      %v2558 = vadd.f32 %v2269, %v2557
      %v2559 = vpop.f32.mrf.mxu0
      %2560 = vmatprep.mubr.bf16.mxu0 %v1440
      %2561 = vmatmul.mubr.bf16.gmra.mxu0 %v1439
      %v2562 = vpop.f32.mrf.mxu0
      %v2563 = vadd.f32 %v2274, %v2562
      %v2564 = vpop.f32.mrf.mxu0
      %v2565 = vpop.f32.mrf.mxu0
      %v2566 = vadd.f32 %v2277, %v2565
      %v2567 = vpop.f32.mrf.mxu0
      %2568 = vmatprep.mubr.bf16.mxu0 %v1447
      %2569 = vmatmul.mubr.bf16.gmra.mxu0 %v1446
      %v2570 = vpop.f32.mrf.mxu0
      %v2571 = vadd.f32 %v2282, %v2570
      %v2572 = vpop.f32.mrf.mxu0
      %v2573 = vpop.f32.mrf.mxu0
      %v2574 = vadd.f32 %v2285, %v2573
      %v2575 = vpop.f32.mrf.mxu0
      %2576 = vmatprep.mubr.bf16.mxu0 %v1454
      %2577 = vmatmul.mubr.bf16.gmra.mxu0 %v1453
      %v2578 = vpop.f32.mrf.mxu0
      %v2579 = vadd.f32 %v2290, %v2578
      %v2580 = vpop.f32.mrf.mxu0
      %v2581 = vpop.f32.mrf.mxu0
      %v2582 = vadd.f32 %v2293, %v2581
      %v2583 = vpop.f32.mrf.mxu0
      %2584 = vmatprep.mubr.bf16.mxu0 %v1461
      %2585 = vmatmul.mubr.bf16.gmra.mxu0 %v1460
      %v2586 = vpop.f32.mrf.mxu0
      %v2587 = vadd.f32 %v2298, %v2586
      %v2588 = vpop.f32.mrf.mxu0
      %v2589 = vpop.f32.mrf.mxu0
      %v2590 = vadd.f32 %v2301, %v2589
      %v2591 = vpop.f32.mrf.mxu0
      %2592 = vmatprep.mubr.bf16.mxu0 %v1468
      %2593 = vmatmul.mubr.bf16.gmra.mxu0 %v1467
      %v2594 = vpop.f32.mrf.mxu0
      %v2595 = vadd.f32 %v2306, %v2594
      %v2596 = vpop.f32.mrf.mxu0
      %v2597 = vpop.f32.mrf.mxu0
      %v2598 = vadd.f32 %v2309, %v2597
      %v2599 = vpop.f32.mrf.mxu0
      %2600 = vmatprep.mubr.bf16.mxu0 %v1475
      %2601 = vmatmul.mubr.bf16.gmra.mxu0 %v1474
      %v2602 = vpop.f32.mrf.mxu0
      %v2603 = vadd.f32 %v2314, %v2602
      %v2604 = vpop.f32.mrf.mxu0
      %v2605 = vpop.f32.mrf.mxu0
      %v2606 = vadd.f32 %v2317, %v2605
      %v2607 = vpop.f32.mrf.mxu0
      %2608 = vmatprep.mubr.bf16.mxu0 %v1482
      %2609 = vmatmul.mubr.bf16.gmra.mxu0 %v1481
      %v2610 = vpop.f32.mrf.mxu0
      %v2611 = vadd.f32 %v2322, %v2610
      %v2612 = vpop.f32.mrf.mxu0
      %v2613 = vpop.f32.mrf.mxu0
      %v2614 = vadd.f32 %v2325, %v2613
      %v2615 = vpop.f32.mrf.mxu0
      %2616 = vmatprep.mubr.bf16.mxu0 %v1489
      %2617 = vmatmul.mubr.bf16.gmra.mxu0 %v1488
      %v2618 = vpop.f32.mrf.mxu0
      %v2619 = vadd.f32 %v2330, %v2618
      %v2620 = vpop.f32.mrf.mxu0
      %v2621 = vpop.f32.mrf.mxu0
      %v2622 = vadd.f32 %v2333, %v2621
      %v2623 = vpop.f32.mrf.mxu0
      %2624 = vmatprep.mubr.bf16.mxu0 %v1496
      %2625 = vmatmul.mubr.bf16.gmra.mxu0 %v1495
      %v2626 = vpop.f32.mrf.mxu0
      %v2627 = vadd.f32 %v2338, %v2626
      %v2628 = vpop.f32.mrf.mxu0
      %v2629 = vpop.f32.mrf.mxu0
      %v2630 = vadd.f32 %v2341, %v2629
      %v2631 = vpop.f32.mrf.mxu0
      %2632 = vmatprep.mubr.bf16.mxu0 %v1503
      %2633 = vmatmul.mubr.bf16.gmra.mxu0 %v1502
      %v2634 = vpop.f32.mrf.mxu0
      %v2635 = vadd.f32 %v2346, %v2634
      %v2636 = vpop.f32.mrf.mxu0
      %v2637 = vpop.f32.mrf.mxu0
      %v2638 = vadd.f32 %v2349, %v2637
      %v2639 = vpop.f32.mrf.mxu0
      %2640 = vmatprep.mubr.bf16.mxu0 %v1510
      %2641 = vmatmul.mubr.bf16.gmra.mxu0 %v1509
      %v2642 = vpop.f32.mrf.mxu0
      %v2643 = vadd.f32 %v2354, %v2642
      %v2644 = vpop.f32.mrf.mxu0
      %v2645 = vpop.f32.mrf.mxu0
      %v2646 = vadd.f32 %v2357, %v2645
      %v2647 = vpop.f32.mrf.mxu0
      %2648 = vmatprep.mubr.bf16.mxu0 %v1517
      %2649 = vmatmul.mubr.bf16.gmra.mxu0 %v1516
      %v2650 = vpop.f32.mrf.mxu0
      %v2651 = vadd.f32 %v2362, %v2650
      %v2652 = vpop.f32.mrf.mxu0
      %v2653 = vpop.f32.mrf.mxu0
      %v2654 = vadd.f32 %v2365, %v2653
      %v2655 = vpop.f32.mrf.mxu0
      %2656 = vmatprep.mubr.bf16.mxu0 %v1524
      %2657 = vmatmul.mubr.bf16.gmra.mxu0 %v1523
      %v2658 = vpop.f32.mrf.mxu0
      %v2659 = vadd.f32 %v2370, %v2658
      %v2660 = vpop.f32.mrf.mxu0
      %v2661 = vpop.f32.mrf.mxu0
      %v2662 = vadd.f32 %v2373, %v2661
      %v2663 = vpop.f32.mrf.mxu0
      %2664 = vmatprep.mubr.bf16.mxu0 %v1531
      %2665 = vmatmul.mubr.bf16.gmra.mxu0 %v1530
      %v2666 = vpop.f32.mrf.mxu0
      %v2667 = vadd.f32 %v2378, %v2666
      %v2668 = vpop.f32.mrf.mxu0
      %v2669 = vpop.f32.mrf.mxu0
      %v2670 = vadd.f32 %v2381, %v2669
      %v2671 = vpop.f32.mrf.mxu0
      %2672 = vdwg.mxu0
      %2673 = vmatprep.subr.bf16.mxu0 0
      %2674 = vmatpush1.bf16.msra.mxu0 %v2022
      %2675 = vmatprep.subr.bf16.mxu0 0
      %2676 = vmatpush1.bf16.msra.mxu0 %v2021
      %2677 = vmatprep.subr.bf16.mxu0 0
      %2678 = vmatpush1.bf16.msra.mxu0 %v2020
      %2679 = vmatprep.subr.bf16.mxu0 0
      %2680 = vmatpush1.bf16.msra.mxu0 %v2019
      %2681 = vmatprep.subr.bf16.mxu0 0
      %2682 = vmatpush1.bf16.msra.mxu0 %v2018
      %2683 = vmatprep.subr.bf16.mxu0 0
      %2684 = vmatpush1.bf16.msra.mxu0 %v2017
      %2685 = vmatprep.subr.bf16.mxu0 0
      %2686 = vmatpush1.bf16.msra.mxu0 %v2016
      %2687 = vmatprep.subr.bf16.mxu0 0
      %2688 = vmatpush1.bf16.msra.mxu0 %v2015
      %2689 = vmatprep.subr.bf16.mxu0 0
      %2690 = vmatpush2.bf16.msra.mxu0 %v2030
      %2691 = vmatprep.subr.bf16.mxu0 0
      %2692 = vmatpush2.bf16.msra.mxu0 %v2029
      %2693 = vmatprep.subr.bf16.mxu0 0
      %2694 = vmatpush2.bf16.msra.mxu0 %v2028
      %2695 = vmatprep.subr.bf16.mxu0 0
      %2696 = vmatpush2.bf16.msra.mxu0 %v2027
      %2697 = vmatprep.subr.bf16.mxu0 0
      %2698 = vmatpush2.bf16.msra.mxu0 %v2026
      %2699 = vmatprep.subr.bf16.mxu0 0
      %2700 = vmatpush2.bf16.msra.mxu0 %v2025
      %2701 = vmatprep.subr.bf16.mxu0 0
      %2702 = vmatpush2.bf16.msra.mxu0 %v2024
      %2703 = vmatprep.subr.bf16.mxu0 0
      %2704 = vmatpush2.bf16.msra.mxu0 %v2023
      %2705 = vmatprep.mubr.bf16.mxu0 %v1316
      %2706 = vmatmul.mubr.bf16.gmra.mxu0 %v1315
      %v2707 = vpop.f32.mrf.mxu0
      %v2708 = vadd.f32 %v2419, %v2707
      %v2709 = vpop.f32.mrf.mxu0
      %v2710 = vpop.f32.mrf.mxu0
      %v2711 = vadd.f32 %v2422, %v2710
      %v2712 = vpop.f32.mrf.mxu0
      %2713 = vmatprep.mubr.bf16.mxu0 %v1323
      %2714 = vmatmul.mubr.bf16.gmra.mxu0 %v1322
      %v2715 = vpop.f32.mrf.mxu0
      %v2716 = vadd.f32 %v2427, %v2715
      %v2717 = vpop.f32.mrf.mxu0
      %v2718 = vpop.f32.mrf.mxu0
      %v2719 = vadd.f32 %v2430, %v2718
      %v2720 = vpop.f32.mrf.mxu0
      %2721 = vmatprep.mubr.bf16.mxu0 %v1330
      %2722 = vmatmul.mubr.bf16.gmra.mxu0 %v1329
      %v2723 = vpop.f32.mrf.mxu0
      %v2724 = vadd.f32 %v2435, %v2723
      %v2725 = vpop.f32.mrf.mxu0
      %v2726 = vpop.f32.mrf.mxu0
      %v2727 = vadd.f32 %v2438, %v2726
      %v2728 = vpop.f32.mrf.mxu0
      %2729 = vmatprep.mubr.bf16.mxu0 %v1337
      %2730 = vmatmul.mubr.bf16.gmra.mxu0 %v1336
      %v2731 = vpop.f32.mrf.mxu0
      %v2732 = vadd.f32 %v2443, %v2731
      %v2733 = vpop.f32.mrf.mxu0
      %v2734 = vpop.f32.mrf.mxu0
      %v2735 = vadd.f32 %v2446, %v2734
      %v2736 = vpop.f32.mrf.mxu0
      %2737 = vmatprep.mubr.bf16.mxu0 %v1344
      %2738 = vmatmul.mubr.bf16.gmra.mxu0 %v1343
      %v2739 = vpop.f32.mrf.mxu0
      %v2740 = vadd.f32 %v2451, %v2739
      %v2741 = vpop.f32.mrf.mxu0
      %v2742 = vpop.f32.mrf.mxu0
      %v2743 = vadd.f32 %v2454, %v2742
      %v2744 = vpop.f32.mrf.mxu0
      %2745 = vmatprep.mubr.bf16.mxu0 %v1351
      %2746 = vmatmul.mubr.bf16.gmra.mxu0 %v1350
      %v2747 = vpop.f32.mrf.mxu0
      %v2748 = vadd.f32 %v2459, %v2747
      %v2749 = vpop.f32.mrf.mxu0
      %v2750 = vpop.f32.mrf.mxu0
      %v2751 = vadd.f32 %v2462, %v2750
      %v2752 = vpop.f32.mrf.mxu0
      %2753 = vmatprep.mubr.bf16.mxu0 %v1358
      %2754 = vmatmul.mubr.bf16.gmra.mxu0 %v1357
      %v2755 = vpop.f32.mrf.mxu0
      %v2756 = vadd.f32 %v2467, %v2755
      %v2757 = vpop.f32.mrf.mxu0
      %v2758 = vpop.f32.mrf.mxu0
      %v2759 = vadd.f32 %v2470, %v2758
      %v2760 = vpop.f32.mrf.mxu0
      %2761 = vmatprep.mubr.bf16.mxu0 %v1365
      %2762 = vmatmul.mubr.bf16.gmra.mxu0 %v1364
      %v2763 = vpop.f32.mrf.mxu0
      %v2764 = vadd.f32 %v2475, %v2763
      %v2765 = vpop.f32.mrf.mxu0
      %v2766 = vpop.f32.mrf.mxu0
      %v2767 = vadd.f32 %v2478, %v2766
      %v2768 = vpop.f32.mrf.mxu0
      %2769 = vmatprep.mubr.bf16.mxu0 %v1372
      %2770 = vmatmul.mubr.bf16.gmra.mxu0 %v1371
      %v2771 = vpop.f32.mrf.mxu0
      %v2772 = vadd.f32 %v2483, %v2771
      %v2773 = vpop.f32.mrf.mxu0
      %v2774 = vpop.f32.mrf.mxu0
      %v2775 = vadd.f32 %v2486, %v2774
      %v2776 = vpop.f32.mrf.mxu0
      %2777 = vmatprep.mubr.bf16.mxu0 %v1379
      %2778 = vmatmul.mubr.bf16.gmra.mxu0 %v1378
      %v2779 = vpop.f32.mrf.mxu0
      %v2780 = vadd.f32 %v2491, %v2779
      %v2781 = vpop.f32.mrf.mxu0
      %v2782 = vpop.f32.mrf.mxu0
      %v2783 = vadd.f32 %v2494, %v2782
      %v2784 = vpop.f32.mrf.mxu0
      %2785 = vmatprep.mubr.bf16.mxu0 %v1386
      %2786 = vmatmul.mubr.bf16.gmra.mxu0 %v1385
      %v2787 = vpop.f32.mrf.mxu0
      %v2788 = vadd.f32 %v2499, %v2787
      %v2789 = vpop.f32.mrf.mxu0
      %v2790 = vpop.f32.mrf.mxu0
      %v2791 = vadd.f32 %v2502, %v2790
      %v2792 = vpop.f32.mrf.mxu0
      %2793 = vmatprep.mubr.bf16.mxu0 %v1393
      %2794 = vmatmul.mubr.bf16.gmra.mxu0 %v1392
      %v2795 = vpop.f32.mrf.mxu0
      %v2796 = vadd.f32 %v2507, %v2795
      %v2797 = vpop.f32.mrf.mxu0
      %v2798 = vpop.f32.mrf.mxu0
      %v2799 = vadd.f32 %v2510, %v2798
      %v2800 = vpop.f32.mrf.mxu0
      %2801 = vmatprep.mubr.bf16.mxu0 %v1400
      %2802 = vmatmul.mubr.bf16.gmra.mxu0 %v1399
      %v2803 = vpop.f32.mrf.mxu0
      %v2804 = vadd.f32 %v2515, %v2803
      %v2805 = vpop.f32.mrf.mxu0
      %v2806 = vpop.f32.mrf.mxu0
      %v2807 = vadd.f32 %v2518, %v2806
      %v2808 = vpop.f32.mrf.mxu0
      %2809 = vmatprep.mubr.bf16.mxu0 %v1407
      %2810 = vmatmul.mubr.bf16.gmra.mxu0 %v1406
      %v2811 = vpop.f32.mrf.mxu0
      %v2812 = vadd.f32 %v2523, %v2811
      %v2813 = vpop.f32.mrf.mxu0
      %v2814 = vpop.f32.mrf.mxu0
      %v2815 = vadd.f32 %v2526, %v2814
      %v2816 = vpop.f32.mrf.mxu0
      %2817 = vmatprep.mubr.bf16.mxu0 %v1414
      %2818 = vmatmul.mubr.bf16.gmra.mxu0 %v1413
      %v2819 = vpop.f32.mrf.mxu0
      %v2820 = vadd.f32 %v2531, %v2819
      %v2821 = vpop.f32.mrf.mxu0
      %v2822 = vpop.f32.mrf.mxu0
      %v2823 = vadd.f32 %v2534, %v2822
      %v2824 = vpop.f32.mrf.mxu0
      %2825 = vmatprep.mubr.bf16.mxu0 %v1421
      %2826 = vmatmul.mubr.bf16.gmra.mxu0 %v1420
      %v2827 = vpop.f32.mrf.mxu0
      %v2828 = vadd.f32 %v2539, %v2827
      %v2829 = vpop.f32.mrf.mxu0
      %v2830 = vpop.f32.mrf.mxu0
      %v2831 = vadd.f32 %v2542, %v2830
      %v2832 = vpop.f32.mrf.mxu0
      %2833 = vmatprep.mubr.bf16.mxu0 %v1428
      %2834 = vmatmul.mubr.bf16.gmra.mxu0 %v1427
      %v2835 = vpop.f32.mrf.mxu0
      %v2836 = vadd.f32 %v2547, %v2835
      %v2837 = vpop.f32.mrf.mxu0
      %v2838 = vpop.f32.mrf.mxu0
      %v2839 = vadd.f32 %v2550, %v2838
      %v2840 = vpop.f32.mrf.mxu0
      %2841 = vmatprep.mubr.bf16.mxu0 %v1435
      %2842 = vmatmul.mubr.bf16.gmra.mxu0 %v1434
      %v2843 = vpop.f32.mrf.mxu0
      %v2844 = vadd.f32 %v2555, %v2843
      %v2845 = vpop.f32.mrf.mxu0
      %v2846 = vpop.f32.mrf.mxu0
      %v2847 = vadd.f32 %v2558, %v2846
      %v2848 = vpop.f32.mrf.mxu0
      %2849 = vmatprep.mubr.bf16.mxu0 %v1442
      %2850 = vmatmul.mubr.bf16.gmra.mxu0 %v1441
      %v2851 = vpop.f32.mrf.mxu0
      %v2852 = vadd.f32 %v2563, %v2851
      %v2853 = vpop.f32.mrf.mxu0
      %v2854 = vpop.f32.mrf.mxu0
      %v2855 = vadd.f32 %v2566, %v2854
      %v2856 = vpop.f32.mrf.mxu0
      %2857 = vmatprep.mubr.bf16.mxu0 %v1449
      %2858 = vmatmul.mubr.bf16.gmra.mxu0 %v1448
      %v2859 = vpop.f32.mrf.mxu0
      %v2860 = vadd.f32 %v2571, %v2859
      %v2861 = vpop.f32.mrf.mxu0
      %v2862 = vpop.f32.mrf.mxu0
      %v2863 = vadd.f32 %v2574, %v2862
      %v2864 = vpop.f32.mrf.mxu0
      %2865 = vmatprep.mubr.bf16.mxu0 %v1456
      %2866 = vmatmul.mubr.bf16.gmra.mxu0 %v1455
      %v2867 = vpop.f32.mrf.mxu0
      %v2868 = vadd.f32 %v2579, %v2867
      %v2869 = vpop.f32.mrf.mxu0
      %v2870 = vpop.f32.mrf.mxu0
      %v2871 = vadd.f32 %v2582, %v2870
      %v2872 = vpop.f32.mrf.mxu0
      %2873 = vmatprep.mubr.bf16.mxu0 %v1463
      %2874 = vmatmul.mubr.bf16.gmra.mxu0 %v1462
      %v2875 = vpop.f32.mrf.mxu0
      %v2876 = vadd.f32 %v2587, %v2875
      %v2877 = vpop.f32.mrf.mxu0
      %v2878 = vpop.f32.mrf.mxu0
      %v2879 = vadd.f32 %v2590, %v2878
      %v2880 = vpop.f32.mrf.mxu0
      %2881 = vmatprep.mubr.bf16.mxu0 %v1470
      %2882 = vmatmul.mubr.bf16.gmra.mxu0 %v1469
      %v2883 = vpop.f32.mrf.mxu0
      %v2884 = vadd.f32 %v2595, %v2883
      %v2885 = vpop.f32.mrf.mxu0
      %v2886 = vpop.f32.mrf.mxu0
      %v2887 = vadd.f32 %v2598, %v2886
      %v2888 = vpop.f32.mrf.mxu0
      %2889 = vmatprep.mubr.bf16.mxu0 %v1477
      %2890 = vmatmul.mubr.bf16.gmra.mxu0 %v1476
      %v2891 = vpop.f32.mrf.mxu0
      %v2892 = vadd.f32 %v2603, %v2891
      %v2893 = vpop.f32.mrf.mxu0
      %v2894 = vpop.f32.mrf.mxu0
      %v2895 = vadd.f32 %v2606, %v2894
      %v2896 = vpop.f32.mrf.mxu0
      %2897 = vmatprep.mubr.bf16.mxu0 %v1484
      %2898 = vmatmul.mubr.bf16.gmra.mxu0 %v1483
      %v2899 = vpop.f32.mrf.mxu0
      %v2900 = vadd.f32 %v2611, %v2899
      %v2901 = vpop.f32.mrf.mxu0
      %v2902 = vpop.f32.mrf.mxu0
      %v2903 = vadd.f32 %v2614, %v2902
      %v2904 = vpop.f32.mrf.mxu0
      %2905 = vmatprep.mubr.bf16.mxu0 %v1491
      %2906 = vmatmul.mubr.bf16.gmra.mxu0 %v1490
      %v2907 = vpop.f32.mrf.mxu0
      %v2908 = vadd.f32 %v2619, %v2907
      %v2909 = vpop.f32.mrf.mxu0
      %v2910 = vpop.f32.mrf.mxu0
      %v2911 = vadd.f32 %v2622, %v2910
      %v2912 = vpop.f32.mrf.mxu0
      %2913 = vmatprep.mubr.bf16.mxu0 %v1498
      %2914 = vmatmul.mubr.bf16.gmra.mxu0 %v1497
      %v2915 = vpop.f32.mrf.mxu0
      %v2916 = vadd.f32 %v2627, %v2915
      %v2917 = vpop.f32.mrf.mxu0
      %v2918 = vpop.f32.mrf.mxu0
      %v2919 = vadd.f32 %v2630, %v2918
      %v2920 = vpop.f32.mrf.mxu0
      %2921 = vmatprep.mubr.bf16.mxu0 %v1505
      %2922 = vmatmul.mubr.bf16.gmra.mxu0 %v1504
      %v2923 = vpop.f32.mrf.mxu0
      %v2924 = vadd.f32 %v2635, %v2923
      %v2925 = vpop.f32.mrf.mxu0
      %v2926 = vpop.f32.mrf.mxu0
      %v2927 = vadd.f32 %v2638, %v2926
      %v2928 = vpop.f32.mrf.mxu0
      %2929 = vmatprep.mubr.bf16.mxu0 %v1512
      %2930 = vmatmul.mubr.bf16.gmra.mxu0 %v1511
      %v2931 = vpop.f32.mrf.mxu0
      %v2932 = vadd.f32 %v2643, %v2931
      %v2933 = vpop.f32.mrf.mxu0
      %v2934 = vpop.f32.mrf.mxu0
      %v2935 = vadd.f32 %v2646, %v2934
      %v2936 = vpop.f32.mrf.mxu0
      %2937 = vmatprep.mubr.bf16.mxu0 %v1519
      %2938 = vmatmul.mubr.bf16.gmra.mxu0 %v1518
      %v2939 = vpop.f32.mrf.mxu0
      %v2940 = vadd.f32 %v2651, %v2939
      %v2941 = vpop.f32.mrf.mxu0
      %v2942 = vpop.f32.mrf.mxu0
      %v2943 = vadd.f32 %v2654, %v2942
      %v2944 = vpop.f32.mrf.mxu0
      %2945 = vmatprep.mubr.bf16.mxu0 %v1526
      %2946 = vmatmul.mubr.bf16.gmra.mxu0 %v1525
      %v2947 = vpop.f32.mrf.mxu0
      %v2948 = vadd.f32 %v2659, %v2947
      %v2949 = vpop.f32.mrf.mxu0
      %v2950 = vpop.f32.mrf.mxu0
      %v2951 = vadd.f32 %v2662, %v2950
      %v2952 = vpop.f32.mrf.mxu0
      %2953 = vmatprep.mubr.bf16.mxu0 %v1533
      %2954 = vmatmul.mubr.bf16.gmra.mxu0 %v1532
      %v2955 = vpop.f32.mrf.mxu0
      %v2956 = vadd.f32 %v2667, %v2955
      %v2957 = vpop.f32.mrf.mxu0
      %v2958 = vpop.f32.mrf.mxu0
      %v2959 = vadd.f32 %v2670, %v2958
      %v2960 = vpop.f32.mrf.mxu0
      %2961 = vdwg.mxu0
      %2962 = vmatprep.subr.bf16.mxu0 0
      %2963 = vmatpush1.bf16.msra.mxu0 %v2038
      %2964 = vmatprep.subr.bf16.mxu0 0
      %2965 = vmatpush1.bf16.msra.mxu0 %v2037
      %2966 = vmatprep.subr.bf16.mxu0 0
      %2967 = vmatpush1.bf16.msra.mxu0 %v2036
      %2968 = vmatprep.subr.bf16.mxu0 0
      %2969 = vmatpush1.bf16.msra.mxu0 %v2035
      %2970 = vmatprep.subr.bf16.mxu0 0
      %2971 = vmatpush1.bf16.msra.mxu0 %v2034
      %2972 = vmatprep.subr.bf16.mxu0 0
      %2973 = vmatpush1.bf16.msra.mxu0 %v2033
      %2974 = vmatprep.subr.bf16.mxu0 0
      %2975 = vmatpush1.bf16.msra.mxu0 %v2032
      %2976 = vmatprep.subr.bf16.mxu0 0
      %2977 = vmatpush1.bf16.msra.mxu0 %v2031
      %2978 = vmatprep.subr.bf16.mxu0 0
      %2979 = vmatpush2.bf16.msra.mxu0 0
      %2980 = vmatprep.subr.bf16.mxu0 0
      %2981 = vmatpush2.bf16.msra.mxu0 0
      %2982 = vmatprep.subr.bf16.mxu0 0
      %2983 = vmatpush2.bf16.msra.mxu0 0
      %2984 = vmatprep.subr.bf16.mxu0 0
      %2985 = vmatpush2.bf16.msra.mxu0 0
      %2986 = vmatprep.subr.bf16.mxu0 0
      %2987 = vmatpush2.bf16.msra.mxu0 0
      %2988 = vmatprep.subr.bf16.mxu0 0
      %2989 = vmatpush2.bf16.msra.mxu0 0
      %2990 = vmatprep.subr.bf16.mxu0 0
      %2991 = vmatpush2.bf16.msra.mxu0 0
      %2992 = vmatprep.subr.bf16.mxu0 0
      %2993 = vmatpush2.bf16.msra.mxu0 0
      %2994 = vmatprep.mubr.bf16.mxu0 0
      %2995 = vmatmul.mubr.bf16.gmra.mxu0 %v1317
      %v2996 = vpop.f32.mrf.mxu0
      %v2997 = vadd.f32 %v2708, %v2996
      %v2998 = vpop.f32.mrf.mxu0
      %v2999 = vpop.f32.mrf.mxu0
      %v3000 = vadd.f32 %v2711, %v2999
      %v3001 = vpop.f32.mrf.mxu0
      %3002 = vmatprep.mubr.bf16.mxu0 0
      %3003 = vmatmul.mubr.bf16.gmra.mxu0 %v1324
      %v3004 = vpop.f32.mrf.mxu0
      %v3005 = vadd.f32 %v2716, %v3004
      %v3006 = vpop.f32.mrf.mxu0
      %v3007 = vpop.f32.mrf.mxu0
      %v3008 = vadd.f32 %v2719, %v3007
      %v3009 = vpop.f32.mrf.mxu0
      %3010 = vmatprep.mubr.bf16.mxu0 0
      %3011 = vmatmul.mubr.bf16.gmra.mxu0 %v1331
      %v3012 = vpop.f32.mrf.mxu0
      %v3013 = vadd.f32 %v2724, %v3012
      %v3014 = vpop.f32.mrf.mxu0
      %v3015 = vpop.f32.mrf.mxu0
      %v3016 = vadd.f32 %v2727, %v3015
      %v3017 = vpop.f32.mrf.mxu0
      %3018 = vmatprep.mubr.bf16.mxu0 0
      %3019 = vmatmul.mubr.bf16.gmra.mxu0 %v1338
      %v3020 = vpop.f32.mrf.mxu0
      %v3021 = vadd.f32 %v2732, %v3020
      %v3022 = vpop.f32.mrf.mxu0
      %v3023 = vpop.f32.mrf.mxu0
      %v3024 = vadd.f32 %v2735, %v3023
      %v3025 = vpop.f32.mrf.mxu0
      %3026 = vmatprep.mubr.bf16.mxu0 0
      %3027 = vmatmul.mubr.bf16.gmra.mxu0 %v1345
      %v3028 = vpop.f32.mrf.mxu0
      %v3029 = vadd.f32 %v2740, %v3028
      %v3030 = vpop.f32.mrf.mxu0
      %v3031 = vpop.f32.mrf.mxu0
      %v3032 = vadd.f32 %v2743, %v3031
      %v3033 = vpop.f32.mrf.mxu0
      %3034 = vmatprep.mubr.bf16.mxu0 0
      %3035 = vmatmul.mubr.bf16.gmra.mxu0 %v1352
      %v3036 = vpop.f32.mrf.mxu0
      %v3037 = vadd.f32 %v2748, %v3036
      %v3038 = vpop.f32.mrf.mxu0
      %v3039 = vpop.f32.mrf.mxu0
      %v3040 = vadd.f32 %v2751, %v3039
      %v3041 = vpop.f32.mrf.mxu0
      %3042 = vmatprep.mubr.bf16.mxu0 0
      %3043 = vmatmul.mubr.bf16.gmra.mxu0 %v1359
      %v3044 = vpop.f32.mrf.mxu0
      %v3045 = vadd.f32 %v2756, %v3044
      %v3046 = vpop.f32.mrf.mxu0
      %v3047 = vpop.f32.mrf.mxu0
      %v3048 = vadd.f32 %v2759, %v3047
      %v3049 = vpop.f32.mrf.mxu0
      %3050 = vmatprep.mubr.bf16.mxu0 0
      %3051 = vmatmul.mubr.bf16.gmra.mxu0 %v1366
      %v3052 = vpop.f32.mrf.mxu0
      %v3053 = vadd.f32 %v2764, %v3052
      %v3054 = vpop.f32.mrf.mxu0
      %v3055 = vpop.f32.mrf.mxu0
      %v3056 = vadd.f32 %v2767, %v3055
      %v3057 = vpop.f32.mrf.mxu0
      %3058 = vmatprep.mubr.bf16.mxu0 0
      %3059 = vmatmul.mubr.bf16.gmra.mxu0 %v1373
      %v3060 = vpop.f32.mrf.mxu0
      %v3061 = vadd.f32 %v2772, %v3060
      %v3062 = vpop.f32.mrf.mxu0
      %v3063 = vpop.f32.mrf.mxu0
      %v3064 = vadd.f32 %v2775, %v3063
      %v3065 = vpop.f32.mrf.mxu0
      %3066 = vmatprep.mubr.bf16.mxu0 0
      %3067 = vmatmul.mubr.bf16.gmra.mxu0 %v1380
      %v3068 = vpop.f32.mrf.mxu0
      %v3069 = vadd.f32 %v2780, %v3068
      %v3070 = vpop.f32.mrf.mxu0
      %v3071 = vpop.f32.mrf.mxu0
      %v3072 = vadd.f32 %v2783, %v3071
      %v3073 = vpop.f32.mrf.mxu0
      %3074 = vmatprep.mubr.bf16.mxu0 0
      %3075 = vmatmul.mubr.bf16.gmra.mxu0 %v1387
      %v3076 = vpop.f32.mrf.mxu0
      %v3077 = vadd.f32 %v2788, %v3076
      %v3078 = vpop.f32.mrf.mxu0
      %v3079 = vpop.f32.mrf.mxu0
      %v3080 = vadd.f32 %v2791, %v3079
      %v3081 = vpop.f32.mrf.mxu0
      %3082 = vmatprep.mubr.bf16.mxu0 0
      %3083 = vmatmul.mubr.bf16.gmra.mxu0 %v1394
      %v3084 = vpop.f32.mrf.mxu0
      %v3085 = vadd.f32 %v2796, %v3084
      %v3086 = vpop.f32.mrf.mxu0
      %v3087 = vpop.f32.mrf.mxu0
      %v3088 = vadd.f32 %v2799, %v3087
      %v3089 = vpop.f32.mrf.mxu0
      %3090 = vmatprep.mubr.bf16.mxu0 0
      %3091 = vmatmul.mubr.bf16.gmra.mxu0 %v1401
      %v3092 = vpop.f32.mrf.mxu0
      %v3093 = vadd.f32 %v2804, %v3092
      %v3094 = vpop.f32.mrf.mxu0
      %v3095 = vpop.f32.mrf.mxu0
      %v3096 = vadd.f32 %v2807, %v3095
      %v3097 = vpop.f32.mrf.mxu0
      %3098 = vmatprep.mubr.bf16.mxu0 0
      %3099 = vmatmul.mubr.bf16.gmra.mxu0 %v1408
      %v3100 = vpop.f32.mrf.mxu0
      %v3101 = vadd.f32 %v2812, %v3100
      %v3102 = vpop.f32.mrf.mxu0
      %v3103 = vpop.f32.mrf.mxu0
      %v3104 = vadd.f32 %v2815, %v3103
      %v3105 = vpop.f32.mrf.mxu0
      %3106 = vmatprep.mubr.bf16.mxu0 0
      %3107 = vmatmul.mubr.bf16.gmra.mxu0 %v1415
      %v3108 = vpop.f32.mrf.mxu0
      %v3109 = vadd.f32 %v2820, %v3108
      %v3110 = vpop.f32.mrf.mxu0
      %v3111 = vpop.f32.mrf.mxu0
      %v3112 = vadd.f32 %v2823, %v3111
      %v3113 = vpop.f32.mrf.mxu0
      %3114 = vmatprep.mubr.bf16.mxu0 0
      %3115 = vmatmul.mubr.bf16.gmra.mxu0 %v1422
      %v3116 = vpop.f32.mrf.mxu0
      %v3117 = vadd.f32 %v2828, %v3116
      %v3118 = vpop.f32.mrf.mxu0
      %v3119 = vpop.f32.mrf.mxu0
      %v3120 = vadd.f32 %v2831, %v3119
      %v3121 = vpop.f32.mrf.mxu0
      %3122 = vmatprep.mubr.bf16.mxu0 0
      %3123 = vmatmul.mubr.bf16.gmra.mxu0 %v1429
      %v3124 = vpop.f32.mrf.mxu0
      %v3125 = vadd.f32 %v2836, %v3124
      %v3126 = vpop.f32.mrf.mxu0
      %v3127 = vpop.f32.mrf.mxu0
      %v3128 = vadd.f32 %v2839, %v3127
      %v3129 = vpop.f32.mrf.mxu0
      %3130 = vmatprep.mubr.bf16.mxu0 0
      %3131 = vmatmul.mubr.bf16.gmra.mxu0 %v1436
      %v3132 = vpop.f32.mrf.mxu0
      %v3133 = vadd.f32 %v2844, %v3132
      %v3134 = vpop.f32.mrf.mxu0
      %v3135 = vpop.f32.mrf.mxu0
      %v3136 = vadd.f32 %v2847, %v3135
      %v3137 = vpop.f32.mrf.mxu0
      %3138 = vmatprep.mubr.bf16.mxu0 0
      %3139 = vmatmul.mubr.bf16.gmra.mxu0 %v1443
      %v3140 = vpop.f32.mrf.mxu0
      %v3141 = vadd.f32 %v2852, %v3140
      %v3142 = vpop.f32.mrf.mxu0
      %v3143 = vpop.f32.mrf.mxu0
      %v3144 = vadd.f32 %v2855, %v3143
      %v3145 = vpop.f32.mrf.mxu0
      %3146 = vmatprep.mubr.bf16.mxu0 0
      %3147 = vmatmul.mubr.bf16.gmra.mxu0 %v1450
      %v3148 = vpop.f32.mrf.mxu0
      %v3149 = vadd.f32 %v2860, %v3148
      %v3150 = vpop.f32.mrf.mxu0
      %v3151 = vpop.f32.mrf.mxu0
      %v3152 = vadd.f32 %v2863, %v3151
      %v3153 = vpop.f32.mrf.mxu0
      %3154 = vmatprep.mubr.bf16.mxu0 0
      %3155 = vmatmul.mubr.bf16.gmra.mxu0 %v1457
      %v3156 = vpop.f32.mrf.mxu0
      %v3157 = vadd.f32 %v2868, %v3156
      %v3158 = vpop.f32.mrf.mxu0
      %v3159 = vpop.f32.mrf.mxu0
      %v3160 = vadd.f32 %v2871, %v3159
      %v3161 = vpop.f32.mrf.mxu0
      %3162 = vmatprep.mubr.bf16.mxu0 0
      %3163 = vmatmul.mubr.bf16.gmra.mxu0 %v1464
      %v3164 = vpop.f32.mrf.mxu0
      %v3165 = vadd.f32 %v2876, %v3164
      %v3166 = vpop.f32.mrf.mxu0
      %v3167 = vpop.f32.mrf.mxu0
      %v3168 = vadd.f32 %v2879, %v3167
      %v3169 = vpop.f32.mrf.mxu0
      %3170 = vmatprep.mubr.bf16.mxu0 0
      %3171 = vmatmul.mubr.bf16.gmra.mxu0 %v1471
      %v3172 = vpop.f32.mrf.mxu0
      %v3173 = vadd.f32 %v2884, %v3172
      %v3174 = vpop.f32.mrf.mxu0
      %v3175 = vpop.f32.mrf.mxu0
      %v3176 = vadd.f32 %v2887, %v3175
      %v3177 = vpop.f32.mrf.mxu0
      %3178 = vmatprep.mubr.bf16.mxu0 0
      %3179 = vmatmul.mubr.bf16.gmra.mxu0 %v1478
      %v3180 = vpop.f32.mrf.mxu0
      %v3181 = vadd.f32 %v2892, %v3180
      %v3182 = vpop.f32.mrf.mxu0
      %v3183 = vpop.f32.mrf.mxu0
      %v3184 = vadd.f32 %v2895, %v3183
      %v3185 = vpop.f32.mrf.mxu0
      %3186 = vmatprep.mubr.bf16.mxu0 0
      %3187 = vmatmul.mubr.bf16.gmra.mxu0 %v1485
      %v3188 = vpop.f32.mrf.mxu0
      %v3189 = vadd.f32 %v2900, %v3188
      %v3190 = vpop.f32.mrf.mxu0
      %v3191 = vpop.f32.mrf.mxu0
      %v3192 = vadd.f32 %v2903, %v3191
      %v3193 = vpop.f32.mrf.mxu0
      %3194 = vmatprep.mubr.bf16.mxu0 0
      %3195 = vmatmul.mubr.bf16.gmra.mxu0 %v1492
      %v3196 = vpop.f32.mrf.mxu0
      %v3197 = vadd.f32 %v2908, %v3196
      %v3198 = vpop.f32.mrf.mxu0
      %v3199 = vpop.f32.mrf.mxu0
      %v3200 = vadd.f32 %v2911, %v3199
      %v3201 = vpop.f32.mrf.mxu0
      %3202 = vmatprep.mubr.bf16.mxu0 0
      %3203 = vmatmul.mubr.bf16.gmra.mxu0 %v1499
      %v3204 = vpop.f32.mrf.mxu0
      %v3205 = vadd.f32 %v2916, %v3204
      %v3206 = vpop.f32.mrf.mxu0
      %v3207 = vpop.f32.mrf.mxu0
      %v3208 = vadd.f32 %v2919, %v3207
      %v3209 = vpop.f32.mrf.mxu0
      %3210 = vmatprep.mubr.bf16.mxu0 0
      %3211 = vmatmul.mubr.bf16.gmra.mxu0 %v1506
      %v3212 = vpop.f32.mrf.mxu0
      %v3213 = vadd.f32 %v2924, %v3212
      %v3214 = vpop.f32.mrf.mxu0
      %v3215 = vpop.f32.mrf.mxu0
      %v3216 = vadd.f32 %v2927, %v3215
      %v3217 = vpop.f32.mrf.mxu0
      %3218 = vmatprep.mubr.bf16.mxu0 0
      %3219 = vmatmul.mubr.bf16.gmra.mxu0 %v1513
      %v3220 = vpop.f32.mrf.mxu0
      %v3221 = vadd.f32 %v2932, %v3220
      %v3222 = vpop.f32.mrf.mxu0
      %v3223 = vpop.f32.mrf.mxu0
      %v3224 = vadd.f32 %v2935, %v3223
      %v3225 = vpop.f32.mrf.mxu0
      %3226 = vmatprep.mubr.bf16.mxu0 0
      %3227 = vmatmul.mubr.bf16.gmra.mxu0 %v1520
      %v3228 = vpop.f32.mrf.mxu0
      %v3229 = vadd.f32 %v2940, %v3228
      %v3230 = vpop.f32.mrf.mxu0
      %v3231 = vpop.f32.mrf.mxu0
      %v3232 = vadd.f32 %v2943, %v3231
      %v3233 = vpop.f32.mrf.mxu0
      %3234 = vmatprep.mubr.bf16.mxu0 0
      %3235 = vmatmul.mubr.bf16.gmra.mxu0 %v1527
      %v3236 = vpop.f32.mrf.mxu0
      %v3237 = vadd.f32 %v2948, %v3236
      %v3238 = vpop.f32.mrf.mxu0
      %v3239 = vpop.f32.mrf.mxu0
      %v3240 = vadd.f32 %v2951, %v3239
      %v3241 = vpop.f32.mrf.mxu0
      %3242 = vmatprep.mubr.bf16.mxu0 0
      %3243 = vmatmul.mubr.bf16.gmra.mxu0 %v1534
      %v3244 = vpop.f32.mrf.mxu0
      %v3245 = vadd.f32 %v2956, %v3244
      %v3246 = vpop.f32.mrf.mxu0
      %v3247 = vpop.f32.mrf.mxu0
      %v3248 = vadd.f32 %v2959, %v3247
      %v3249 = vpop.f32.mrf.mxu0
      %3250 = vdwg.mxu0
      %v3251 = vmax.f32 %v2997, 0.0
      %v3252 = vmax.f32 %v3000, 0.0
      %v3253 = vmax.f32 %v3005, 0.0
      %v3254 = vmax.f32 %v3008, 0.0
      %v3255 = vmax.f32 %v3013, 0.0
      %v3256 = vmax.f32 %v3016, 0.0
      %v3257 = vmax.f32 %v3021, 0.0
      %v3258 = vmax.f32 %v3024, 0.0
      %v3259 = vmax.f32 %v3029, 0.0
      %v3260 = vmax.f32 %v3032, 0.0
      %v3261 = vmax.f32 %v3037, 0.0
      %v3262 = vmax.f32 %v3040, 0.0
      %v3263 = vmax.f32 %v3045, 0.0
      %v3264 = vmax.f32 %v3048, 0.0
      %v3265 = vmax.f32 %v3053, 0.0
      %v3266 = vmax.f32 %v3056, 0.0
      %v3267 = vmax.f32 %v3061, 0.0
      %v3268 = vmax.f32 %v3064, 0.0
      %v3269 = vmax.f32 %v3069, 0.0
      %v3270 = vmax.f32 %v3072, 0.0
      %v3271 = vmax.f32 %v3077, 0.0
      %v3272 = vmax.f32 %v3080, 0.0
      %v3273 = vmax.f32 %v3085, 0.0
      %v3274 = vmax.f32 %v3088, 0.0
      %v3275 = vmax.f32 %v3093, 0.0
      %v3276 = vmax.f32 %v3096, 0.0
      %v3277 = vmax.f32 %v3101, 0.0
      %v3278 = vmax.f32 %v3104, 0.0
      %v3279 = vmax.f32 %v3109, 0.0
      %v3280 = vmax.f32 %v3112, 0.0
      %v3281 = vmax.f32 %v3117, 0.0
      %v3282 = vmax.f32 %v3120, 0.0
      %v3283 = vmax.f32 %v3125, 0.0
      %v3284 = vmax.f32 %v3128, 0.0
      %v3285 = vmax.f32 %v3133, 0.0
      %v3286 = vmax.f32 %v3136, 0.0
      %v3287 = vmax.f32 %v3141, 0.0
      %v3288 = vmax.f32 %v3144, 0.0
      %v3289 = vmax.f32 %v3149, 0.0
      %v3290 = vmax.f32 %v3152, 0.0
      %v3291 = vmax.f32 %v3157, 0.0
      %v3292 = vmax.f32 %v3160, 0.0
      %v3293 = vmax.f32 %v3165, 0.0
      %v3294 = vmax.f32 %v3168, 0.0
      %v3295 = vmax.f32 %v3173, 0.0
      %v3296 = vmax.f32 %v3176, 0.0
      %v3297 = vmax.f32 %v3181, 0.0
      %v3298 = vmax.f32 %v3184, 0.0
      %v3299 = vmax.f32 %v3189, 0.0
      %v3300 = vmax.f32 %v3192, 0.0
      %v3301 = vmax.f32 %v3197, 0.0
      %v3302 = vmax.f32 %v3200, 0.0
      %v3303 = vmax.f32 %v3205, 0.0
      %v3304 = vmax.f32 %v3208, 0.0
      %v3305 = vmax.f32 %v3213, 0.0
      %v3306 = vmax.f32 %v3216, 0.0
      %v3307 = vmax.f32 %v3221, 0.0
      %v3308 = vmax.f32 %v3224, 0.0
      %v3309 = vmax.f32 %v3229, 0.0
      %v3310 = vmax.f32 %v3232, 0.0
      %v3311 = vmax.f32 %v3237, 0.0
      %v3312 = vmax.f32 %v3240, 0.0
      %v3313 = vmax.f32 %v3245, 0.0
      %v3314 = vmax.f32 %v3248, 0.0
      %v3315 = vpack.c.bf16 %v3252, %v3251
      %v3316 = vpack.c.bf16 %v3254, %v3253
      %v3317 = vpack.c.bf16 %v3256, %v3255
      %v3318 = vpack.c.bf16 %v3258, %v3257
      %v3319 = vpack.c.bf16 %v3260, %v3259
      %v3320 = vpack.c.bf16 %v3262, %v3261
      %v3321 = vpack.c.bf16 %v3264, %v3263
      %v3322 = vpack.c.bf16 %v3266, %v3265
      %v3323 = vpack.c.bf16 %v3268, %v3267
      %v3324 = vpack.c.bf16 %v3270, %v3269
      %v3325 = vpack.c.bf16 %v3272, %v3271
      %v3326 = vpack.c.bf16 %v3274, %v3273
      %v3327 = vpack.c.bf16 %v3276, %v3275
      %v3328 = vpack.c.bf16 %v3278, %v3277
      %v3329 = vpack.c.bf16 %v3280, %v3279
      %v3330 = vpack.c.bf16 %v3282, %v3281
      %v3331 = vpack.c.bf16 %v3284, %v3283
      %v3332 = vpack.c.bf16 %v3286, %v3285
      %v3333 = vpack.c.bf16 %v3288, %v3287
      %v3334 = vpack.c.bf16 %v3290, %v3289
      %v3335 = vpack.c.bf16 %v3292, %v3291
      %v3336 = vpack.c.bf16 %v3294, %v3293
      %v3337 = vpack.c.bf16 %v3296, %v3295
      %v3338 = vpack.c.bf16 %v3298, %v3297
      %v3339 = vpack.c.bf16 %v3300, %v3299
      %v3340 = vpack.c.bf16 %v3302, %v3301
      %v3341 = vpack.c.bf16 %v3304, %v3303
      %v3342 = vpack.c.bf16 %v3306, %v3305
      %v3343 = vpack.c.bf16 %v3308, %v3307
      %v3344 = vpack.c.bf16 %v3310, %v3309
      %v3345 = vpack.c.bf16 %v3312, %v3311
      %v3346 = vpack.c.bf16 %v3314, %v3313
      %v3347 = vld [vmem:[%s3] sm:$0xf]
      %v3348 = vld [vmem:[%s3 + $0x4] sm:$0xf]
      %v3349 = vld [vmem:[%s3 + $0x8] sm:$0xf]
      %v3350 = vld [vmem:[%s3 + $0xc] sm:$0xf]
      %v3351 = vld [vmem:[%s3 + $0x10] sm:$0xf]
      %v3352 = vld [vmem:[%s3 + $0x14] sm:$0xf]
      %v3353 = vld [vmem:[%s3 + $0x18] sm:$0xf]
      %v3354 = vld [vmem:[%s3 + $0x1c] sm:$0xf]
      %v3355 = vld [vmem:[%s3 + $0x20] sm:$0xf]
      %v3356 = vld [vmem:[%s3 + $0x24] sm:$0xf]
      %v3357 = vld [vmem:[%s3 + $0x28] sm:$0xf]
      %v3358 = vld [vmem:[%s3 + $0x2c] sm:$0xf]
      %v3359 = vld [vmem:[%s3 + $0x30] sm:$0xf]
      %v3360 = vld [vmem:[%s3 + $0x34] sm:$0xf]
      %v3361 = vld [vmem:[%s3 + $0x38] sm:$0xf]
      %v3362 = vld [vmem:[%s3 + $0x3c] sm:$0xf]
      %v3363 = vld [vmem:[%s4] sm:$0x1]
      %v3365 = vlaneseq
      %v3366 = vshrl.u32 %v3365, 7
      %v3367 = vsub.s32 0, %v3366
      %v3368 = vrot.slane %v3363, %v3367
      %v3386 = vunpack.c.l.b16 %v3347
      %v3387 = vunpack.c.l.b16 %v3348
      %v3388 = vunpack.c.l.b16 %v3349
      %v3389 = vunpack.c.l.b16 %v3350
      %v3390 = vunpack.c.l.b16 %v3351
      %v3391 = vunpack.c.l.b16 %v3352
      %v3392 = vunpack.c.l.b16 %v3353
      %v3393 = vunpack.c.l.b16 %v3354
      %v3394 = vunpack.c.l.b16 %v3355
      %v3395 = vunpack.c.l.b16 %v3356
      %v3396 = vunpack.c.l.b16 %v3357
      %v3397 = vunpack.c.l.b16 %v3358
      %v3398 = vunpack.c.l.b16 %v3359
      %v3399 = vunpack.c.l.b16 %v3360
      %v3400 = vunpack.c.l.b16 %v3361
      %v3401 = vunpack.c.l.b16 %v3362
      %v3402 = vpack.c.b16 %v3387, %v3386
      %v3403 = vpack.c.b16 %v3389, %v3388
      %v3404 = vpack.c.b16 %v3391, %v3390
      %v3405 = vpack.c.b16 %v3393, %v3392
      %v3406 = vpack.c.b16 %v3395, %v3394
      %v3407 = vpack.c.b16 %v3397, %v3396
      %v3408 = vpack.c.b16 %v3399, %v3398
      %v3409 = vpack.c.b16 %v3401, %v3400
      %3418 = vmatprep.subr.bf16.mxu0 0
      %3419 = vmatpush1.bf16.msra.mxu0 %v3409
      %3420 = vmatprep.subr.bf16.mxu0 0
      %3421 = vmatpush1.bf16.msra.mxu0 %v3408
      %3422 = vmatprep.subr.bf16.mxu0 0
      %3423 = vmatpush1.bf16.msra.mxu0 %v3407
      %3424 = vmatprep.subr.bf16.mxu0 0
      %3425 = vmatpush1.bf16.msra.mxu0 %v3406
      %3426 = vmatprep.subr.bf16.mxu0 0
      %3427 = vmatpush1.bf16.msra.mxu0 %v3405
      %3428 = vmatprep.subr.bf16.mxu0 0
      %3429 = vmatpush1.bf16.msra.mxu0 %v3404
      %3430 = vmatprep.subr.bf16.mxu0 0
      %3431 = vmatpush1.bf16.msra.mxu0 %v3403
      %3432 = vmatprep.subr.bf16.mxu0 0
      %3433 = vmatpush1.bf16.msra.mxu0 %v3402
      %3434 = vmatprep.subr.bf16.mxu0 0
      %3435 = vmatpush2.bf16.msra.mxu0 0
      %3436 = vmatprep.subr.bf16.mxu0 0
      %3437 = vmatpush2.bf16.msra.mxu0 0
      %3438 = vmatprep.subr.bf16.mxu0 0
      %3439 = vmatpush2.bf16.msra.mxu0 0
      %3440 = vmatprep.subr.bf16.mxu0 0
      %3441 = vmatpush2.bf16.msra.mxu0 0
      %3442 = vmatprep.subr.bf16.mxu0 0
      %3443 = vmatpush2.bf16.msra.mxu0 0
      %3444 = vmatprep.subr.bf16.mxu0 0
      %3445 = vmatpush2.bf16.msra.mxu0 0
      %3446 = vmatprep.subr.bf16.mxu0 0
      %3447 = vmatpush2.bf16.msra.mxu0 0
      %3448 = vmatprep.subr.bf16.mxu0 0
      %3449 = vmatpush2.bf16.msra.mxu0 0
      %3450 = vmatprep.mubr.bf16.mxu0 0
      %3451 = vmatmul.mubr.bf16.gmra.mxu0 %v3315
      %v3452 = vpop.f32.mrf.mxu0
      %v3453 = vadd.f32 %v3368, %v3452
      %v3454 = vpop.f32.mrf.mxu0
      %v3455 = vpop.f32.mrf.mxu0
      %v3456 = vadd.f32 %v3368, %v3455
      %v3457 = vpop.f32.mrf.mxu0
      %3458 = vmatprep.mubr.bf16.mxu0 0
      %3459 = vmatmul.mubr.bf16.gmra.mxu0 %v3316
      %v3460 = vpop.f32.mrf.mxu0
      %v3461 = vadd.f32 %v3368, %v3460
      %v3462 = vpop.f32.mrf.mxu0
      %v3463 = vpop.f32.mrf.mxu0
      %v3464 = vadd.f32 %v3368, %v3463
      %v3465 = vpop.f32.mrf.mxu0
      %3466 = vmatprep.mubr.bf16.mxu0 0
      %3467 = vmatmul.mubr.bf16.gmra.mxu0 %v3317
      %v3468 = vpop.f32.mrf.mxu0
      %v3469 = vadd.f32 %v3368, %v3468
      %v3470 = vpop.f32.mrf.mxu0
      %v3471 = vpop.f32.mrf.mxu0
      %v3472 = vadd.f32 %v3368, %v3471
      %v3473 = vpop.f32.mrf.mxu0
      %3474 = vmatprep.mubr.bf16.mxu0 0
      %3475 = vmatmul.mubr.bf16.gmra.mxu0 %v3318
      %v3476 = vpop.f32.mrf.mxu0
      %v3477 = vadd.f32 %v3368, %v3476
      %v3478 = vpop.f32.mrf.mxu0
      %v3479 = vpop.f32.mrf.mxu0
      %v3480 = vadd.f32 %v3368, %v3479
      %v3481 = vpop.f32.mrf.mxu0
      %3482 = vmatprep.mubr.bf16.mxu0 0
      %3483 = vmatmul.mubr.bf16.gmra.mxu0 %v3319
      %v3484 = vpop.f32.mrf.mxu0
      %v3485 = vadd.f32 %v3368, %v3484
      %v3486 = vpop.f32.mrf.mxu0
      %v3487 = vpop.f32.mrf.mxu0
      %v3488 = vadd.f32 %v3368, %v3487
      %v3489 = vpop.f32.mrf.mxu0
      %3490 = vmatprep.mubr.bf16.mxu0 0
      %3491 = vmatmul.mubr.bf16.gmra.mxu0 %v3320
      %v3492 = vpop.f32.mrf.mxu0
      %v3493 = vadd.f32 %v3368, %v3492
      %v3494 = vpop.f32.mrf.mxu0
      %v3495 = vpop.f32.mrf.mxu0
      %v3496 = vadd.f32 %v3368, %v3495
      %v3497 = vpop.f32.mrf.mxu0
      %3498 = vmatprep.mubr.bf16.mxu0 0
      %3499 = vmatmul.mubr.bf16.gmra.mxu0 %v3321
      %v3500 = vpop.f32.mrf.mxu0
      %v3501 = vadd.f32 %v3368, %v3500
      %v3502 = vpop.f32.mrf.mxu0
      %v3503 = vpop.f32.mrf.mxu0
      %v3504 = vadd.f32 %v3368, %v3503
      %v3505 = vpop.f32.mrf.mxu0
      %3506 = vmatprep.mubr.bf16.mxu0 0
      %3507 = vmatmul.mubr.bf16.gmra.mxu0 %v3322
      %v3508 = vpop.f32.mrf.mxu0
      %v3509 = vadd.f32 %v3368, %v3508
      %v3510 = vpop.f32.mrf.mxu0
      %v3511 = vpop.f32.mrf.mxu0
      %v3512 = vadd.f32 %v3368, %v3511
      %v3513 = vpop.f32.mrf.mxu0
      %3514 = vmatprep.mubr.bf16.mxu0 0
      %3515 = vmatmul.mubr.bf16.gmra.mxu0 %v3323
      %v3516 = vpop.f32.mrf.mxu0
      %v3517 = vadd.f32 %v3368, %v3516
      %v3518 = vpop.f32.mrf.mxu0
      %v3519 = vpop.f32.mrf.mxu0
      %v3520 = vadd.f32 %v3368, %v3519
      %v3521 = vpop.f32.mrf.mxu0
      %3522 = vmatprep.mubr.bf16.mxu0 0
      %3523 = vmatmul.mubr.bf16.gmra.mxu0 %v3324
      %v3524 = vpop.f32.mrf.mxu0
      %v3525 = vadd.f32 %v3368, %v3524
      %v3526 = vpop.f32.mrf.mxu0
      %v3527 = vpop.f32.mrf.mxu0
      %v3528 = vadd.f32 %v3368, %v3527
      %v3529 = vpop.f32.mrf.mxu0
      %3530 = vmatprep.mubr.bf16.mxu0 0
      %3531 = vmatmul.mubr.bf16.gmra.mxu0 %v3325
      %v3532 = vpop.f32.mrf.mxu0
      %v3533 = vadd.f32 %v3368, %v3532
      %v3534 = vpop.f32.mrf.mxu0
      %v3535 = vpop.f32.mrf.mxu0
      %v3536 = vadd.f32 %v3368, %v3535
      %v3537 = vpop.f32.mrf.mxu0
      %3538 = vmatprep.mubr.bf16.mxu0 0
      %3539 = vmatmul.mubr.bf16.gmra.mxu0 %v3326
      %v3540 = vpop.f32.mrf.mxu0
      %v3541 = vadd.f32 %v3368, %v3540
      %v3542 = vpop.f32.mrf.mxu0
      %v3543 = vpop.f32.mrf.mxu0
      %v3544 = vadd.f32 %v3368, %v3543
      %v3545 = vpop.f32.mrf.mxu0
      %3546 = vmatprep.mubr.bf16.mxu0 0
      %3547 = vmatmul.mubr.bf16.gmra.mxu0 %v3327
      %v3548 = vpop.f32.mrf.mxu0
      %v3549 = vadd.f32 %v3368, %v3548
      %v3550 = vpop.f32.mrf.mxu0
      %v3551 = vpop.f32.mrf.mxu0
      %v3552 = vadd.f32 %v3368, %v3551
      %v3553 = vpop.f32.mrf.mxu0
      %3554 = vmatprep.mubr.bf16.mxu0 0
      %3555 = vmatmul.mubr.bf16.gmra.mxu0 %v3328
      %v3556 = vpop.f32.mrf.mxu0
      %v3557 = vadd.f32 %v3368, %v3556
      %v3558 = vpop.f32.mrf.mxu0
      %v3559 = vpop.f32.mrf.mxu0
      %v3560 = vadd.f32 %v3368, %v3559
      %v3561 = vpop.f32.mrf.mxu0
      %3562 = vmatprep.mubr.bf16.mxu0 0
      %3563 = vmatmul.mubr.bf16.gmra.mxu0 %v3329
      %v3564 = vpop.f32.mrf.mxu0
      %v3565 = vadd.f32 %v3368, %v3564
      %v3566 = vpop.f32.mrf.mxu0
      %v3567 = vpop.f32.mrf.mxu0
      %v3568 = vadd.f32 %v3368, %v3567
      %v3569 = vpop.f32.mrf.mxu0
      %3570 = vmatprep.mubr.bf16.mxu0 0
      %3571 = vmatmul.mubr.bf16.gmra.mxu0 %v3330
      %v3572 = vpop.f32.mrf.mxu0
      %v3573 = vadd.f32 %v3368, %v3572
      %v3574 = vpop.f32.mrf.mxu0
      %v3575 = vpop.f32.mrf.mxu0
      %v3576 = vadd.f32 %v3368, %v3575
      %v3577 = vpop.f32.mrf.mxu0
      %3578 = vmatprep.mubr.bf16.mxu0 0
      %3579 = vmatmul.mubr.bf16.gmra.mxu0 %v3331
      %v3580 = vpop.f32.mrf.mxu0
      %v3581 = vadd.f32 %v3368, %v3580
      %v3582 = vpop.f32.mrf.mxu0
      %v3583 = vpop.f32.mrf.mxu0
      %v3584 = vadd.f32 %v3368, %v3583
      %v3585 = vpop.f32.mrf.mxu0
      %3586 = vmatprep.mubr.bf16.mxu0 0
      %3587 = vmatmul.mubr.bf16.gmra.mxu0 %v3332
      %v3588 = vpop.f32.mrf.mxu0
      %v3589 = vadd.f32 %v3368, %v3588
      %v3590 = vpop.f32.mrf.mxu0
      %v3591 = vpop.f32.mrf.mxu0
      %v3592 = vadd.f32 %v3368, %v3591
      %v3593 = vpop.f32.mrf.mxu0
      %3594 = vmatprep.mubr.bf16.mxu0 0
      %3595 = vmatmul.mubr.bf16.gmra.mxu0 %v3333
      %v3596 = vpop.f32.mrf.mxu0
      %v3597 = vadd.f32 %v3368, %v3596
      %v3598 = vpop.f32.mrf.mxu0
      %v3599 = vpop.f32.mrf.mxu0
      %v3600 = vadd.f32 %v3368, %v3599
      %v3601 = vpop.f32.mrf.mxu0
      %3602 = vmatprep.mubr.bf16.mxu0 0
      %3603 = vmatmul.mubr.bf16.gmra.mxu0 %v3334
      %v3604 = vpop.f32.mrf.mxu0
      %v3605 = vadd.f32 %v3368, %v3604
      %v3606 = vpop.f32.mrf.mxu0
      %v3607 = vpop.f32.mrf.mxu0
      %v3608 = vadd.f32 %v3368, %v3607
      %v3609 = vpop.f32.mrf.mxu0
      %3610 = vmatprep.mubr.bf16.mxu0 0
      %3611 = vmatmul.mubr.bf16.gmra.mxu0 %v3335
      %v3612 = vpop.f32.mrf.mxu0
      %v3613 = vadd.f32 %v3368, %v3612
      %v3614 = vpop.f32.mrf.mxu0
      %v3615 = vpop.f32.mrf.mxu0
      %v3616 = vadd.f32 %v3368, %v3615
      %v3617 = vpop.f32.mrf.mxu0
      %3618 = vmatprep.mubr.bf16.mxu0 0
      %3619 = vmatmul.mubr.bf16.gmra.mxu0 %v3336
      %v3620 = vpop.f32.mrf.mxu0
      %v3621 = vadd.f32 %v3368, %v3620
      %v3622 = vpop.f32.mrf.mxu0
      %v3623 = vpop.f32.mrf.mxu0
      %v3624 = vadd.f32 %v3368, %v3623
      %v3625 = vpop.f32.mrf.mxu0
      %3626 = vmatprep.mubr.bf16.mxu0 0
      %3627 = vmatmul.mubr.bf16.gmra.mxu0 %v3337
      %v3628 = vpop.f32.mrf.mxu0
      %v3629 = vadd.f32 %v3368, %v3628
      %v3630 = vpop.f32.mrf.mxu0
      %v3631 = vpop.f32.mrf.mxu0
      %v3632 = vadd.f32 %v3368, %v3631
      %v3633 = vpop.f32.mrf.mxu0
      %3634 = vmatprep.mubr.bf16.mxu0 0
      %3635 = vmatmul.mubr.bf16.gmra.mxu0 %v3338
      %v3636 = vpop.f32.mrf.mxu0
      %v3637 = vadd.f32 %v3368, %v3636
      %v3638 = vpop.f32.mrf.mxu0
      %v3639 = vpop.f32.mrf.mxu0
      %v3640 = vadd.f32 %v3368, %v3639
      %v3641 = vpop.f32.mrf.mxu0
      %3642 = vmatprep.mubr.bf16.mxu0 0
      %3643 = vmatmul.mubr.bf16.gmra.mxu0 %v3339
      %v3644 = vpop.f32.mrf.mxu0
      %v3645 = vadd.f32 %v3368, %v3644
      %v3646 = vpop.f32.mrf.mxu0
      %v3647 = vpop.f32.mrf.mxu0
      %v3648 = vadd.f32 %v3368, %v3647
      %v3649 = vpop.f32.mrf.mxu0
      %3650 = vmatprep.mubr.bf16.mxu0 0
      %3651 = vmatmul.mubr.bf16.gmra.mxu0 %v3340
      %v3652 = vpop.f32.mrf.mxu0
      %v3653 = vadd.f32 %v3368, %v3652
      %v3654 = vpop.f32.mrf.mxu0
      %v3655 = vpop.f32.mrf.mxu0
      %v3656 = vadd.f32 %v3368, %v3655
      %v3657 = vpop.f32.mrf.mxu0
      %3658 = vmatprep.mubr.bf16.mxu0 0
      %3659 = vmatmul.mubr.bf16.gmra.mxu0 %v3341
      %v3660 = vpop.f32.mrf.mxu0
      %v3661 = vadd.f32 %v3368, %v3660
      %v3662 = vpop.f32.mrf.mxu0
      %v3663 = vpop.f32.mrf.mxu0
      %v3664 = vadd.f32 %v3368, %v3663
      %v3665 = vpop.f32.mrf.mxu0
      %3666 = vmatprep.mubr.bf16.mxu0 0
      %3667 = vmatmul.mubr.bf16.gmra.mxu0 %v3342
      %v3668 = vpop.f32.mrf.mxu0
      %v3669 = vadd.f32 %v3368, %v3668
      %v3670 = vpop.f32.mrf.mxu0
      %v3671 = vpop.f32.mrf.mxu0
      %v3672 = vadd.f32 %v3368, %v3671
      %v3673 = vpop.f32.mrf.mxu0
      %3674 = vmatprep.mubr.bf16.mxu0 0
      %3675 = vmatmul.mubr.bf16.gmra.mxu0 %v3343
      %v3676 = vpop.f32.mrf.mxu0
      %v3677 = vadd.f32 %v3368, %v3676
      %v3678 = vpop.f32.mrf.mxu0
      %v3679 = vpop.f32.mrf.mxu0
      %v3680 = vadd.f32 %v3368, %v3679
      %v3681 = vpop.f32.mrf.mxu0
      %3682 = vmatprep.mubr.bf16.mxu0 0
      %3683 = vmatmul.mubr.bf16.gmra.mxu0 %v3344
      %v3684 = vpop.f32.mrf.mxu0
      %v3685 = vadd.f32 %v3368, %v3684
      %v3686 = vpop.f32.mrf.mxu0
      %v3687 = vpop.f32.mrf.mxu0
      %v3688 = vadd.f32 %v3368, %v3687
      %v3689 = vpop.f32.mrf.mxu0
      %3690 = vmatprep.mubr.bf16.mxu0 0
      %3691 = vmatmul.mubr.bf16.gmra.mxu0 %v3345
      %v3692 = vpop.f32.mrf.mxu0
      %v3693 = vadd.f32 %v3368, %v3692
      %v3694 = vpop.f32.mrf.mxu0
      %v3695 = vpop.f32.mrf.mxu0
      %v3696 = vadd.f32 %v3368, %v3695
      %v3697 = vpop.f32.mrf.mxu0
      %3698 = vmatprep.mubr.bf16.mxu0 0
      %3699 = vmatmul.mubr.bf16.gmra.mxu0 %v3346
      %v3700 = vpop.f32.mrf.mxu0
      %v3701 = vadd.f32 %v3368, %v3700
      %v3702 = vpop.f32.mrf.mxu0
      %v3703 = vpop.f32.mrf.mxu0
      %v3704 = vadd.f32 %v3368, %v3703
      %v3705 = vpop.f32.mrf.mxu0
      %3706 = vdwg.mxu0
      %3707 = vst [vmem:[%s229] sm:$0xff] %v3453
      %3708 = vst [vmem:[%s229 + $0x8] sm:$0xff] %v3456
      %3709 = vst [vmem:[%s229 + $0x10] sm:$0xff] %v3461
      %3710 = vst [vmem:[%s229 + $0x18] sm:$0xff] %v3464
      %3711 = vst [vmem:[%s229 + $0x20] sm:$0xff] %v3469
      %3712 = vst [vmem:[%s229 + $0x28] sm:$0xff] %v3472
      %3713 = vst [vmem:[%s229 + $0x30] sm:$0xff] %v3477
      %3714 = vst [vmem:[%s229 + $0x38] sm:$0xff] %v3480
      %3715 = vst [vmem:[%s229 + $0x40] sm:$0xff] %v3485
      %3716 = vst [vmem:[%s229 + $0x48] sm:$0xff] %v3488
      %3717 = vst [vmem:[%s229 + $0x50] sm:$0xff] %v3493
      %3718 = vst [vmem:[%s229 + $0x58] sm:$0xff] %v3496
      %3719 = vst [vmem:[%s229 + $0x60] sm:$0xff] %v3501
      %3720 = vst [vmem:[%s229 + $0x68] sm:$0xff] %v3504
      %3721 = vst [vmem:[%s229 + $0x70] sm:$0xff] %v3509
      %3722 = vst [vmem:[%s229 + $0x78] sm:$0xff] %v3512
      %3723 = vst [vmem:[%s229 + $0x80] sm:$0xff] %v3517
      %3724 = vst [vmem:[%s229 + $0x88] sm:$0xff] %v3520
      %3725 = vst [vmem:[%s229 + $0x90] sm:$0xff] %v3525
      %3726 = vst [vmem:[%s229 + $0x98] sm:$0xff] %v3528
      %3727 = vst [vmem:[%s229 + $0xa0] sm:$0xff] %v3533
      %3728 = vst [vmem:[%s229 + $0xa8] sm:$0xff] %v3536
      %3729 = vst [vmem:[%s229 + $0xb0] sm:$0xff] %v3541
      %3730 = vst [vmem:[%s229 + $0xb8] sm:$0xff] %v3544
      %3731 = vst [vmem:[%s229 + $0xc0] sm:$0xff] %v3549
      %3732 = vst [vmem:[%s229 + $0xc8] sm:$0xff] %v3552
      %3733 = vst [vmem:[%s229 + $0xd0] sm:$0xff] %v3557
      %3734 = vst [vmem:[%s229 + $0xd8] sm:$0xff] %v3560
      %3735 = vst [vmem:[%s229 + $0xe0] sm:$0xff] %v3565
      %3736 = vst [vmem:[%s229 + $0xe8] sm:$0xff] %v3568
      %3737 = vst [vmem:[%s229 + $0xf0] sm:$0xff] %v3573
      %3738 = vst [vmem:[%s229 + $0xf8] sm:$0xff] %v3576
      %3739 = vst [vmem:[%s229 + $0x100] sm:$0xff] %v3581
      %3740 = vst [vmem:[%s229 + $0x108] sm:$0xff] %v3584
      %3741 = vst [vmem:[%s229 + $0x110] sm:$0xff] %v3589
      %3742 = vst [vmem:[%s229 + $0x118] sm:$0xff] %v3592
      %3743 = vst [vmem:[%s229 + $0x120] sm:$0xff] %v3597
      %3744 = vst [vmem:[%s229 + $0x128] sm:$0xff] %v3600
      %3745 = vst [vmem:[%s229 + $0x130] sm:$0xff] %v3605
      %3746 = vst [vmem:[%s229 + $0x138] sm:$0xff] %v3608
      %3747 = vst [vmem:[%s229 + $0x140] sm:$0xff] %v3613
      %3748 = vst [vmem:[%s229 + $0x148] sm:$0xff] %v3616
      %3749 = vst [vmem:[%s229 + $0x150] sm:$0xff] %v3621
      %3750 = vst [vmem:[%s229 + $0x158] sm:$0xff] %v3624
      %3751 = vst [vmem:[%s229 + $0x160] sm:$0xff] %v3629
      %3752 = vst [vmem:[%s229 + $0x168] sm:$0xff] %v3632
      %3753 = vst [vmem:[%s229 + $0x170] sm:$0xff] %v3637
      %3754 = vst [vmem:[%s229 + $0x178] sm:$0xff] %v3640
      %3755 = vst [vmem:[%s229 + $0x180] sm:$0xff] %v3645
      %3756 = vst [vmem:[%s229 + $0x188] sm:$0xff] %v3648
      %3757 = vst [vmem:[%s229 + $0x190] sm:$0xff] %v3653
      %3758 = vst [vmem:[%s229 + $0x198] sm:$0xff] %v3656
      %3759 = vst [vmem:[%s229 + $0x1a0] sm:$0xff] %v3661
      %3760 = vst [vmem:[%s229 + $0x1a8] sm:$0xff] %v3664
      %3761 = vst [vmem:[%s229 + $0x1b0] sm:$0xff] %v3669
      %3762 = vst [vmem:[%s229 + $0x1b8] sm:$0xff] %v3672
      %3763 = vst [vmem:[%s229 + $0x1c0] sm:$0xff] %v3677
      %3764 = vst [vmem:[%s229 + $0x1c8] sm:$0xff] %v3680
      %3765 = vst [vmem:[%s229 + $0x1d0] sm:$0xff] %v3685
      %3766 = vst [vmem:[%s229 + $0x1d8] sm:$0xff] %v3688
      %3767 = vst [vmem:[%s229 + $0x1e0] sm:$0xff] %v3693
      %3768 = vst [vmem:[%s229 + $0x1e8] sm:$0xff] %v3696
      %3769 = vst [vmem:[%s229 + $0x1f0] sm:$0xff] %v3701
      %3770 = vst [vmem:[%s229 + $0x1f8] sm:$0xff] %v3704
      %s3771 = smul.u32 64, %s16
      %p3772 = scmp.lt.s32.totalorder %s3771, 127
      %s3773 = scalar_select %p3772, %s3771, 127
      %s3774 = smul.addr %s3773, 8
      %s3775 = scalar_lea.vmem %s5, %s3774
      // Predicated region
      $region41: #{mlp_forward.1} parent=39 // pred_check
        %p3776 = pneg %p144
      $region42: #{mlp_forward.1} parent=39 // pred_check_branch
        %3778 = sbr.rel (%p3776) target = $region44
      $region43: #{mlp_forward.1} parent=39 // pred_region
        %s3779 = smul.u32 64, %s16
      $region44: #{mlp_forward.1} parent=39 // pred_fallthru
        _
    $region40: #{mlp_forward.1} parent=5 // pred_fallthru
      _
    %p3780 = scmp.le.s32.totalorder 2, %s11
    // Predicated region
    $region45: #{mlp_forward.1} parent=5 // pred_check
      %p3781 = pneg %p3780
    $region46: #{mlp_forward.1} parent=5 // pred_check_branch
      %3783 = sbr.rel (%p3781) target = $region48
    $region47: #{mlp_forward.1} parent=5 // pred_region
      %s3784 = ssub.s32 %s11, 2
      // Predicated region
      $region49: #{mlp_forward.1} parent=47 // pred_check
        %p3785 = pneg %p150
      $region50: #{mlp_forward.1} parent=47 // pred_check_branch
        %3787 = sbr.rel (%p3785) target = $region52
      $region51: #{mlp_forward.1} parent=47 // pred_region
        %s3788 = smul.u32 64, %s17
        %p3789 = scmp.lt.s32.totalorder %s3788, 127
        %s3790 = scalar_select %p3789, %s3788, 127
        %s3791 = smul.addr %s3790, 8
        %s3792 = scalar_lea.vmem %s5, %s3791
      $region52: #{mlp_forward.1} parent=47 // pred_fallthru
        _
    $region48: #{mlp_forward.1} parent=5 // pred_fallthru
      _
  $region6: #{mlp_forward.1} parent=0 // loop_footer
    %s15 = sadd.s32 1, %s11
  $region7: #{mlp_forward.1} parent=0 // loop_footer_branch
    %10 = sbr.rel target = $region3
  $region8: #{mlp_forward.1} parent=0 // loop_exit
    _

</llo_original>
